<compile_context>
chip_gen: v6e
topology: v6e:2x2x1
jax: 0.10.0
libtpu: 0.0.40
codegen_flags: <defaults>
</compile_context>

<pallas_src>
import functools
import math

import numpy as np

import jax
import jax.numpy as jnp
from jax.experimental import pallas as pl
from jax.experimental.pallas import tpu as pltpu


def _qkv_attention_kernel(qkv_ref, o_ref, *, num_heads, head_dim, scale):
    """qkv_ref block: (1, H*3*C, T)  ->  o_ref block: (1, H*C, T)."""
    C = head_dim
    scale2 = jnp.float32(scale * scale)   # fold q-side and k-side scales into q
    # TODO(synk): for large T, switch to a KV-tiled online-softmax (flash)
    # loop so the (T, T) score matrix never exceeds VMEM (64 MiB on v7x).
    for h in range(num_heads):
        base = 3 * C * h
        # Static ref slices: load only this head's (C, T) q/k/v tiles.
        q = qkv_ref[0, base:base + C, :]                      # (C, T) f32
        k = qkv_ref[0, base + C:base + 2 * C, :]              # (C, T) f32
        v = qkv_ref[0, base + 2 * C:base + 3 * C, :]          # (C, T) f32

        q_b = (q * scale2).astype(jnp.bfloat16)
        k_b = k.astype(jnp.bfloat16)

        # logits[t, s] = sum_c q[c, t] * k[c, s]   (MXU bf16, f32 accumulate)
        logits = jax.lax.dot_general(
            q_b, k_b, (((0,), (0,)), ((), ())),
            preferred_element_type=jnp.float32)               # (T, T) f32

        # Numerically stable softmax over s in f32; row divide on the EUP.
        logits = logits - jnp.max(logits, axis=-1, keepdims=True)
        p = jnp.exp(logits)
        p = p * pl.reciprocal(jnp.sum(p, axis=-1, keepdims=True), approx=True)

        # a[c, t] = sum_s p[t, s] * v[c, s]   (trans-B matmul on the MXU)
        a = jax.lax.dot_general(
            v.astype(jnp.bfloat16), p.astype(jnp.bfloat16),
            (((1,), (1,)), ((), ())),
            preferred_element_type=jnp.float32)               # (C, T) f32

        # Lane-dense direct store of this head's output rows (unmasked vst),
        # head-major channel order (matches torch's a.reshape(b, -1, l)).
        o_ref[0, h * C:(h + 1) * C, :] = a.astype(o_ref.dtype)


def qkv_attention(qkv, num_heads):
    """qkv: (B, H*3*C, T) f32  ->  (B, H*C, T) f32 (torch QKVAttention)."""
    B, n, T = qkv.shape
    assert n % (3 * num_heads) == 0
    head_dim = n // (3 * num_heads)
    scale = 1.0 / math.sqrt(math.sqrt(head_dim))
    out_ch = num_heads * head_dim
    kernel = functools.partial(_qkv_attention_kernel, num_heads=num_heads,
                               head_dim=head_dim, scale=scale)
    return pl.pallas_call(
        kernel,
        out_shape=jax.ShapeDtypeStruct((B, out_ch, T), jnp.float32),
        grid=(B,),
        in_specs=[pl.BlockSpec((1, n, T), lambda b: (b, 0, 0))],
        out_specs=pl.BlockSpec((1, out_ch, T), lambda b: (b, 0, 0)),
        compiler_params=pltpu.CompilerParams(
            dimension_semantics=("parallel",)),
    )(qkv.astype(jnp.float32))


def qkv_attention_ref(qkv, num_heads):
    """Pure-JAX reference mirroring the PyTorch module exactly (f32)."""
    b, n, l = qkv.shape
    c = n // (num_heads * 3)
    x = qkv.reshape(b * num_heads, 3 * c, l)
    q, k, v = x[:, :c], x[:, c:2 * c], x[:, 2 * c:]
    scale = 1.0 / math.sqrt(math.sqrt(c))
    w = jnp.einsum('bct,bcs->bts', q * scale, k * scale)
    w = jax.nn.softmax(w, axis=-1)
    a = jnp.einsum('bts,bcs->bct', w, v)
    return a.reshape(b, num_heads * c, l)


if __name__ == "__main__":
    key = jax.random.PRNGKey(0)
    B, H, C, T = 2, 4, 16, 256          # batch, heads, head_dim, tokens (16x16)
    qkv = jax.random.normal(key, (B, H * 3 * C, T), dtype=jnp.float32)

    fwd = jax.jit(functools.partial(qkv_attention, num_heads=H))
    out = jax.block_until_ready(fwd(qkv))
    assert out.shape == (B, H * C, T), out.shape
    assert bool(jnp.all(jnp.isfinite(out)))

    ref = qkv_attention_ref(qkv, H)
    np.testing.assert_allclose(np.asarray(out), np.asarray(ref),
                               rtol=2e-2, atol=2e-2)
    print("KERNEL_OK")
</pallas_src>

<mosaic_0001>
module attributes {stable_mosaic.version = 11 : i64} {
  func.func @_qkv_attention_kernel(%arg0: i32, %arg1: memref<1x192x256xf32, #tpu.memory_space<vmem>>, %arg2: memref<1x64x256xf32, #tpu.memory_space<vmem>>) attributes {dimension_semantics = [#tpu.dimension_semantics<parallel>], iteration_bounds = array<i64: 2>, scalar_prefetch = 0 : i64, scratch_operands = 0 : i64, tpu.core_type = #tpu.core_type<tc>, window_params = [{transform_indices = @transform_0, window_bounds = array<i64: 1, 192, 256>}, {transform_indices = @transform_1, window_bounds = array<i64: 1, 64, 256>}]} {
    %c0 = arith.constant 0 : index
    %c0_0 = arith.constant 0 : index
    %c0_1 = arith.constant 0 : index
    %0 = vector.load %arg1[%c0, %c0_0, %c0_1] : memref<1x192x256xf32, #tpu.memory_space<vmem>>, vector<1x16x256xf32>
    %1 = vector.shape_cast %0 : vector<1x16x256xf32> to vector<16x256xf32>
    %c0_2 = arith.constant 0 : index
    %c16 = arith.constant 16 : index
    %c0_3 = arith.constant 0 : index
    %2 = vector.load %arg1[%c0_2, %c16, %c0_3] : memref<1x192x256xf32, #tpu.memory_space<vmem>>, vector<1x16x256xf32>
    %3 = vector.shape_cast %2 : vector<1x16x256xf32> to vector<16x256xf32>
    %c0_4 = arith.constant 0 : index
    %c32 = arith.constant 32 : index
    %c0_5 = arith.constant 0 : index
    %4 = vector.load %arg1[%c0_4, %c32, %c0_5] : memref<1x192x256xf32, #tpu.memory_space<vmem>>, vector<1x16x256xf32>
    %5 = vector.shape_cast %4 : vector<1x16x256xf32> to vector<16x256xf32>
    %cst = arith.constant 2.500000e-01 : f32
    %6 = vector.broadcast %cst : f32 to vector<16x256xf32>
    %7 = arith.mulf %1, %6 : vector<16x256xf32>
    %8 = arith.truncf %7 : vector<16x256xf32> to vector<16x256xbf16>
    %9 = arith.truncf %3 : vector<16x256xf32> to vector<16x256xbf16>
    %cst_6 = arith.constant dense<0.000000e+00> : vector<256x256xf32>
    %10 = tpu.matmul %8, %9, %cst_6 {dimension_numbers = #tpu.dot_dimension_numbers<[0], [0], [1], [1], [0, 1, 1, 1], [], []>} : vector<16x256xbf16>, vector<16x256xbf16>, vector<256x256xf32> -> vector<256x256xf32>
    %cst_7 = arith.constant dense<0xFF800000> : vector<256xf32>
    %11 = vector.multi_reduction <maximumf>, %10, %cst_7 [1] : vector<256x256xf32> to vector<256xf32>
    %12 = vector.shape_cast %11 : vector<256xf32> to vector<256x1xf32>
    %13 = vector.broadcast %12 : vector<256x1xf32> to vector<256x256xf32>
    %14 = arith.subf %10, %13 : vector<256x256xf32>
    %15 = math.exp %14 : vector<256x256xf32>
    %cst_8 = arith.constant dense<0.000000e+00> : vector<256xf32>
    %16 = vector.multi_reduction <add>, %15, %cst_8 [1] : vector<256x256xf32> to vector<256xf32>
    %17 = vector.shape_cast %16 : vector<256xf32> to vector<256x1xf32>
    %18 = tpu.reciprocal %17 {approx = true} : vector<256x1xf32> -> vector<256x1xf32>
    %19 = vector.broadcast %18 : vector<256x1xf32> to vector<256x256xf32>
    %20 = arith.mulf %15, %19 : vector<256x256xf32>
    %21 = arith.truncf %5 : vector<16x256xf32> to vector<16x256xbf16>
    %22 = arith.truncf %20 : vector<256x256xf32> to vector<256x256xbf16>
    %cst_9 = arith.constant dense<0.000000e+00> : vector<16x256xf32>
    %23 = tpu.matmul %21, %22, %cst_9 {dimension_numbers = #tpu.dot_dimension_numbers<[1], [1], [0], [0], [0, 0, 1, 0], [], []>} : vector<16x256xbf16>, vector<256x256xbf16>, vector<16x256xf32> -> vector<16x256xf32>
    %c0_10 = arith.constant 0 : index
    %c0_11 = arith.constant 0 : index
    %c0_12 = arith.constant 0 : index
    %24 = vector.load %arg2[%c0_10, %c0_11, %c0_12] : memref<1x64x256xf32, #tpu.memory_space<vmem>>, vector<1x16x256xf32>
    %25 = vector.shape_cast %24 : vector<1x16x256xf32> to vector<16x256xf32>
    %26 = vector.shape_cast %23 : vector<16x256xf32> to vector<1x16x256xf32>
    tpu.vector_store %arg2[%c0_10, %c0_11, %c0_12], %26 {strides = array<i32>} : memref<1x64x256xf32, #tpu.memory_space<vmem>>, vector<1x16x256xf32>,
    %c0_13 = arith.constant 0 : index
    %c48 = arith.constant 48 : index
    %c0_14 = arith.constant 0 : index
    %27 = vector.load %arg1[%c0_13, %c48, %c0_14] : memref<1x192x256xf32, #tpu.memory_space<vmem>>, vector<1x16x256xf32>
    %28 = vector.shape_cast %27 : vector<1x16x256xf32> to vector<16x256xf32>
    %c0_15 = arith.constant 0 : index
    %c64 = arith.constant 64 : index
    %c0_16 = arith.constant 0 : index
    %29 = vector.load %arg1[%c0_15, %c64, %c0_16] : memref<1x192x256xf32, #tpu.memory_space<vmem>>, vector<1x16x256xf32>
    %30 = vector.shape_cast %29 : vector<1x16x256xf32> to vector<16x256xf32>
    %c0_17 = arith.constant 0 : index
    %c80 = arith.constant 80 : index
    %c0_18 = arith.constant 0 : index
    %31 = vector.load %arg1[%c0_17, %c80, %c0_18] : memref<1x192x256xf32, #tpu.memory_space<vmem>>, vector<1x16x256xf32>
    %32 = vector.shape_cast %31 : vector<1x16x256xf32> to vector<16x256xf32>
    %cst_19 = arith.constant 2.500000e-01 : f32
    %33 = vector.broadcast %cst_19 : f32 to vector<16x256xf32>
    %34 = arith.mulf %28, %33 : vector<16x256xf32>
    %35 = arith.truncf %34 : vector<16x256xf32> to vector<16x256xbf16>
    %36 = arith.truncf %30 : vector<16x256xf32> to vector<16x256xbf16>
    %cst_20 = arith.constant dense<0.000000e+00> : vector<256x256xf32>
    %37 = tpu.matmul %35, %36, %cst_20 {dimension_numbers = #tpu.dot_dimension_numbers<[0], [0], [1], [1], [0, 1, 1, 1], [], []>} : vector<16x256xbf16>, vector<16x256xbf16>, vector<256x256xf32> -> vector<256x256xf32>
    %cst_21 = arith.constant dense<0xFF800000> : vector<256xf32>
    %38 = vector.multi_reduction <maximumf>, %37, %cst_21 [1] : vector<256x256xf32> to vector<256xf32>
    %39 = vector.shape_cast %38 : vector<256xf32> to vector<256x1xf32>
    %40 = vector.broadcast %39 : vector<256x1xf32> to vector<256x256xf32>
    %41 = arith.subf %37, %40 : vector<256x256xf32>
    %42 = math.exp %41 : vector<256x256xf32>
    %cst_22 = arith.constant dense<0.000000e+00> : vector<256xf32>
    %43 = vector.multi_reduction <add>, %42, %cst_22 [1] : vector<256x256xf32> to vector<256xf32>
    %44 = vector.shape_cast %43 : vector<256xf32> to vector<256x1xf32>
    %45 = tpu.reciprocal %44 {approx = true} : vector<256x1xf32> -> vector<256x1xf32>
    %46 = vector.broadcast %45 : vector<256x1xf32> to vector<256x256xf32>
    %47 = arith.mulf %42, %46 : vector<256x256xf32>
    %48 = arith.truncf %32 : vector<16x256xf32> to vector<16x256xbf16>
    %49 = arith.truncf %47 : vector<256x256xf32> to vector<256x256xbf16>
    %cst_23 = arith.constant dense<0.000000e+00> : vector<16x256xf32>
    %50 = tpu.matmul %48, %49, %cst_23 {dimension_numbers = #tpu.dot_dimension_numbers<[1], [1], [0], [0], [0, 0, 1, 0], [], []>} : vector<16x256xbf16>, vector<256x256xbf16>, vector<16x256xf32> -> vector<16x256xf32>
    %c0_24 = arith.constant 0 : index
    %c16_25 = arith.constant 16 : index
    %c0_26 = arith.constant 0 : index
    %51 = vector.load %arg2[%c0_24, %c16_25, %c0_26] : memref<1x64x256xf32, #tpu.memory_space<vmem>>, vector<1x16x256xf32>
    %52 = vector.shape_cast %51 : vector<1x16x256xf32> to vector<16x256xf32>
    %53 = vector.shape_cast %50 : vector<16x256xf32> to vector<1x16x256xf32>
    tpu.vector_store %arg2[%c0_24, %c16_25, %c0_26], %53 {strides = array<i32>} : memref<1x64x256xf32, #tpu.memory_space<vmem>>, vector<1x16x256xf32>,
    %c0_27 = arith.constant 0 : index
    %c96 = arith.constant 96 : index
    %c0_28 = arith.constant 0 : index
    %54 = vector.load %arg1[%c0_27, %c96, %c0_28] : memref<1x192x256xf32, #tpu.memory_space<vmem>>, vector<1x16x256xf32>
    %55 = vector.shape_cast %54 : vector<1x16x256xf32> to vector<16x256xf32>
    %c0_29 = arith.constant 0 : index
    %c112 = arith.constant 112 : index
    %c0_30 = arith.constant 0 : index
    %56 = vector.load %arg1[%c0_29, %c112, %c0_30] : memref<1x192x256xf32, #tpu.memory_space<vmem>>, vector<1x16x256xf32>
    %57 = vector.shape_cast %56 : vector<1x16x256xf32> to vector<16x256xf32>
    %c0_31 = arith.constant 0 : index
    %c128 = arith.constant 128 : index
    %c0_32 = arith.constant 0 : index
    %58 = vector.load %arg1[%c0_31, %c128, %c0_32] : memref<1x192x256xf32, #tpu.memory_space<vmem>>, vector<1x16x256xf32>
    %59 = vector.shape_cast %58 : vector<1x16x256xf32> to vector<16x256xf32>
    %cst_33 = arith.constant 2.500000e-01 : f32
    %60 = vector.broadcast %cst_33 : f32 to vector<16x256xf32>
    %61 = arith.mulf %55, %60 : vector<16x256xf32>
    %62 = arith.truncf %61 : vector<16x256xf32> to vector<16x256xbf16>
    %63 = arith.truncf %57 : vector<16x256xf32> to vector<16x256xbf16>
    %cst_34 = arith.constant dense<0.000000e+00> : vector<256x256xf32>
    %64 = tpu.matmul %62, %63, %cst_34 {dimension_numbers = #tpu.dot_dimension_numbers<[0], [0], [1], [1], [0, 1, 1, 1], [], []>} : vector<16x256xbf16>, vector<16x256xbf16>, vector<256x256xf32> -> vector<256x256xf32>
    %cst_35 = arith.constant dense<0xFF800000> : vector<256xf32>
    %65 = vector.multi_reduction <maximumf>, %64, %cst_35 [1] : vector<256x256xf32> to vector<256xf32>
    %66 = vector.shape_cast %65 : vector<256xf32> to vector<256x1xf32>
    %67 = vector.broadcast %66 : vector<256x1xf32> to vector<256x256xf32>
    %68 = arith.subf %64, %67 : vector<256x256xf32>
    %69 = math.exp %68 : vector<256x256xf32>
    %cst_36 = arith.constant dense<0.000000e+00> : vector<256xf32>
    %70 = vector.multi_reduction <add>, %69, %cst_36 [1] : vector<256x256xf32> to vector<256xf32>
    %71 = vector.shape_cast %70 : vector<256xf32> to vector<256x1xf32>
    %72 = tpu.reciprocal %71 {approx = true} : vector<256x1xf32> -> vector<256x1xf32>
    %73 = vector.broadcast %72 : vector<256x1xf32> to vector<256x256xf32>
    %74 = arith.mulf %69, %73 : vector<256x256xf32>
    %75 = arith.truncf %59 : vector<16x256xf32> to vector<16x256xbf16>
    %76 = arith.truncf %74 : vector<256x256xf32> to vector<256x256xbf16>
    %cst_37 = arith.constant dense<0.000000e+00> : vector<16x256xf32>
    %77 = tpu.matmul %75, %76, %cst_37 {dimension_numbers = #tpu.dot_dimension_numbers<[1], [1], [0], [0], [0, 0, 1, 0], [], []>} : vector<16x256xbf16>, vector<256x256xbf16>, vector<16x256xf32> -> vector<16x256xf32>
    %c0_38 = arith.constant 0 : index
    %c32_39 = arith.constant 32 : index
    %c0_40 = arith.constant 0 : index
    %78 = vector.load %arg2[%c0_38, %c32_39, %c0_40] : memref<1x64x256xf32, #tpu.memory_space<vmem>>, vector<1x16x256xf32>
    %79 = vector.shape_cast %78 : vector<1x16x256xf32> to vector<16x256xf32>
    %80 = vector.shape_cast %77 : vector<16x256xf32> to vector<1x16x256xf32>
    tpu.vector_store %arg2[%c0_38, %c32_39, %c0_40], %80 {strides = array<i32>} : memref<1x64x256xf32, #tpu.memory_space<vmem>>, vector<1x16x256xf32>,
    %c0_41 = arith.constant 0 : index
    %c144 = arith.constant 144 : index
    %c0_42 = arith.constant 0 : index
    %81 = vector.load %arg1[%c0_41, %c144, %c0_42] : memref<1x192x256xf32, #tpu.memory_space<vmem>>, vector<1x16x256xf32>
    %82 = vector.shape_cast %81 : vector<1x16x256xf32> to vector<16x256xf32>
    %c0_43 = arith.constant 0 : index
    %c160 = arith.constant 160 : index
    %c0_44 = arith.constant 0 : index
    %83 = vector.load %arg1[%c0_43, %c160, %c0_44] : memref<1x192x256xf32, #tpu.memory_space<vmem>>, vector<1x16x256xf32>
    %84 = vector.shape_cast %83 : vector<1x16x256xf32> to vector<16x256xf32>
    %c0_45 = arith.constant 0 : index
    %c176 = arith.constant 176 : index
    %c0_46 = arith.constant 0 : index
    %85 = vector.load %arg1[%c0_45, %c176, %c0_46] : memref<1x192x256xf32, #tpu.memory_space<vmem>>, vector<1x16x256xf32>
    %86 = vector.shape_cast %85 : vector<1x16x256xf32> to vector<16x256xf32>
    %cst_47 = arith.constant 2.500000e-01 : f32
    %87 = vector.broadcast %cst_47 : f32 to vector<16x256xf32>
    %88 = arith.mulf %82, %87 : vector<16x256xf32>
    %89 = arith.truncf %88 : vector<16x256xf32> to vector<16x256xbf16>
    %90 = arith.truncf %84 : vector<16x256xf32> to vector<16x256xbf16>
    %cst_48 = arith.constant dense<0.000000e+00> : vector<256x256xf32>
    %91 = tpu.matmul %89, %90, %cst_48 {dimension_numbers = #tpu.dot_dimension_numbers<[0], [0], [1], [1], [0, 1, 1, 1], [], []>} : vector<16x256xbf16>, vector<16x256xbf16>, vector<256x256xf32> -> vector<256x256xf32>
    %cst_49 = arith.constant dense<0xFF800000> : vector<256xf32>
    %92 = vector.multi_reduction <maximumf>, %91, %cst_49 [1] : vector<256x256xf32> to vector<256xf32>
    %93 = vector.shape_cast %92 : vector<256xf32> to vector<256x1xf32>
    %94 = vector.broadcast %93 : vector<256x1xf32> to vector<256x256xf32>
    %95 = arith.subf %91, %94 : vector<256x256xf32>
    %96 = math.exp %95 : vector<256x256xf32>
    %cst_50 = arith.constant dense<0.000000e+00> : vector<256xf32>
    %97 = vector.multi_reduction <add>, %96, %cst_50 [1] : vector<256x256xf32> to vector<256xf32>
    %98 = vector.shape_cast %97 : vector<256xf32> to vector<256x1xf32>
    %99 = tpu.reciprocal %98 {approx = true} : vector<256x1xf32> -> vector<256x1xf32>
    %100 = vector.broadcast %99 : vector<256x1xf32> to vector<256x256xf32>
    %101 = arith.mulf %96, %100 : vector<256x256xf32>
    %102 = arith.truncf %86 : vector<16x256xf32> to vector<16x256xbf16>
    %103 = arith.truncf %101 : vector<256x256xf32> to vector<256x256xbf16>
    %cst_51 = arith.constant dense<0.000000e+00> : vector<16x256xf32>
    %104 = tpu.matmul %102, %103, %cst_51 {dimension_numbers = #tpu.dot_dimension_numbers<[1], [1], [0], [0], [0, 0, 1, 0], [], []>} : vector<16x256xbf16>, vector<256x256xbf16>, vector<16x256xf32> -> vector<16x256xf32>
    %c0_52 = arith.constant 0 : index
    %c48_53 = arith.constant 48 : index
    %c0_54 = arith.constant 0 : index
    %105 = vector.load %arg2[%c0_52, %c48_53, %c0_54] : memref<1x64x256xf32, #tpu.memory_space<vmem>>, vector<1x16x256xf32>
    %106 = vector.shape_cast %105 : vector<1x16x256xf32> to vector<16x256xf32>
    %107 = vector.shape_cast %104 : vector<16x256xf32> to vector<1x16x256xf32>
    tpu.vector_store %arg2[%c0_52, %c48_53, %c0_54], %107 {strides = array<i32>} : memref<1x64x256xf32, #tpu.memory_space<vmem>>, vector<1x16x256xf32>,
    return
  }
  func.func @transform_0(%arg0: i32) -> (i32, i32, i32) {
    %c0_i32 = arith.constant 0 : i32
    %c0_i32_0 = arith.constant 0 : i32
    %c0_i32_1 = arith.constant 0 : i32
    return %arg0, %c0_i32, %c0_i32_0 : i32, i32, i32
  }
  func.func @transform_1(%arg0: i32) -> (i32, i32, i32) {
    %c0_i32 = arith.constant 0 : i32
    %c0_i32_0 = arith.constant 0 : i32
    %c0_i32_1 = arith.constant 0 : i32
    return %arg0, %c0_i32, %c0_i32_0 : i32, i32, i32
  }
}

</mosaic_0001>

<llo_original>
// kernel: qkv_attention.1
$region0: #{qkv_attention.1}
  #allocation0 [shape = 'u32[]', space=smem, size = 0x4, offset = 0x4, fixed_abs, tag = 'smem constant byte address 0x4 - core index']
  #allocation1 [shape = 'u32[144,128]{1,0:T(1,128)}', space=vmem, size = 0x12000, scoped, tag = 'internal scratch']
  %s0 = inlined_call_operand.hbm [shape: f32[2,192,256], index: 0, kind: input, shape index: {}]
  %s1 = inlined_call_operand.hbm [shape: f32[2,64,256], index: 1, kind: output, shape index: {}]
  %s2 = sld [smem:[#allocation0]]
  $region41: #{qkv_attention.1} parent=0
    _
  %s4 = ssub.s32 1, %s2
  %s5 = scalar_select 0, %s4, %s2
  $region1: #{qkv_attention.1} parent=0
    #allocation2 [shape = 'u8[393216]{0}', space=vmem, size = 0x60000, scoped, tag = 'input window, operand 0']
    #allocation3 [shape = 's32[2]{0}', space=sflag, size = 0x8, scoped, tag = 'scoped memory for qkv_attention.1']
    #allocation4 [shape = 's32[2]{0}', space=sflag, size = 0x8, scoped, tag = 'scoped memory for qkv_attention.1']
    #allocation5 [shape = 'u8[131072]{0}', space=vmem, size = 0x20000, scoped, tag = 'output window, operand 0']
    %6 = vsyncpa [#allocation3], 0
    %s7 = scalar_lea.sflag [#allocation3], 1
    %8 = vsyncpa %s7, 0
    %9 = vsyncpa [#allocation4], 0
    %s10 = scalar_lea.sflag [#allocation4], 1
    %11 = vsyncpa %s10, 0
    loop: start=0, step=1, limit=4
    $region2: #{qkv_attention.1} parent=1 // loop_pre_header
      _
    $region3: #{qkv_attention.1} parent=1 // loop_header
      %s13 = sphi 0, %s17
      %p14 = scmp.ge.s32.totalorder %s13, 4
      %s23 = sphi 0, %s25
      %s26 = sphi 0, %s23
      %s27 = sphi 0, %s26
      %s43 = sphi 0, %s27
      %s49 = sphi 0, %s51
      %s52 = sphi 0, %s49
      %s53 = sphi 0, %s52
      %s69 = sphi 0, %s53
    $region4: #{qkv_attention.1} parent=1 // loop_header_branch
      %16 = sbr.rel (%p14) target = $region8
    $region5: #{qkv_attention.1} parent=1 // loop_body
      %s18 = ssub.s32 %s13, 1
      %s19 = ssub.s32 %s13, 2
      %s20 = sadd.s32 %s13, 1
      %s21 = ssub.s32 %s13, %s20
      %p22 = scmp.eq.s32.totalorder %s21, 0
      %s24 = sadd.s32 %s23, 1
      %s25 = scalar_select %p22, %s23, %s24
      %p28 = pneg %p22
      %p29 = scmp.eq.s32.totalorder %s13, 1
      %p30 = por %p28, %p29
      %p31 = scmp.ne.s32.totalorder %s23, %s26
      %p32 = scmp.eq.s32.totalorder %s13, 0
      %p33 = por %p31, %p32
      %p34 = scmp.ne.s32.totalorder %s23, %s26
      %p35 = scmp.eq.s32.totalorder %s18, 1
      %p36 = por %p34, %p35
      %p37 = scmp.ne.s32.totalorder %s26, %s27
      %p38 = scmp.eq.s32.totalorder %s18, 0
      %p39 = por %p37, %p38
      %p40 = scmp.ne.s32.totalorder %s26, %s27
      %p41 = scmp.eq.s32.totalorder %s19, 1
      %p42 = por %p40, %p41
      %p44 = scmp.ne.s32.totalorder %s27, %s43
      %p45 = scmp.eq.s32.totalorder %s19, 0
      %p46 = por %p44, %p45
      %s47 = ssub.s32 %s13, %s20
      %p48 = scmp.eq.s32.totalorder %s47, 0
      %s50 = sadd.s32 %s49, 1
      %s51 = scalar_select %p48, %s49, %s50
      %p54 = pneg %p48
      %p55 = scmp.eq.s32.totalorder %s13, 1
      %p56 = por %p54, %p55
      %p57 = scmp.ne.s32.totalorder %s49, %s52
      %p58 = scmp.eq.s32.totalorder %s13, 0
      %p59 = por %p57, %p58
      %p60 = scmp.ne.s32.totalorder %s49, %s52
      %p61 = scmp.eq.s32.totalorder %s18, 1
      %p62 = por %p60, %p61
      %p63 = scmp.ne.s32.totalorder %s52, %s53
      %p64 = scmp.eq.s32.totalorder %s18, 0
      %p65 = por %p63, %p64
      %p66 = scmp.ne.s32.totalorder %s52, %s53
      %p67 = scmp.eq.s32.totalorder %s19, 1
      %p68 = por %p66, %p67
      %p70 = scmp.ne.s32.totalorder %s53, %s69
      %p71 = scmp.eq.s32.totalorder %s19, 0
      %p72 = por %p70, %p71
      %p73 = scmp.le.s32.totalorder 1, %s13
      %p74 = scmp.lt.s32.totalorder %s13, 3
      %p75 = pnand %p73, %p74
      %p76 = pneg %p75
      // Predicated region
      $region9: #{qkv_attention.1} parent=5 // pred_check
        _
      $region10: #{qkv_attention.1} parent=5 // pred_check_branch
        %78 = sbr.rel (%p75) target = $region12
      $region11: #{qkv_attention.1} parent=5 // pred_region
        %s79 = ssub.s32 %s13, 1
      $region12: #{qkv_attention.1} parent=5 // pred_fallthru
        _
      %p80 = scmp.lt.s32.totalorder %s13, 2
      // Predicated region
      $region13: #{qkv_attention.1} parent=5 // pred_check
        %p81 = pneg %p80
      $region14: #{qkv_attention.1} parent=5 // pred_check_branch
        %83 = sbr.rel (%p81) target = $region16
      $region15: #{qkv_attention.1} parent=5 // pred_region
        // Predicated region
        $region17: #{qkv_attention.1} parent=15 // pred_check
          %p84 = pneg %p33
        $region18: #{qkv_attention.1} parent=15 // pred_check_branch
          %86 = sbr.rel (%p84) target = $region20
        $region19: #{qkv_attention.1} parent=15 // pred_region
          %s87 = sand.u32 %s23, 1
          %s88 = scalar_lea.sflag [#allocation3], %s87
          %s89 = sand.u32 %s23, 1
          %s90 = smul.addr %s89, 384
          %s91 = scalar_lea.vmem [#allocation2], %s90
          %s93 = ssub.s32 6144, 6144
          %94 = vsyncadd %s88, %s93
          %s95 = smul.addr %s13, 48
          %s96 = smul.addr %s95, 128
          %s97 = scalar_lea.hbm %s0, %s96
          %s98 = sshll.u32 %s91, 4
          %s99 = int_to_ptr.vmem [resolvable:$true] %s98
          %104 = dma.hbm_to_vmem [thread:$0]  %s97, 6144, %s99, %s88, 256, 256, 16
        $region20: #{qkv_attention.1} parent=15 // pred_fallthru
          _
      $region16: #{qkv_attention.1} parent=5 // pred_fallthru
        _
      %p105 = scmp.le.s32.totalorder 1, %s13
      %p106 = scmp.lt.s32.totalorder %s13, 3
      %p107 = pnand %p105, %p106
      %p108 = pneg %p107
      // Predicated region
      $region21: #{qkv_attention.1} parent=5 // pred_check
        _
      $region22: #{qkv_attention.1} parent=5 // pred_check_branch
        %110 = sbr.rel (%p107) target = $region24
      $region23: #{qkv_attention.1} parent=5 // pred_region
        %s111 = ssub.s32 %s13, 1
        %s112 = sand.u32 %s26, 1
        %s113 = scalar_lea.sflag [#allocation3], %s112
        %s114 = sand.u32 %s26, 1
        %s115 = smul.addr %s114, 384
        %s116 = scalar_lea.vmem [#allocation2], %s115
        // Predicated region
        $region25: #{qkv_attention.1} parent=23 // pred_check
          %p117 = pneg %p39
        $region26: #{qkv_attention.1} parent=23 // pred_check_branch
          %119 = sbr.rel (%p117) target = $region28
        $region27: #{qkv_attention.1} parent=23 // pred_region
          %120 = dma.done %s113, 6144
        $region28: #{qkv_attention.1} parent=23 // pred_fallthru
          _
        %s121 = sand.u32 %s26, 1
        %s122 = scalar_lea.sflag [#allocation3], %s121
        %s123 = sand.u32 %s26, 1
        %s124 = smul.addr %s123, 384
        %s125 = scalar_lea.vmem [#allocation2], %s124
        %p126 = pneg %p39
        %p127 = pneg %p36
        %p128 = pneg %p65
        %p129 = pneg %p62
        %s130 = sand.u32 %s52, 1
        %s131 = scalar_lea.sflag [#allocation4], %s130
        %s132 = sand.u32 %s52, 1
        %s133 = smul.addr %s132, 128
        %s134 = scalar_lea.vmem [#allocation5], %s133
        %v136 = vld [vmem:[%s116] sm:$0xff]
        %v137 = vld [vmem:[%s116 + $0x8] sm:$0xff]
        %v138 = vld [vmem:[%s116 + $0x10] sm:$0xff]
        %v139 = vld [vmem:[%s116 + $0x18] sm:$0xff]
        %v140 = vld [vmem:[%s116 + $0x20] sm:$0xff]
        %v141 = vld [vmem:[%s116 + $0x28] sm:$0xff]
        %v142 = vld [vmem:[%s116 + $0x30] sm:$0xff]
        %v143 = vld [vmem:[%s116 + $0x38] sm:$0xff]
        %v144 = vld [vmem:[%s116 + $0x40] sm:$0xff]
        %v145 = vld [vmem:[%s116 + $0x48] sm:$0xff]
        %v146 = vld [vmem:[%s116 + $0x50] sm:$0xff]
        %v147 = vld [vmem:[%s116 + $0x58] sm:$0xff]
        %v148 = vmul.f32 %v136, 0.25
        %v149 = vmul.f32 %v137, 0.25
        %v150 = vmul.f32 %v138, 0.25
        %v151 = vmul.f32 %v139, 0.25
        %v152 = vpack.c.bf16 %v150, %v148
        %v153 = vpack.c.bf16 %v151, %v149
        %v154 = vpack.c.bf16 %v142, %v140
        %v155 = vpack.c.bf16 %v143, %v141
        %156 = vxpose.xlu0.c.b16.start [1/8] %v152, 128
        %157 = vxpose.xlu0.c.b16.cont [2/8] 0, 128
        %158 = vxpose.xlu0.c.b16.cont [3/8] 0, 128
        %159 = vxpose.xlu0.c.b16.cont [4/8] 0, 128
        %160 = vxpose.xlu0.c.b16.cont [5/8] 0, 128
        %161 = vxpose.xlu0.c.b16.cont [6/8] 0, 128
        %162 = vxpose.xlu0.c.b16.cont [7/8] 0, 128
        %163 = vxpose.xlu0.c.b16.end [8/8] 0, 128
        %v164 = vpop.trf.xlu0
        %v165 = vpop.trf.xlu0
        %v166 = vpop.trf.xlu0
        %v167 = vpop.trf.xlu0
        %v168 = vpop.trf.xlu0
        %v169 = vpop.trf.xlu0
        %v170 = vpop.trf.xlu0
        %v171 = vpop.trf.xlu0
        %172 = vxpose.xlu0.c.b16.start [1/8] %v153, 128
        %173 = vxpose.xlu0.c.b16.cont [2/8] 0, 128
        %174 = vxpose.xlu0.c.b16.cont [3/8] 0, 128
        %175 = vxpose.xlu0.c.b16.cont [4/8] 0, 128
        %176 = vxpose.xlu0.c.b16.cont [5/8] 0, 128
        %177 = vxpose.xlu0.c.b16.cont [6/8] 0, 128
        %178 = vxpose.xlu0.c.b16.cont [7/8] 0, 128
        %179 = vxpose.xlu0.c.b16.end [8/8] 0, 128
        %v180 = vpop.trf.xlu0
        %v181 = vpop.trf.xlu0
        %v182 = vpop.trf.xlu0
        %v183 = vpop.trf.xlu0
        %v184 = vpop.trf.xlu0
        %v185 = vpop.trf.xlu0
        %v186 = vpop.trf.xlu0
        %v187 = vpop.trf.xlu0
        %vm188 = vcmask 130048
        %v190 = vsel %vm188, %v164, 0
        %v193 = vsel %vm188, %v165, 0
        %v196 = vsel %vm188, %v166, 0
        %v199 = vsel %vm188, %v167, 0
        %v202 = vsel %vm188, %v168, 0
        %v205 = vsel %vm188, %v169, 0
        %v208 = vsel %vm188, %v170, 0
        %v211 = vsel %vm188, %v171, 0
        %v214 = vsel %vm188, %v180, 0
        %v217 = vsel %vm188, %v181, 0
        %v220 = vsel %vm188, %v182, 0
        %v223 = vsel %vm188, %v183, 0
        %v226 = vsel %vm188, %v184, 0
        %v229 = vsel %vm188, %v185, 0
        %v232 = vsel %vm188, %v186, 0
        %v235 = vsel %vm188, %v187, 0
        %237 = vmatprep.subr.bf16.mxu0 0
        %238 = vmatpush1.bf16.msra.mxu0 0
        %239 = vmatprep.subr.bf16.mxu0 0
        %240 = vmatpush1.bf16.msra.mxu0 0
        %241 = vmatprep.subr.bf16.mxu0 0
        %242 = vmatpush1.bf16.msra.mxu0 0
        %243 = vmatprep.subr.bf16.mxu0 0
        %244 = vmatpush1.bf16.msra.mxu0 0
        %245 = vmatprep.subr.bf16.mxu0 0
        %246 = vmatpush1.bf16.msra.mxu0 0
        %247 = vmatprep.subr.bf16.mxu0 0
        %248 = vmatpush1.bf16.msra.mxu0 0
        %249 = vmatprep.subr.bf16.mxu0 0
        %250 = vmatpush1.bf16.msra.mxu0 0
        %251 = vmatprep.subr.bf16.mxu0 %v155
        %252 = vmatpush1.bf16.msra.mxu0 %v154
        %253 = vmatprep.subr.bf16.mxu0 0
        %254 = vmatpush2.bf16.msra.mxu0 0
        %255 = vmatprep.subr.bf16.mxu0 0
        %256 = vmatpush2.bf16.msra.mxu0 0
        %257 = vmatprep.subr.bf16.mxu0 0
        %258 = vmatpush2.bf16.msra.mxu0 0
        %259 = vmatprep.subr.bf16.mxu0 0
        %260 = vmatpush2.bf16.msra.mxu0 0
        %261 = vmatprep.subr.bf16.mxu0 0
        %262 = vmatpush2.bf16.msra.mxu0 0
        %263 = vmatprep.subr.bf16.mxu0 0
        %264 = vmatpush2.bf16.msra.mxu0 0
        %265 = vmatprep.subr.bf16.mxu0 0
        %266 = vmatpush2.bf16.msra.mxu0 0
        %267 = vmatprep.subr.bf16.mxu0 0
        %268 = vmatpush2.bf16.msra.mxu0 0
        %269 = vmatprep.mubr.bf16.mxu0 0
        %270 = vmatmul.mubr.bf16.gmra.mxu0 %v190
        %v271 = vpop.f32.mrf.mxu0
        %v272 = vadd.f32 0.0, %v271
        %v273 = vpop.f32.mrf.mxu0
        %v274 = vadd.f32 0.0, %v273
        %v275 = vpop.f32.mrf.mxu0
        %v276 = vadd.f32 0.0, %v275
        %v277 = vpop.f32.mrf.mxu0
        %v278 = vadd.f32 0.0, %v277
        %279 = vmatprep.mubr.bf16.mxu0 0
        %280 = vmatmul.mubr.bf16.gmra.mxu0 %v193
        %v281 = vpop.f32.mrf.mxu0
        %v282 = vadd.f32 0.0, %v281
        %v283 = vpop.f32.mrf.mxu0
        %v284 = vadd.f32 0.0, %v283
        %v285 = vpop.f32.mrf.mxu0
        %v286 = vadd.f32 0.0, %v285
        %v287 = vpop.f32.mrf.mxu0
        %v288 = vadd.f32 0.0, %v287
        %289 = vmatprep.mubr.bf16.mxu0 0
        %290 = vmatmul.mubr.bf16.gmra.mxu0 %v196
        %v291 = vpop.f32.mrf.mxu0
        %v292 = vadd.f32 0.0, %v291
        %v293 = vpop.f32.mrf.mxu0
        %v294 = vadd.f32 0.0, %v293
        %v295 = vpop.f32.mrf.mxu0
        %v296 = vadd.f32 0.0, %v295
        %v297 = vpop.f32.mrf.mxu0
        %v298 = vadd.f32 0.0, %v297
        %299 = vmatprep.mubr.bf16.mxu0 0
        %300 = vmatmul.mubr.bf16.gmra.mxu0 %v199
        %v301 = vpop.f32.mrf.mxu0
        %v302 = vadd.f32 0.0, %v301
        %v303 = vpop.f32.mrf.mxu0
        %v304 = vadd.f32 0.0, %v303
        %v305 = vpop.f32.mrf.mxu0
        %v306 = vadd.f32 0.0, %v305
        %v307 = vpop.f32.mrf.mxu0
        %v308 = vadd.f32 0.0, %v307
        %309 = vmatprep.mubr.bf16.mxu0 0
        %310 = vmatmul.mubr.bf16.gmra.mxu0 %v202
        %v311 = vpop.f32.mrf.mxu0
        %v312 = vadd.f32 0.0, %v311
        %v313 = vpop.f32.mrf.mxu0
        %v314 = vadd.f32 0.0, %v313
        %v315 = vpop.f32.mrf.mxu0
        %v316 = vadd.f32 0.0, %v315
        %v317 = vpop.f32.mrf.mxu0
        %v318 = vadd.f32 0.0, %v317
        %319 = vmatprep.mubr.bf16.mxu0 0
        %320 = vmatmul.mubr.bf16.gmra.mxu0 %v205
        %v321 = vpop.f32.mrf.mxu0
        %v322 = vadd.f32 0.0, %v321
        %v323 = vpop.f32.mrf.mxu0
        %v324 = vadd.f32 0.0, %v323
        %v325 = vpop.f32.mrf.mxu0
        %v326 = vadd.f32 0.0, %v325
        %v327 = vpop.f32.mrf.mxu0
        %v328 = vadd.f32 0.0, %v327
        %329 = vmatprep.mubr.bf16.mxu0 0
        %330 = vmatmul.mubr.bf16.gmra.mxu0 %v208
        %v331 = vpop.f32.mrf.mxu0
        %v332 = vadd.f32 0.0, %v331
        %v333 = vpop.f32.mrf.mxu0
        %v334 = vadd.f32 0.0, %v333
        %v335 = vpop.f32.mrf.mxu0
        %v336 = vadd.f32 0.0, %v335
        %v337 = vpop.f32.mrf.mxu0
        %v338 = vadd.f32 0.0, %v337
        %339 = vmatprep.mubr.bf16.mxu0 0
        %340 = vmatmul.mubr.bf16.gmra.mxu0 %v211
        %v341 = vpop.f32.mrf.mxu0
        %v342 = vadd.f32 0.0, %v341
        %v343 = vpop.f32.mrf.mxu0
        %v344 = vadd.f32 0.0, %v343
        %v345 = vpop.f32.mrf.mxu0
        %v346 = vadd.f32 0.0, %v345
        %v347 = vpop.f32.mrf.mxu0
        %v348 = vadd.f32 0.0, %v347
        %349 = vmatprep.mubr.bf16.mxu0 0
        %350 = vmatmul.mubr.bf16.gmra.mxu0 %v214
        %v351 = vpop.f32.mrf.mxu0
        %v352 = vadd.f32 0.0, %v351
        %v353 = vpop.f32.mrf.mxu0
        %v354 = vadd.f32 0.0, %v353
        %v355 = vpop.f32.mrf.mxu0
        %v356 = vadd.f32 0.0, %v355
        %v357 = vpop.f32.mrf.mxu0
        %v358 = vadd.f32 0.0, %v357
        %359 = vmatprep.mubr.bf16.mxu0 0
        %360 = vmatmul.mubr.bf16.gmra.mxu0 %v217
        %v361 = vpop.f32.mrf.mxu0
        %v362 = vadd.f32 0.0, %v361
        %v363 = vpop.f32.mrf.mxu0
        %v364 = vadd.f32 0.0, %v363
        %v365 = vpop.f32.mrf.mxu0
        %v366 = vadd.f32 0.0, %v365
        %v367 = vpop.f32.mrf.mxu0
        %v368 = vadd.f32 0.0, %v367
        %369 = vmatprep.mubr.bf16.mxu0 0
        %370 = vmatmul.mubr.bf16.gmra.mxu0 %v220
        %v371 = vpop.f32.mrf.mxu0
        %v372 = vadd.f32 0.0, %v371
        %v373 = vpop.f32.mrf.mxu0
        %v374 = vadd.f32 0.0, %v373
        %v375 = vpop.f32.mrf.mxu0
        %v376 = vadd.f32 0.0, %v375
        %v377 = vpop.f32.mrf.mxu0
        %v378 = vadd.f32 0.0, %v377
        %379 = vmatprep.mubr.bf16.mxu0 0
        %380 = vmatmul.mubr.bf16.gmra.mxu0 %v223
        %v381 = vpop.f32.mrf.mxu0
        %v382 = vadd.f32 0.0, %v381
        %v383 = vpop.f32.mrf.mxu0
        %v384 = vadd.f32 0.0, %v383
        %v385 = vpop.f32.mrf.mxu0
        %v386 = vadd.f32 0.0, %v385
        %v387 = vpop.f32.mrf.mxu0
        %v388 = vadd.f32 0.0, %v387
        %389 = vmatprep.mubr.bf16.mxu0 0
        %390 = vmatmul.mubr.bf16.gmra.mxu0 %v226
        %v391 = vpop.f32.mrf.mxu0
        %v392 = vadd.f32 0.0, %v391
        %v393 = vpop.f32.mrf.mxu0
        %v394 = vadd.f32 0.0, %v393
        %v395 = vpop.f32.mrf.mxu0
        %v396 = vadd.f32 0.0, %v395
        %v397 = vpop.f32.mrf.mxu0
        %v398 = vadd.f32 0.0, %v397
        %399 = vmatprep.mubr.bf16.mxu0 0
        %400 = vmatmul.mubr.bf16.gmra.mxu0 %v229
        %v401 = vpop.f32.mrf.mxu0
        %v402 = vadd.f32 0.0, %v401
        %v403 = vpop.f32.mrf.mxu0
        %v404 = vadd.f32 0.0, %v403
        %v405 = vpop.f32.mrf.mxu0
        %v406 = vadd.f32 0.0, %v405
        %v407 = vpop.f32.mrf.mxu0
        %v408 = vadd.f32 0.0, %v407
        %409 = vmatprep.mubr.bf16.mxu0 0
        %410 = vmatmul.mubr.bf16.gmra.mxu0 %v232
        %v411 = vpop.f32.mrf.mxu0
        %v412 = vadd.f32 0.0, %v411
        %v413 = vpop.f32.mrf.mxu0
        %v414 = vadd.f32 0.0, %v413
        %v415 = vpop.f32.mrf.mxu0
        %v416 = vadd.f32 0.0, %v415
        %v417 = vpop.f32.mrf.mxu0
        %v418 = vadd.f32 0.0, %v417
        %419 = vmatprep.mubr.bf16.mxu0 0
        %420 = vmatmul.mubr.bf16.gmra.mxu0 %v235
        %v421 = vpop.f32.mrf.mxu0
        %v422 = vadd.f32 0.0, %v421
        %v423 = vpop.f32.mrf.mxu0
        %v424 = vadd.f32 0.0, %v423
        %v425 = vpop.f32.mrf.mxu0
        %v426 = vadd.f32 0.0, %v425
        %v427 = vpop.f32.mrf.mxu0
        %v428 = vadd.f32 0.0, %v427
        %429 = vdwg.mxu0
        %v430 = vmax.f32 %v272, %v274
        %431 = vmax.xlane.f32.xlu0 %v430
        %v432 = vpop.xlane.xlu0 %431
        %v433 = vmax.f32 %v276, %v278
        %434 = vmax.xlane.f32.xlu0 %v433
        %v435 = vpop.xlane.xlu0 %434
        %v436 = vmax.f32 %v282, %v284
        %437 = vmax.xlane.f32.xlu0 %v436
        %v438 = vpop.xlane.xlu0 %437
        %v439 = vmax.f32 %v286, %v288
        %440 = vmax.xlane.f32.xlu0 %v439
        %v441 = vpop.xlane.xlu0 %440
        %v442 = vmax.f32 %v292, %v294
        %443 = vmax.xlane.f32.xlu0 %v442
        %v444 = vpop.xlane.xlu0 %443
        %v445 = vmax.f32 %v296, %v298
        %446 = vmax.xlane.f32.xlu0 %v445
        %v447 = vpop.xlane.xlu0 %446
        %v448 = vmax.f32 %v302, %v304
        %449 = vmax.xlane.f32.xlu0 %v448
        %v450 = vpop.xlane.xlu0 %449
        %v451 = vmax.f32 %v306, %v308
        %452 = vmax.xlane.f32.xlu0 %v451
        %v453 = vpop.xlane.xlu0 %452
        %v454 = vmax.f32 %v312, %v314
        %455 = vmax.xlane.f32.xlu0 %v454
        %v456 = vpop.xlane.xlu0 %455
        %v457 = vmax.f32 %v316, %v318
        %458 = vmax.xlane.f32.xlu0 %v457
        %v459 = vpop.xlane.xlu0 %458
        %v460 = vmax.f32 %v322, %v324
        %461 = vmax.xlane.f32.xlu0 %v460
        %v462 = vpop.xlane.xlu0 %461
        %v463 = vmax.f32 %v326, %v328
        %464 = vmax.xlane.f32.xlu0 %v463
        %v465 = vpop.xlane.xlu0 %464
        %v466 = vmax.f32 %v332, %v334
        %467 = vmax.xlane.f32.xlu0 %v466
        %v468 = vpop.xlane.xlu0 %467
        %v469 = vmax.f32 %v336, %v338
        %470 = vmax.xlane.f32.xlu0 %v469
        %v471 = vpop.xlane.xlu0 %470
        %v472 = vmax.f32 %v342, %v344
        %473 = vmax.xlane.f32.xlu0 %v472
        %v474 = vpop.xlane.xlu0 %473
        %v475 = vmax.f32 %v346, %v348
        %476 = vmax.xlane.f32.xlu0 %v475
        %v477 = vpop.xlane.xlu0 %476
        %v478 = vmax.f32 %v352, %v354
        %479 = vmax.xlane.f32.xlu0 %v478
        %v480 = vpop.xlane.xlu0 %479
        %v481 = vmax.f32 %v356, %v358
        %482 = vmax.xlane.f32.xlu0 %v481
        %v483 = vpop.xlane.xlu0 %482
        %v484 = vmax.f32 %v362, %v364
        %485 = vmax.xlane.f32.xlu0 %v484
        %v486 = vpop.xlane.xlu0 %485
        %v487 = vmax.f32 %v366, %v368
        %488 = vmax.xlane.f32.xlu0 %v487
        %v489 = vpop.xlane.xlu0 %488
        %v490 = vmax.f32 %v372, %v374
        %491 = vmax.xlane.f32.xlu0 %v490
        %v492 = vpop.xlane.xlu0 %491
        %v493 = vmax.f32 %v376, %v378
        %494 = vmax.xlane.f32.xlu0 %v493
        %v495 = vpop.xlane.xlu0 %494
        %v496 = vmax.f32 %v382, %v384
        %497 = vmax.xlane.f32.xlu0 %v496
        %v498 = vpop.xlane.xlu0 %497
        %v499 = vmax.f32 %v386, %v388
        %500 = vmax.xlane.f32.xlu0 %v499
        %v501 = vpop.xlane.xlu0 %500
        %v502 = vmax.f32 %v392, %v394
        %503 = vmax.xlane.f32.xlu0 %v502
        %v504 = vpop.xlane.xlu0 %503
        %v505 = vmax.f32 %v396, %v398
        %506 = vmax.xlane.f32.xlu0 %v505
        %v507 = vpop.xlane.xlu0 %506
        %v508 = vmax.f32 %v402, %v404
        %509 = vmax.xlane.f32.xlu0 %v508
        %v510 = vpop.xlane.xlu0 %509
        %v511 = vmax.f32 %v406, %v408
        %512 = vmax.xlane.f32.xlu0 %v511
        %v513 = vpop.xlane.xlu0 %512
        %v514 = vmax.f32 %v412, %v414
        %515 = vmax.xlane.f32.xlu0 %v514
        %v516 = vpop.xlane.xlu0 %515
        %v517 = vmax.f32 %v416, %v418
        %518 = vmax.xlane.f32.xlu0 %v517
        %v519 = vpop.xlane.xlu0 %518
        %v520 = vmax.f32 %v422, %v424
        %521 = vmax.xlane.f32.xlu0 %v520
        %v522 = vpop.xlane.xlu0 %521
        %v523 = vmax.f32 %v426, %v428
        %524 = vmax.xlane.f32.xlu0 %v523
        %v525 = vpop.xlane.xlu0 %524
        %v526 = vsub.f32 %v272, %v432
        %v527 = vsub.f32 %v274, %v432
        %v528 = vsub.f32 %v276, %v435
        %v529 = vsub.f32 %v278, %v435
        %v530 = vsub.f32 %v282, %v438
        %v531 = vsub.f32 %v284, %v438
        %v532 = vsub.f32 %v286, %v441
        %v533 = vsub.f32 %v288, %v441
        %v534 = vsub.f32 %v292, %v444
        %v535 = vsub.f32 %v294, %v444
        %v536 = vsub.f32 %v296, %v447
        %v537 = vsub.f32 %v298, %v447
        %v538 = vsub.f32 %v302, %v450
        %v539 = vsub.f32 %v304, %v450
        %v540 = vsub.f32 %v306, %v453
        %v541 = vsub.f32 %v308, %v453
        %v542 = vsub.f32 %v312, %v456
        %v543 = vsub.f32 %v314, %v456
        %v544 = vsub.f32 %v316, %v459
        %v545 = vsub.f32 %v318, %v459
        %v546 = vsub.f32 %v322, %v462
        %v547 = vsub.f32 %v324, %v462
        %v548 = vsub.f32 %v326, %v465
        %v549 = vsub.f32 %v328, %v465
        %v550 = vsub.f32 %v332, %v468
        %v551 = vsub.f32 %v334, %v468
        %v552 = vsub.f32 %v336, %v471
        %v553 = vsub.f32 %v338, %v471
        %v554 = vsub.f32 %v342, %v474
        %v555 = vsub.f32 %v344, %v474
        %v556 = vsub.f32 %v346, %v477
        %v557 = vsub.f32 %v348, %v477
        %v558 = vsub.f32 %v352, %v480
        %v559 = vsub.f32 %v354, %v480
        %v560 = vsub.f32 %v356, %v483
        %v561 = vsub.f32 %v358, %v483
        %v562 = vsub.f32 %v362, %v486
        %v563 = vsub.f32 %v364, %v486
        %v564 = vsub.f32 %v366, %v489
        %v565 = vsub.f32 %v368, %v489
        %v566 = vsub.f32 %v372, %v492
        %v567 = vsub.f32 %v374, %v492
        %v568 = vsub.f32 %v376, %v495
        %v569 = vsub.f32 %v378, %v495
        %v570 = vsub.f32 %v382, %v498
        %v571 = vsub.f32 %v384, %v498
        %v572 = vsub.f32 %v386, %v501
        %v573 = vsub.f32 %v388, %v501
        %v574 = vsub.f32 %v392, %v504
        %v575 = vsub.f32 %v394, %v504
        %v576 = vsub.f32 %v396, %v507
        %v577 = vsub.f32 %v398, %v507
        %v578 = vsub.f32 %v402, %v510
        %v579 = vsub.f32 %v404, %v510
        %v580 = vsub.f32 %v406, %v513
        %v581 = vsub.f32 %v408, %v513
        %v582 = vsub.f32 %v412, %v516
        %v583 = vsub.f32 %v414, %v516
        %v584 = vsub.f32 %v416, %v519
        %v585 = vsub.f32 %v418, %v519
        %v586 = vsub.f32 %v422, %v522
        %v587 = vsub.f32 %v424, %v522
        %v588 = vsub.f32 %v426, %v525
        %v589 = vsub.f32 %v428, %v525
        %v590 = vmul.f32 %v526, 1.442695
        %v591 = vpow.pop %v590
        %v592 = vmul.f32 %v527, 1.442695
        %v593 = vpow.pop %v592
        %v594 = vmul.f32 %v528, 1.442695
        %v595 = vpow.pop %v594
        %v596 = vmul.f32 %v529, 1.442695
        %v597 = vpow.pop %v596
        %v598 = vmul.f32 %v530, 1.442695
        %v599 = vpow.pop %v598
        %v600 = vmul.f32 %v531, 1.442695
        %v601 = vpow.pop %v600
        %v602 = vmul.f32 %v532, 1.442695
        %v603 = vpow.pop %v602
        %v604 = vmul.f32 %v533, 1.442695
        %v605 = vpow.pop %v604
        %v606 = vmul.f32 %v534, 1.442695
        %v607 = vpow.pop %v606
        %v608 = vmul.f32 %v535, 1.442695
        %v609 = vpow.pop %v608
        %v610 = vmul.f32 %v536, 1.442695
        %v611 = vpow.pop %v610
        %v612 = vmul.f32 %v537, 1.442695
        %v613 = vpow.pop %v612
        %v614 = vmul.f32 %v538, 1.442695
        %v615 = vpow.pop %v614
        %v616 = vmul.f32 %v539, 1.442695
        %v617 = vpow.pop %v616
        %v618 = vmul.f32 %v540, 1.442695
        %v619 = vpow.pop %v618
        %v620 = vmul.f32 %v541, 1.442695
        %v621 = vpow.pop %v620
        %v622 = vmul.f32 %v542, 1.442695
        %v623 = vpow.pop %v622
        %v624 = vmul.f32 %v543, 1.442695
        %v625 = vpow.pop %v624
        %v626 = vmul.f32 %v544, 1.442695
        %v627 = vpow.pop %v626
        %v628 = vmul.f32 %v545, 1.442695
        %v629 = vpow.pop %v628
        %v630 = vmul.f32 %v546, 1.442695
        %v631 = vpow.pop %v630
        %v632 = vmul.f32 %v547, 1.442695
        %v633 = vpow.pop %v632
        %v634 = vmul.f32 %v548, 1.442695
        %v635 = vpow.pop %v634
        %v636 = vmul.f32 %v549, 1.442695
        %v637 = vpow.pop %v636
        %v638 = vmul.f32 %v550, 1.442695
        %v639 = vpow.pop %v638
        %v640 = vmul.f32 %v551, 1.442695
        %v641 = vpow.pop %v640
        %v642 = vmul.f32 %v552, 1.442695
        %v643 = vpow.pop %v642
        %v644 = vmul.f32 %v553, 1.442695
        %v645 = vpow.pop %v644
        %v646 = vmul.f32 %v554, 1.442695
        %v647 = vpow.pop %v646
        %v648 = vmul.f32 %v555, 1.442695
        %v649 = vpow.pop %v648
        %v650 = vmul.f32 %v556, 1.442695
        %v651 = vpow.pop %v650
        %v652 = vmul.f32 %v557, 1.442695
        %v653 = vpow.pop %v652
        %v654 = vmul.f32 %v558, 1.442695
        %v655 = vpow.pop %v654
        %v656 = vmul.f32 %v559, 1.442695
        %v657 = vpow.pop %v656
        %v658 = vmul.f32 %v560, 1.442695
        %v659 = vpow.pop %v658
        %v660 = vmul.f32 %v561, 1.442695
        %v661 = vpow.pop %v660
        %v662 = vmul.f32 %v562, 1.442695
        %v663 = vpow.pop %v662
        %v664 = vmul.f32 %v563, 1.442695
        %v665 = vpow.pop %v664
        %v666 = vmul.f32 %v564, 1.442695
        %v667 = vpow.pop %v666
        %v668 = vmul.f32 %v565, 1.442695
        %v669 = vpow.pop %v668
        %v670 = vmul.f32 %v566, 1.442695
        %v671 = vpow.pop %v670
        %v672 = vmul.f32 %v567, 1.442695
        %v673 = vpow.pop %v672
        %v674 = vmul.f32 %v568, 1.442695
        %v675 = vpow.pop %v674
        %v676 = vmul.f32 %v569, 1.442695
        %v677 = vpow.pop %v676
        %v678 = vmul.f32 %v570, 1.442695
        %v679 = vpow.pop %v678
        %v680 = vmul.f32 %v571, 1.442695
        %v681 = vpow.pop %v680
        %v682 = vmul.f32 %v572, 1.442695
        %v683 = vpow.pop %v682
        %v684 = vmul.f32 %v573, 1.442695
        %v685 = vpow.pop %v684
        %v686 = vmul.f32 %v574, 1.442695
        %v687 = vpow.pop %v686
        %v688 = vmul.f32 %v575, 1.442695
        %v689 = vpow.pop %v688
        %v690 = vmul.f32 %v576, 1.442695
        %v691 = vpow.pop %v690
        %v692 = vmul.f32 %v577, 1.442695
        %v693 = vpow.pop %v692
        %v694 = vmul.f32 %v578, 1.442695
        %v695 = vpow.pop %v694
        %v696 = vmul.f32 %v579, 1.442695
        %v697 = vpow.pop %v696
        %v698 = vmul.f32 %v580, 1.442695
        %v699 = vpow.pop %v698
        %v700 = vmul.f32 %v581, 1.442695
        %v701 = vpow.pop %v700
        %v702 = vmul.f32 %v582, 1.442695
        %v703 = vpow.pop %v702
        %v704 = vmul.f32 %v583, 1.442695
        %v705 = vpow.pop %v704
        %v706 = vmul.f32 %v584, 1.442695
        %v707 = vpow.pop %v706
        %v708 = vmul.f32 %v585, 1.442695
        %v709 = vpow.pop %v708
        %v710 = vmul.f32 %v586, 1.442695
        %v711 = vpow.pop %v710
        %v712 = vmul.f32 %v587, 1.442695
        %v713 = vpow.pop %v712
        %v714 = vmul.f32 %v588, 1.442695
        %v715 = vpow.pop %v714
        %v716 = vmul.f32 %v589, 1.442695
        %v717 = vpow.pop %v716
        %v718 = vadd.f32 %v591, %v593
        %719 = vadd.xlane.f32.xlu0 %v718
        %v720 = vpop.xlane.xlu0 %719
        %v721 = vadd.f32 %v595, %v597
        %722 = vadd.xlane.f32.xlu0 %v721
        %v723 = vpop.xlane.xlu0 %722
        %v724 = vadd.f32 %v599, %v601
        %725 = vadd.xlane.f32.xlu0 %v724
        %v726 = vpop.xlane.xlu0 %725
        %v727 = vadd.f32 %v603, %v605
        %728 = vadd.xlane.f32.xlu0 %v727
        %v729 = vpop.xlane.xlu0 %728
        %v730 = vadd.f32 %v607, %v609
        %731 = vadd.xlane.f32.xlu0 %v730
        %v732 = vpop.xlane.xlu0 %731
        %v733 = vadd.f32 %v611, %v613
        %734 = vadd.xlane.f32.xlu0 %v733
        %v735 = vpop.xlane.xlu0 %734
        %v736 = vadd.f32 %v615, %v617
        %737 = vadd.xlane.f32.xlu0 %v736
        %v738 = vpop.xlane.xlu0 %737
        %v739 = vadd.f32 %v619, %v621
        %740 = vadd.xlane.f32.xlu0 %v739
        %v741 = vpop.xlane.xlu0 %740
        %v742 = vadd.f32 %v623, %v625
        %743 = vadd.xlane.f32.xlu0 %v742
        %v744 = vpop.xlane.xlu0 %743
        %v745 = vadd.f32 %v627, %v629
        %746 = vadd.xlane.f32.xlu0 %v745
        %v747 = vpop.xlane.xlu0 %746
        %v748 = vadd.f32 %v631, %v633
        %749 = vadd.xlane.f32.xlu0 %v748
        %v750 = vpop.xlane.xlu0 %749
        %v751 = vadd.f32 %v635, %v637
        %752 = vadd.xlane.f32.xlu0 %v751
        %v753 = vpop.xlane.xlu0 %752
        %v754 = vadd.f32 %v639, %v641
        %755 = vadd.xlane.f32.xlu0 %v754
        %v756 = vpop.xlane.xlu0 %755
        %v757 = vadd.f32 %v643, %v645
        %758 = vadd.xlane.f32.xlu0 %v757
        %v759 = vpop.xlane.xlu0 %758
        %v760 = vadd.f32 %v647, %v649
        %761 = vadd.xlane.f32.xlu0 %v760
        %v762 = vpop.xlane.xlu0 %761
        %v763 = vadd.f32 %v651, %v653
        %764 = vadd.xlane.f32.xlu0 %v763
        %v765 = vpop.xlane.xlu0 %764
        %v766 = vadd.f32 %v655, %v657
        %767 = vadd.xlane.f32.xlu0 %v766
        %v768 = vpop.xlane.xlu0 %767
        %v769 = vadd.f32 %v659, %v661
        %770 = vadd.xlane.f32.xlu0 %v769
        %v771 = vpop.xlane.xlu0 %770
        %v772 = vadd.f32 %v663, %v665
        %773 = vadd.xlane.f32.xlu0 %v772
        %v774 = vpop.xlane.xlu0 %773
        %v775 = vadd.f32 %v667, %v669
        %776 = vadd.xlane.f32.xlu0 %v775
        %v777 = vpop.xlane.xlu0 %776
        %v778 = vadd.f32 %v671, %v673
        %779 = vadd.xlane.f32.xlu0 %v778
        %v780 = vpop.xlane.xlu0 %779
        %v781 = vadd.f32 %v675, %v677
        %782 = vadd.xlane.f32.xlu0 %v781
        %v783 = vpop.xlane.xlu0 %782
        %v784 = vadd.f32 %v679, %v681
        %785 = vadd.xlane.f32.xlu0 %v784
        %v786 = vpop.xlane.xlu0 %785
        %v787 = vadd.f32 %v683, %v685
        %788 = vadd.xlane.f32.xlu0 %v787
        %v789 = vpop.xlane.xlu0 %788
        %v790 = vadd.f32 %v687, %v689
        %791 = vadd.xlane.f32.xlu0 %v790
        %v792 = vpop.xlane.xlu0 %791
        %v793 = vadd.f32 %v691, %v693
        %794 = vadd.xlane.f32.xlu0 %v793
        %v795 = vpop.xlane.xlu0 %794
        %v796 = vadd.f32 %v695, %v697
        %797 = vadd.xlane.f32.xlu0 %v796
        %v798 = vpop.xlane.xlu0 %797
        %v799 = vadd.f32 %v699, %v701
        %800 = vadd.xlane.f32.xlu0 %v799
        %v801 = vpop.xlane.xlu0 %800
        %v802 = vadd.f32 %v703, %v705
        %803 = vadd.xlane.f32.xlu0 %v802
        %v804 = vpop.xlane.xlu0 %803
        %v805 = vadd.f32 %v707, %v709
        %806 = vadd.xlane.f32.xlu0 %v805
        %v807 = vpop.xlane.xlu0 %806
        %v808 = vadd.f32 %v711, %v713
        %809 = vadd.xlane.f32.xlu0 %v808
        %v810 = vpop.xlane.xlu0 %809
        %v811 = vadd.f32 %v715, %v717
        %812 = vadd.xlane.f32.xlu0 %v811
        %v813 = vpop.xlane.xlu0 %812
        %v814 = vrcp.pop %v720
        %v815 = vrcp.pop %v723
        %v816 = vrcp.pop %v726
        %v817 = vrcp.pop %v729
        %v818 = vrcp.pop %v732
        %v819 = vrcp.pop %v735
        %v820 = vrcp.pop %v738
        %v821 = vrcp.pop %v741
        %v822 = vrcp.pop %v744
        %v823 = vrcp.pop %v747
        %v824 = vrcp.pop %v750
        %v825 = vrcp.pop %v753
        %v826 = vrcp.pop %v756
        %v827 = vrcp.pop %v759
        %v828 = vrcp.pop %v762
        %v829 = vrcp.pop %v765
        %v830 = vrcp.pop %v768
        %v831 = vrcp.pop %v771
        %v832 = vrcp.pop %v774
        %v833 = vrcp.pop %v777
        %v834 = vrcp.pop %v780
        %v835 = vrcp.pop %v783
        %v836 = vrcp.pop %v786
        %v837 = vrcp.pop %v789
        %v838 = vrcp.pop %v792
        %v839 = vrcp.pop %v795
        %v840 = vrcp.pop %v798
        %v841 = vrcp.pop %v801
        %v842 = vrcp.pop %v804
        %v843 = vrcp.pop %v807
        %v844 = vrcp.pop %v810
        %v845 = vrcp.pop %v813
        %v846 = vmul.f32 %v591, %v814
        %v847 = vmul.f32 %v593, %v814
        %v848 = vmul.f32 %v595, %v815
        %v849 = vmul.f32 %v597, %v815
        %v850 = vmul.f32 %v599, %v816
        %v851 = vmul.f32 %v601, %v816
        %v852 = vmul.f32 %v603, %v817
        %v853 = vmul.f32 %v605, %v817
        %v854 = vmul.f32 %v607, %v818
        %v855 = vmul.f32 %v609, %v818
        %v856 = vmul.f32 %v611, %v819
        %v857 = vmul.f32 %v613, %v819
        %v858 = vmul.f32 %v615, %v820
        %v859 = vmul.f32 %v617, %v820
        %v860 = vmul.f32 %v619, %v821
        %v861 = vmul.f32 %v621, %v821
        %v862 = vmul.f32 %v623, %v822
        %v863 = vmul.f32 %v625, %v822
        %v864 = vmul.f32 %v627, %v823
        %v865 = vmul.f32 %v629, %v823
        %v866 = vmul.f32 %v631, %v824
        %v867 = vmul.f32 %v633, %v824
        %v868 = vmul.f32 %v635, %v825
        %v869 = vmul.f32 %v637, %v825
        %v870 = vmul.f32 %v639, %v826
        %v871 = vmul.f32 %v641, %v826
        %v872 = vmul.f32 %v643, %v827
        %v873 = vmul.f32 %v645, %v827
        %v874 = vmul.f32 %v647, %v828
        %v875 = vmul.f32 %v649, %v828
        %v876 = vmul.f32 %v651, %v829
        %v877 = vmul.f32 %v653, %v829
        %v878 = vmul.f32 %v655, %v830
        %v879 = vmul.f32 %v657, %v830
        %v880 = vmul.f32 %v659, %v831
        %v881 = vmul.f32 %v661, %v831
        %v882 = vmul.f32 %v663, %v832
        %v883 = vmul.f32 %v665, %v832
        %v884 = vmul.f32 %v667, %v833
        %v885 = vmul.f32 %v669, %v833
        %v886 = vmul.f32 %v671, %v834
        %v887 = vmul.f32 %v673, %v834
        %v888 = vmul.f32 %v675, %v835
        %v889 = vmul.f32 %v677, %v835
        %v890 = vmul.f32 %v679, %v836
        %v891 = vmul.f32 %v681, %v836
        %v892 = vmul.f32 %v683, %v837
        %v893 = vmul.f32 %v685, %v837
        %v894 = vmul.f32 %v687, %v838
        %v895 = vmul.f32 %v689, %v838
        %v896 = vmul.f32 %v691, %v839
        %v897 = vmul.f32 %v693, %v839
        %v898 = vmul.f32 %v695, %v840
        %v899 = vmul.f32 %v697, %v840
        %v900 = vmul.f32 %v699, %v841
        %v901 = vmul.f32 %v701, %v841
        %v902 = vmul.f32 %v703, %v842
        %v903 = vmul.f32 %v705, %v842
        %v904 = vmul.f32 %v707, %v843
        %v905 = vmul.f32 %v709, %v843
        %v906 = vmul.f32 %v711, %v844
        %v907 = vmul.f32 %v713, %v844
        %v908 = vmul.f32 %v715, %v845
        %v909 = vmul.f32 %v717, %v845
        %v910 = vpack.c.bf16 %v146, %v144
        %v911 = vpack.c.bf16 %v147, %v145
        %v912 = vpack.c.bf16 %v848, %v846
        %v913 = vpack.c.bf16 %v849, %v847
        %v914 = vpack.c.bf16 %v852, %v850
        %v915 = vpack.c.bf16 %v853, %v851
        %v916 = vpack.c.bf16 %v856, %v854
        %v917 = vpack.c.bf16 %v857, %v855
        %v918 = vpack.c.bf16 %v860, %v858
        %v919 = vpack.c.bf16 %v861, %v859
        %v920 = vpack.c.bf16 %v864, %v862
        %v921 = vpack.c.bf16 %v865, %v863
        %v922 = vpack.c.bf16 %v868, %v866
        %v923 = vpack.c.bf16 %v869, %v867
        %v924 = vpack.c.bf16 %v872, %v870
        %v925 = vpack.c.bf16 %v873, %v871
        %v926 = vpack.c.bf16 %v876, %v874
        %v927 = vpack.c.bf16 %v877, %v875
        %v928 = vpack.c.bf16 %v880, %v878
        %v929 = vpack.c.bf16 %v881, %v879
        %v930 = vpack.c.bf16 %v884, %v882
        %v931 = vpack.c.bf16 %v885, %v883
        %v932 = vpack.c.bf16 %v888, %v886
        %v933 = vpack.c.bf16 %v889, %v887
        %v934 = vpack.c.bf16 %v892, %v890
        %v935 = vpack.c.bf16 %v893, %v891
        %v936 = vpack.c.bf16 %v896, %v894
        %v937 = vpack.c.bf16 %v897, %v895
        %v938 = vpack.c.bf16 %v900, %v898
        %v939 = vpack.c.bf16 %v901, %v899
        %v940 = vpack.c.bf16 %v904, %v902
        %v941 = vpack.c.bf16 %v905, %v903
        %v942 = vpack.c.bf16 %v908, %v906
        %v943 = vpack.c.bf16 %v909, %v907
        %944 = vmatprep.subr.bf16.mxu0 %v927
        %945 = vmatpush1.bf16.xpose.msra.mxu0 %v926
        %946 = vmatprep.subr.bf16.mxu0 %v925
        %947 = vmatpush1.bf16.xpose.msra.mxu0 %v924
        %948 = vmatprep.subr.bf16.mxu0 %v923
        %949 = vmatpush1.bf16.xpose.msra.mxu0 %v922
        %950 = vmatprep.subr.bf16.mxu0 %v921
        %951 = vmatpush1.bf16.xpose.msra.mxu0 %v920
        %952 = vmatprep.subr.bf16.mxu0 %v919
        %953 = vmatpush1.bf16.xpose.msra.mxu0 %v918
        %954 = vmatprep.subr.bf16.mxu0 %v917
        %955 = vmatpush1.bf16.xpose.msra.mxu0 %v916
        %956 = vmatprep.subr.bf16.mxu0 %v915
        %957 = vmatpush1.bf16.xpose.msra.mxu0 %v914
        %958 = vmatprep.subr.bf16.mxu0 %v913
        %959 = vmatpush1.bf16.xpose.msra.mxu0 %v912
        %960 = vmatprep.subr.bf16.mxu0 %v943
        %961 = vmatpush2.bf16.xpose.msra.mxu0 %v942
        %962 = vmatprep.subr.bf16.mxu0 %v941
        %963 = vmatpush2.bf16.xpose.msra.mxu0 %v940
        %964 = vmatprep.subr.bf16.mxu0 %v939
        %965 = vmatpush2.bf16.xpose.msra.mxu0 %v938
        %966 = vmatprep.subr.bf16.mxu0 %v937
        %967 = vmatpush2.bf16.xpose.msra.mxu0 %v936
        %968 = vmatprep.subr.bf16.mxu0 %v935
        %969 = vmatpush2.bf16.xpose.msra.mxu0 %v934
        %970 = vmatprep.subr.bf16.mxu0 %v933
        %971 = vmatpush2.bf16.xpose.msra.mxu0 %v932
        %972 = vmatprep.subr.bf16.mxu0 %v931
        %973 = vmatpush2.bf16.xpose.msra.mxu0 %v930
        %974 = vmatprep.subr.bf16.mxu0 %v929
        %975 = vmatpush2.bf16.xpose.msra.mxu0 %v928
        %976 = vmatprep.mubr.bf16.mxu0 %v911
        %977 = vmatmul.mubr.bf16.gmra.mxu0 %v910
        %v978 = vpop.f32.mrf.mxu0
        %v979 = vadd.f32 0.0, %v978
        %v980 = vpop.f32.mrf.mxu0
        %v981 = vadd.f32 0.0, %v980
        %v982 = vpop.f32.mrf.mxu0
        %v983 = vadd.f32 0.0, %v982
        %v984 = vpop.f32.mrf.mxu0
        %v985 = vadd.f32 0.0, %v984
        %986 = vdwg.mxu0
        %987 = vst [vmem:[%s134] sm:$0xff] %v979
        %988 = vst [vmem:[%s134 + $0x8] sm:$0xff] %v981
        %989 = vst [vmem:[%s134 + $0x10] sm:$0xff] %v983
        %990 = vst [vmem:[%s134 + $0x18] sm:$0xff] %v985
        %v991 = vld [vmem:[%s116 + $0x60] sm:$0xff]
        %v992 = vld [vmem:[%s116 + $0x68] sm:$0xff]
        %v993 = vld [vmem:[%s116 + $0x70] sm:$0xff]
        %v994 = vld [vmem:[%s116 + $0x78] sm:$0xff]
        %v995 = vld [vmem:[%s116 + $0x80] sm:$0xff]
        %v996 = vld [vmem:[%s116 + $0x88] sm:$0xff]
        %v997 = vld [vmem:[%s116 + $0x90] sm:$0xff]
        %v998 = vld [vmem:[%s116 + $0x98] sm:$0xff]
        %v999 = vld [vmem:[%s116 + $0xa0] sm:$0xff]
        %v1000 = vld [vmem:[%s116 + $0xa8] sm:$0xff]
        %v1001 = vld [vmem:[%s116 + $0xb0] sm:$0xff]
        %v1002 = vld [vmem:[%s116 + $0xb8] sm:$0xff]
        %v1003 = vmul.f32 %v991, 0.25
        %v1004 = vmul.f32 %v992, 0.25
        %v1005 = vmul.f32 %v993, 0.25
        %v1006 = vmul.f32 %v994, 0.25
        %v1007 = vpack.c.bf16 %v1005, %v1003
        %v1008 = vpack.c.bf16 %v1006, %v1004
        %v1009 = vpack.c.bf16 %v997, %v995
        %v1010 = vpack.c.bf16 %v998, %v996
        %1011 = vxpose.xlu0.c.b16.start [1/8] %v1007, 128
        %1012 = vxpose.xlu0.c.b16.cont [2/8] 0, 128
        %1013 = vxpose.xlu0.c.b16.cont [3/8] 0, 128
        %1014 = vxpose.xlu0.c.b16.cont [4/8] 0, 128
        %1015 = vxpose.xlu0.c.b16.cont [5/8] 0, 128
        %1016 = vxpose.xlu0.c.b16.cont [6/8] 0, 128
        %1017 = vxpose.xlu0.c.b16.cont [7/8] 0, 128
        %1018 = vxpose.xlu0.c.b16.end [8/8] 0, 128
        %v1019 = vpop.trf.xlu0
        %v1020 = vpop.trf.xlu0
        %v1021 = vpop.trf.xlu0
        %v1022 = vpop.trf.xlu0
        %v1023 = vpop.trf.xlu0
        %v1024 = vpop.trf.xlu0
        %v1025 = vpop.trf.xlu0
        %v1026 = vpop.trf.xlu0
        %1027 = vxpose.xlu0.c.b16.start [1/8] %v1008, 128
        %1028 = vxpose.xlu0.c.b16.cont [2/8] 0, 128
        %1029 = vxpose.xlu0.c.b16.cont [3/8] 0, 128
        %1030 = vxpose.xlu0.c.b16.cont [4/8] 0, 128
        %1031 = vxpose.xlu0.c.b16.cont [5/8] 0, 128
        %1032 = vxpose.xlu0.c.b16.cont [6/8] 0, 128
        %1033 = vxpose.xlu0.c.b16.cont [7/8] 0, 128
        %1034 = vxpose.xlu0.c.b16.end [8/8] 0, 128
        %v1035 = vpop.trf.xlu0
        %v1036 = vpop.trf.xlu0
        %v1037 = vpop.trf.xlu0
        %v1038 = vpop.trf.xlu0
        %v1039 = vpop.trf.xlu0
        %v1040 = vpop.trf.xlu0
        %v1041 = vpop.trf.xlu0
        %v1042 = vpop.trf.xlu0
        %v1044 = vsel %vm188, %v1019, 0
        %v1047 = vsel %vm188, %v1020, 0
        %v1050 = vsel %vm188, %v1021, 0
        %v1053 = vsel %vm188, %v1022, 0
        %v1056 = vsel %vm188, %v1023, 0
        %v1059 = vsel %vm188, %v1024, 0
        %v1062 = vsel %vm188, %v1025, 0
        %v1065 = vsel %vm188, %v1026, 0
        %v1068 = vsel %vm188, %v1035, 0
        %v1071 = vsel %vm188, %v1036, 0
        %v1074 = vsel %vm188, %v1037, 0
        %v1077 = vsel %vm188, %v1038, 0
        %v1080 = vsel %vm188, %v1039, 0
        %v1083 = vsel %vm188, %v1040, 0
        %v1086 = vsel %vm188, %v1041, 0
        %v1089 = vsel %vm188, %v1042, 0
        %1091 = vmatprep.subr.bf16.mxu0 0
        %1092 = vmatpush1.bf16.msra.mxu0 0
        %1093 = vmatprep.subr.bf16.mxu0 0
        %1094 = vmatpush1.bf16.msra.mxu0 0
        %1095 = vmatprep.subr.bf16.mxu0 0
        %1096 = vmatpush1.bf16.msra.mxu0 0
        %1097 = vmatprep.subr.bf16.mxu0 0
        %1098 = vmatpush1.bf16.msra.mxu0 0
        %1099 = vmatprep.subr.bf16.mxu0 0
        %1100 = vmatpush1.bf16.msra.mxu0 0
        %1101 = vmatprep.subr.bf16.mxu0 0
        %1102 = vmatpush1.bf16.msra.mxu0 0
        %1103 = vmatprep.subr.bf16.mxu0 0
        %1104 = vmatpush1.bf16.msra.mxu0 0
        %1105 = vmatprep.subr.bf16.mxu0 %v1010
        %1106 = vmatpush1.bf16.msra.mxu0 %v1009
        %1107 = vmatprep.subr.bf16.mxu0 0
        %1108 = vmatpush2.bf16.msra.mxu0 0
        %1109 = vmatprep.subr.bf16.mxu0 0
        %1110 = vmatpush2.bf16.msra.mxu0 0
        %1111 = vmatprep.subr.bf16.mxu0 0
        %1112 = vmatpush2.bf16.msra.mxu0 0
        %1113 = vmatprep.subr.bf16.mxu0 0
        %1114 = vmatpush2.bf16.msra.mxu0 0
        %1115 = vmatprep.subr.bf16.mxu0 0
        %1116 = vmatpush2.bf16.msra.mxu0 0
        %1117 = vmatprep.subr.bf16.mxu0 0
        %1118 = vmatpush2.bf16.msra.mxu0 0
        %1119 = vmatprep.subr.bf16.mxu0 0
        %1120 = vmatpush2.bf16.msra.mxu0 0
        %1121 = vmatprep.subr.bf16.mxu0 0
        %1122 = vmatpush2.bf16.msra.mxu0 0
        %1123 = vmatprep.mubr.bf16.mxu0 0
        %1124 = vmatmul.mubr.bf16.gmra.mxu0 %v1044
        %v1125 = vpop.f32.mrf.mxu0
        %v1126 = vadd.f32 0.0, %v1125
        %v1127 = vpop.f32.mrf.mxu0
        %v1128 = vadd.f32 0.0, %v1127
        %v1129 = vpop.f32.mrf.mxu0
        %v1130 = vadd.f32 0.0, %v1129
        %v1131 = vpop.f32.mrf.mxu0
        %v1132 = vadd.f32 0.0, %v1131
        %1133 = vmatprep.mubr.bf16.mxu0 0
        %1134 = vmatmul.mubr.bf16.gmra.mxu0 %v1047
        %v1135 = vpop.f32.mrf.mxu0
        %v1136 = vadd.f32 0.0, %v1135
        %v1137 = vpop.f32.mrf.mxu0
        %v1138 = vadd.f32 0.0, %v1137
        %v1139 = vpop.f32.mrf.mxu0
        %v1140 = vadd.f32 0.0, %v1139
        %v1141 = vpop.f32.mrf.mxu0
        %v1142 = vadd.f32 0.0, %v1141
        %1143 = vmatprep.mubr.bf16.mxu0 0
        %1144 = vmatmul.mubr.bf16.gmra.mxu0 %v1050
        %v1145 = vpop.f32.mrf.mxu0
        %v1146 = vadd.f32 0.0, %v1145
        %v1147 = vpop.f32.mrf.mxu0
        %v1148 = vadd.f32 0.0, %v1147
        %v1149 = vpop.f32.mrf.mxu0
        %v1150 = vadd.f32 0.0, %v1149
        %v1151 = vpop.f32.mrf.mxu0
        %v1152 = vadd.f32 0.0, %v1151
        %1153 = vmatprep.mubr.bf16.mxu0 0
        %1154 = vmatmul.mubr.bf16.gmra.mxu0 %v1053
        %v1155 = vpop.f32.mrf.mxu0
        %v1156 = vadd.f32 0.0, %v1155
        %v1157 = vpop.f32.mrf.mxu0
        %v1158 = vadd.f32 0.0, %v1157
        %v1159 = vpop.f32.mrf.mxu0
        %v1160 = vadd.f32 0.0, %v1159
        %v1161 = vpop.f32.mrf.mxu0
        %v1162 = vadd.f32 0.0, %v1161
        %1163 = vmatprep.mubr.bf16.mxu0 0
        %1164 = vmatmul.mubr.bf16.gmra.mxu0 %v1056
        %v1165 = vpop.f32.mrf.mxu0
        %v1166 = vadd.f32 0.0, %v1165
        %v1167 = vpop.f32.mrf.mxu0
        %v1168 = vadd.f32 0.0, %v1167
        %v1169 = vpop.f32.mrf.mxu0
        %v1170 = vadd.f32 0.0, %v1169
        %v1171 = vpop.f32.mrf.mxu0
        %v1172 = vadd.f32 0.0, %v1171
        %1173 = vmatprep.mubr.bf16.mxu0 0
        %1174 = vmatmul.mubr.bf16.gmra.mxu0 %v1059
        %v1175 = vpop.f32.mrf.mxu0
        %v1176 = vadd.f32 0.0, %v1175
        %v1177 = vpop.f32.mrf.mxu0
        %v1178 = vadd.f32 0.0, %v1177
        %v1179 = vpop.f32.mrf.mxu0
        %v1180 = vadd.f32 0.0, %v1179
        %v1181 = vpop.f32.mrf.mxu0
        %v1182 = vadd.f32 0.0, %v1181
        %1183 = vmatprep.mubr.bf16.mxu0 0
        %1184 = vmatmul.mubr.bf16.gmra.mxu0 %v1062
        %v1185 = vpop.f32.mrf.mxu0
        %v1186 = vadd.f32 0.0, %v1185
        %v1187 = vpop.f32.mrf.mxu0
        %v1188 = vadd.f32 0.0, %v1187
        %v1189 = vpop.f32.mrf.mxu0
        %v1190 = vadd.f32 0.0, %v1189
        %v1191 = vpop.f32.mrf.mxu0
        %v1192 = vadd.f32 0.0, %v1191
        %1193 = vmatprep.mubr.bf16.mxu0 0
        %1194 = vmatmul.mubr.bf16.gmra.mxu0 %v1065
        %v1195 = vpop.f32.mrf.mxu0
        %v1196 = vadd.f32 0.0, %v1195
        %v1197 = vpop.f32.mrf.mxu0
        %v1198 = vadd.f32 0.0, %v1197
        %v1199 = vpop.f32.mrf.mxu0
        %v1200 = vadd.f32 0.0, %v1199
        %v1201 = vpop.f32.mrf.mxu0
        %v1202 = vadd.f32 0.0, %v1201
        %1203 = vmatprep.mubr.bf16.mxu0 0
        %1204 = vmatmul.mubr.bf16.gmra.mxu0 %v1068
        %v1205 = vpop.f32.mrf.mxu0
        %v1206 = vadd.f32 0.0, %v1205
        %v1207 = vpop.f32.mrf.mxu0
        %v1208 = vadd.f32 0.0, %v1207
        %v1209 = vpop.f32.mrf.mxu0
        %v1210 = vadd.f32 0.0, %v1209
        %v1211 = vpop.f32.mrf.mxu0
        %v1212 = vadd.f32 0.0, %v1211
        %1213 = vmatprep.mubr.bf16.mxu0 0
        %1214 = vmatmul.mubr.bf16.gmra.mxu0 %v1071
        %v1215 = vpop.f32.mrf.mxu0
        %v1216 = vadd.f32 0.0, %v1215
        %v1217 = vpop.f32.mrf.mxu0
        %v1218 = vadd.f32 0.0, %v1217
        %v1219 = vpop.f32.mrf.mxu0
        %v1220 = vadd.f32 0.0, %v1219
        %v1221 = vpop.f32.mrf.mxu0
        %v1222 = vadd.f32 0.0, %v1221
        %1223 = vmatprep.mubr.bf16.mxu0 0
        %1224 = vmatmul.mubr.bf16.gmra.mxu0 %v1074
        %v1225 = vpop.f32.mrf.mxu0
        %v1226 = vadd.f32 0.0, %v1225
        %v1227 = vpop.f32.mrf.mxu0
        %v1228 = vadd.f32 0.0, %v1227
        %v1229 = vpop.f32.mrf.mxu0
        %v1230 = vadd.f32 0.0, %v1229
        %v1231 = vpop.f32.mrf.mxu0
        %v1232 = vadd.f32 0.0, %v1231
        %1233 = vmatprep.mubr.bf16.mxu0 0
        %1234 = vmatmul.mubr.bf16.gmra.mxu0 %v1077
        %v1235 = vpop.f32.mrf.mxu0
        %v1236 = vadd.f32 0.0, %v1235
        %v1237 = vpop.f32.mrf.mxu0
        %v1238 = vadd.f32 0.0, %v1237
        %v1239 = vpop.f32.mrf.mxu0
        %v1240 = vadd.f32 0.0, %v1239
        %v1241 = vpop.f32.mrf.mxu0
        %v1242 = vadd.f32 0.0, %v1241
        %1243 = vmatprep.mubr.bf16.mxu0 0
        %1244 = vmatmul.mubr.bf16.gmra.mxu0 %v1080
        %v1245 = vpop.f32.mrf.mxu0
        %v1246 = vadd.f32 0.0, %v1245
        %v1247 = vpop.f32.mrf.mxu0
        %v1248 = vadd.f32 0.0, %v1247
        %v1249 = vpop.f32.mrf.mxu0
        %v1250 = vadd.f32 0.0, %v1249
        %v1251 = vpop.f32.mrf.mxu0
        %v1252 = vadd.f32 0.0, %v1251
        %1253 = vmatprep.mubr.bf16.mxu0 0
        %1254 = vmatmul.mubr.bf16.gmra.mxu0 %v1083
        %v1255 = vpop.f32.mrf.mxu0
        %v1256 = vadd.f32 0.0, %v1255
        %v1257 = vpop.f32.mrf.mxu0
        %v1258 = vadd.f32 0.0, %v1257
        %v1259 = vpop.f32.mrf.mxu0
        %v1260 = vadd.f32 0.0, %v1259
        %v1261 = vpop.f32.mrf.mxu0
        %v1262 = vadd.f32 0.0, %v1261
        %1263 = vmatprep.mubr.bf16.mxu0 0
        %1264 = vmatmul.mubr.bf16.gmra.mxu0 %v1086
        %v1265 = vpop.f32.mrf.mxu0
        %v1266 = vadd.f32 0.0, %v1265
        %v1267 = vpop.f32.mrf.mxu0
        %v1268 = vadd.f32 0.0, %v1267
        %v1269 = vpop.f32.mrf.mxu0
        %v1270 = vadd.f32 0.0, %v1269
        %v1271 = vpop.f32.mrf.mxu0
        %v1272 = vadd.f32 0.0, %v1271
        %1273 = vmatprep.mubr.bf16.mxu0 0
        %1274 = vmatmul.mubr.bf16.gmra.mxu0 %v1089
        %v1275 = vpop.f32.mrf.mxu0
        %v1276 = vadd.f32 0.0, %v1275
        %v1277 = vpop.f32.mrf.mxu0
        %v1278 = vadd.f32 0.0, %v1277
        %v1279 = vpop.f32.mrf.mxu0
        %v1280 = vadd.f32 0.0, %v1279
        %v1281 = vpop.f32.mrf.mxu0
        %v1282 = vadd.f32 0.0, %v1281
        %1283 = vdwg.mxu0
        %v1284 = vmax.f32 %v1126, %v1128
        %1285 = vmax.xlane.f32.xlu0 %v1284
        %v1286 = vpop.xlane.xlu0 %1285
        %v1287 = vmax.f32 %v1130, %v1132
        %1288 = vmax.xlane.f32.xlu0 %v1287
        %v1289 = vpop.xlane.xlu0 %1288
        %v1290 = vmax.f32 %v1136, %v1138
        %1291 = vmax.xlane.f32.xlu0 %v1290
        %v1292 = vpop.xlane.xlu0 %1291
        %v1293 = vmax.f32 %v1140, %v1142
        %1294 = vmax.xlane.f32.xlu0 %v1293
        %v1295 = vpop.xlane.xlu0 %1294
        %v1296 = vmax.f32 %v1146, %v1148
        %1297 = vmax.xlane.f32.xlu0 %v1296
        %v1298 = vpop.xlane.xlu0 %1297
        %v1299 = vmax.f32 %v1150, %v1152
        %1300 = vmax.xlane.f32.xlu0 %v1299
        %v1301 = vpop.xlane.xlu0 %1300
        %v1302 = vmax.f32 %v1156, %v1158
        %1303 = vmax.xlane.f32.xlu0 %v1302
        %v1304 = vpop.xlane.xlu0 %1303
        %v1305 = vmax.f32 %v1160, %v1162
        %1306 = vmax.xlane.f32.xlu0 %v1305
        %v1307 = vpop.xlane.xlu0 %1306
        %v1308 = vmax.f32 %v1166, %v1168
        %1309 = vmax.xlane.f32.xlu0 %v1308
        %v1310 = vpop.xlane.xlu0 %1309
        %v1311 = vmax.f32 %v1170, %v1172
        %1312 = vmax.xlane.f32.xlu0 %v1311
        %v1313 = vpop.xlane.xlu0 %1312
        %v1314 = vmax.f32 %v1176, %v1178
        %1315 = vmax.xlane.f32.xlu0 %v1314
        %v1316 = vpop.xlane.xlu0 %1315
        %v1317 = vmax.f32 %v1180, %v1182
        %1318 = vmax.xlane.f32.xlu0 %v1317
        %v1319 = vpop.xlane.xlu0 %1318
        %v1320 = vmax.f32 %v1186, %v1188
        %1321 = vmax.xlane.f32.xlu0 %v1320
        %v1322 = vpop.xlane.xlu0 %1321
        %v1323 = vmax.f32 %v1190, %v1192
        %1324 = vmax.xlane.f32.xlu0 %v1323
        %v1325 = vpop.xlane.xlu0 %1324
        %v1326 = vmax.f32 %v1196, %v1198
        %1327 = vmax.xlane.f32.xlu0 %v1326
        %v1328 = vpop.xlane.xlu0 %1327
        %v1329 = vmax.f32 %v1200, %v1202
        %1330 = vmax.xlane.f32.xlu0 %v1329
        %v1331 = vpop.xlane.xlu0 %1330
        %v1332 = vmax.f32 %v1206, %v1208
        %1333 = vmax.xlane.f32.xlu0 %v1332
        %v1334 = vpop.xlane.xlu0 %1333
        %v1335 = vmax.f32 %v1210, %v1212
        %1336 = vmax.xlane.f32.xlu0 %v1335
        %v1337 = vpop.xlane.xlu0 %1336
        %v1338 = vmax.f32 %v1216, %v1218
        %1339 = vmax.xlane.f32.xlu0 %v1338
        %v1340 = vpop.xlane.xlu0 %1339
        %v1341 = vmax.f32 %v1220, %v1222
        %1342 = vmax.xlane.f32.xlu0 %v1341
        %v1343 = vpop.xlane.xlu0 %1342
        %v1344 = vmax.f32 %v1226, %v1228
        %1345 = vmax.xlane.f32.xlu0 %v1344
        %v1346 = vpop.xlane.xlu0 %1345
        %v1347 = vmax.f32 %v1230, %v1232
        %1348 = vmax.xlane.f32.xlu0 %v1347
        %v1349 = vpop.xlane.xlu0 %1348
        %v1350 = vmax.f32 %v1236, %v1238
        %1351 = vmax.xlane.f32.xlu0 %v1350
        %v1352 = vpop.xlane.xlu0 %1351
        %v1353 = vmax.f32 %v1240, %v1242
        %1354 = vmax.xlane.f32.xlu0 %v1353
        %v1355 = vpop.xlane.xlu0 %1354
        %v1356 = vmax.f32 %v1246, %v1248
        %1357 = vmax.xlane.f32.xlu0 %v1356
        %v1358 = vpop.xlane.xlu0 %1357
        %v1359 = vmax.f32 %v1250, %v1252
        %1360 = vmax.xlane.f32.xlu0 %v1359
        %v1361 = vpop.xlane.xlu0 %1360
        %v1362 = vmax.f32 %v1256, %v1258
        %1363 = vmax.xlane.f32.xlu0 %v1362
        %v1364 = vpop.xlane.xlu0 %1363
        %v1365 = vmax.f32 %v1260, %v1262
        %1366 = vmax.xlane.f32.xlu0 %v1365
        %v1367 = vpop.xlane.xlu0 %1366
        %v1368 = vmax.f32 %v1266, %v1268
        %1369 = vmax.xlane.f32.xlu0 %v1368
        %v1370 = vpop.xlane.xlu0 %1369
        %v1371 = vmax.f32 %v1270, %v1272
        %1372 = vmax.xlane.f32.xlu0 %v1371
        %v1373 = vpop.xlane.xlu0 %1372
        %v1374 = vmax.f32 %v1276, %v1278
        %1375 = vmax.xlane.f32.xlu0 %v1374
        %v1376 = vpop.xlane.xlu0 %1375
        %v1377 = vmax.f32 %v1280, %v1282
        %1378 = vmax.xlane.f32.xlu0 %v1377
        %v1379 = vpop.xlane.xlu0 %1378
        %v1380 = vsub.f32 %v1126, %v1286
        %v1381 = vsub.f32 %v1128, %v1286
        %v1382 = vsub.f32 %v1130, %v1289
        %v1383 = vsub.f32 %v1132, %v1289
        %v1384 = vsub.f32 %v1136, %v1292
        %v1385 = vsub.f32 %v1138, %v1292
        %v1386 = vsub.f32 %v1140, %v1295
        %v1387 = vsub.f32 %v1142, %v1295
        %v1388 = vsub.f32 %v1146, %v1298
        %v1389 = vsub.f32 %v1148, %v1298
        %v1390 = vsub.f32 %v1150, %v1301
        %v1391 = vsub.f32 %v1152, %v1301
        %v1392 = vsub.f32 %v1156, %v1304
        %v1393 = vsub.f32 %v1158, %v1304
        %v1394 = vsub.f32 %v1160, %v1307
        %v1395 = vsub.f32 %v1162, %v1307
        %v1396 = vsub.f32 %v1166, %v1310
        %v1397 = vsub.f32 %v1168, %v1310
        %v1398 = vsub.f32 %v1170, %v1313
        %v1399 = vsub.f32 %v1172, %v1313
        %v1400 = vsub.f32 %v1176, %v1316
        %v1401 = vsub.f32 %v1178, %v1316
        %v1402 = vsub.f32 %v1180, %v1319
        %v1403 = vsub.f32 %v1182, %v1319
        %v1404 = vsub.f32 %v1186, %v1322
        %v1405 = vsub.f32 %v1188, %v1322
        %v1406 = vsub.f32 %v1190, %v1325
        %v1407 = vsub.f32 %v1192, %v1325
        %v1408 = vsub.f32 %v1196, %v1328
        %v1409 = vsub.f32 %v1198, %v1328
        %v1410 = vsub.f32 %v1200, %v1331
        %v1411 = vsub.f32 %v1202, %v1331
        %v1412 = vsub.f32 %v1206, %v1334
        %v1413 = vsub.f32 %v1208, %v1334
        %v1414 = vsub.f32 %v1210, %v1337
        %v1415 = vsub.f32 %v1212, %v1337
        %v1416 = vsub.f32 %v1216, %v1340
        %v1417 = vsub.f32 %v1218, %v1340
        %v1418 = vsub.f32 %v1220, %v1343
        %v1419 = vsub.f32 %v1222, %v1343
        %v1420 = vsub.f32 %v1226, %v1346
        %v1421 = vsub.f32 %v1228, %v1346
        %v1422 = vsub.f32 %v1230, %v1349
        %v1423 = vsub.f32 %v1232, %v1349
        %v1424 = vsub.f32 %v1236, %v1352
        %v1425 = vsub.f32 %v1238, %v1352
        %v1426 = vsub.f32 %v1240, %v1355
        %v1427 = vsub.f32 %v1242, %v1355
        %v1428 = vsub.f32 %v1246, %v1358
        %v1429 = vsub.f32 %v1248, %v1358
        %v1430 = vsub.f32 %v1250, %v1361
        %v1431 = vsub.f32 %v1252, %v1361
        %v1432 = vsub.f32 %v1256, %v1364
        %v1433 = vsub.f32 %v1258, %v1364
        %v1434 = vsub.f32 %v1260, %v1367
        %v1435 = vsub.f32 %v1262, %v1367
        %v1436 = vsub.f32 %v1266, %v1370
        %v1437 = vsub.f32 %v1268, %v1370
        %v1438 = vsub.f32 %v1270, %v1373
        %v1439 = vsub.f32 %v1272, %v1373
        %v1440 = vsub.f32 %v1276, %v1376
        %v1441 = vsub.f32 %v1278, %v1376
        %v1442 = vsub.f32 %v1280, %v1379
        %v1443 = vsub.f32 %v1282, %v1379
        %v1444 = vmul.f32 %v1380, 1.442695
        %v1445 = vpow.pop %v1444
        %v1446 = vmul.f32 %v1381, 1.442695
        %v1447 = vpow.pop %v1446
        %v1448 = vmul.f32 %v1382, 1.442695
        %v1449 = vpow.pop %v1448
        %v1450 = vmul.f32 %v1383, 1.442695
        %v1451 = vpow.pop %v1450
        %v1452 = vmul.f32 %v1384, 1.442695
        %v1453 = vpow.pop %v1452
        %v1454 = vmul.f32 %v1385, 1.442695
        %v1455 = vpow.pop %v1454
        %v1456 = vmul.f32 %v1386, 1.442695
        %v1457 = vpow.pop %v1456
        %v1458 = vmul.f32 %v1387, 1.442695
        %v1459 = vpow.pop %v1458
        %v1460 = vmul.f32 %v1388, 1.442695
        %v1461 = vpow.pop %v1460
        %v1462 = vmul.f32 %v1389, 1.442695
        %v1463 = vpow.pop %v1462
        %v1464 = vmul.f32 %v1390, 1.442695
        %v1465 = vpow.pop %v1464
        %v1466 = vmul.f32 %v1391, 1.442695
        %v1467 = vpow.pop %v1466
        %v1468 = vmul.f32 %v1392, 1.442695
        %v1469 = vpow.pop %v1468
        %v1470 = vmul.f32 %v1393, 1.442695
        %v1471 = vpow.pop %v1470
        %v1472 = vmul.f32 %v1394, 1.442695
        %v1473 = vpow.pop %v1472
        %v1474 = vmul.f32 %v1395, 1.442695
        %v1475 = vpow.pop %v1474
        %v1476 = vmul.f32 %v1396, 1.442695
        %v1477 = vpow.pop %v1476
        %v1478 = vmul.f32 %v1397, 1.442695
        %v1479 = vpow.pop %v1478
        %v1480 = vmul.f32 %v1398, 1.442695
        %v1481 = vpow.pop %v1480
        %v1482 = vmul.f32 %v1399, 1.442695
        %v1483 = vpow.pop %v1482
        %v1484 = vmul.f32 %v1400, 1.442695
        %v1485 = vpow.pop %v1484
        %v1486 = vmul.f32 %v1401, 1.442695
        %v1487 = vpow.pop %v1486
        %v1488 = vmul.f32 %v1402, 1.442695
        %v1489 = vpow.pop %v1488
        %v1490 = vmul.f32 %v1403, 1.442695
        %v1491 = vpow.pop %v1490
        %v1492 = vmul.f32 %v1404, 1.442695
        %v1493 = vpow.pop %v1492
        %v1494 = vmul.f32 %v1405, 1.442695
        %v1495 = vpow.pop %v1494
        %v1496 = vmul.f32 %v1406, 1.442695
        %v1497 = vpow.pop %v1496
        %v1498 = vmul.f32 %v1407, 1.442695
        %v1499 = vpow.pop %v1498
        %v1500 = vmul.f32 %v1408, 1.442695
        %v1501 = vpow.pop %v1500
        %v1502 = vmul.f32 %v1409, 1.442695
        %v1503 = vpow.pop %v1502
        %v1504 = vmul.f32 %v1410, 1.442695
        %v1505 = vpow.pop %v1504
        %v1506 = vmul.f32 %v1411, 1.442695
        %v1507 = vpow.pop %v1506
        %v1508 = vmul.f32 %v1412, 1.442695
        %v1509 = vpow.pop %v1508
        %v1510 = vmul.f32 %v1413, 1.442695
        %v1511 = vpow.pop %v1510
        %v1512 = vmul.f32 %v1414, 1.442695
        %v1513 = vpow.pop %v1512
        %v1514 = vmul.f32 %v1415, 1.442695
        %v1515 = vpow.pop %v1514
        %v1516 = vmul.f32 %v1416, 1.442695
        %v1517 = vpow.pop %v1516
        %v1518 = vmul.f32 %v1417, 1.442695
        %v1519 = vpow.pop %v1518
        %v1520 = vmul.f32 %v1418, 1.442695
        %v1521 = vpow.pop %v1520
        %v1522 = vmul.f32 %v1419, 1.442695
        %v1523 = vpow.pop %v1522
        %v1524 = vmul.f32 %v1420, 1.442695
        %v1525 = vpow.pop %v1524
        %v1526 = vmul.f32 %v1421, 1.442695
        %v1527 = vpow.pop %v1526
        %v1528 = vmul.f32 %v1422, 1.442695
        %v1529 = vpow.pop %v1528
        %v1530 = vmul.f32 %v1423, 1.442695
        %v1531 = vpow.pop %v1530
        %v1532 = vmul.f32 %v1424, 1.442695
        %v1533 = vpow.pop %v1532
        %v1534 = vmul.f32 %v1425, 1.442695
        %v1535 = vpow.pop %v1534
        %v1536 = vmul.f32 %v1426, 1.442695
        %v1537 = vpow.pop %v1536
        %v1538 = vmul.f32 %v1427, 1.442695
        %v1539 = vpow.pop %v1538
        %v1540 = vmul.f32 %v1428, 1.442695
        %v1541 = vpow.pop %v1540
        %v1542 = vmul.f32 %v1429, 1.442695
        %v1543 = vpow.pop %v1542
        %v1544 = vmul.f32 %v1430, 1.442695
        %v1545 = vpow.pop %v1544
        %v1546 = vmul.f32 %v1431, 1.442695
        %v1547 = vpow.pop %v1546
        %v1548 = vmul.f32 %v1432, 1.442695
        %v1549 = vpow.pop %v1548
        %v1550 = vmul.f32 %v1433, 1.442695
        %v1551 = vpow.pop %v1550
        %v1552 = vmul.f32 %v1434, 1.442695
        %v1553 = vpow.pop %v1552
        %v1554 = vmul.f32 %v1435, 1.442695
        %v1555 = vpow.pop %v1554
        %v1556 = vmul.f32 %v1436, 1.442695
        %v1557 = vpow.pop %v1556
        %v1558 = vmul.f32 %v1437, 1.442695
        %v1559 = vpow.pop %v1558
        %v1560 = vmul.f32 %v1438, 1.442695
        %v1561 = vpow.pop %v1560
        %v1562 = vmul.f32 %v1439, 1.442695
        %v1563 = vpow.pop %v1562
        %v1564 = vmul.f32 %v1440, 1.442695
        %v1565 = vpow.pop %v1564
        %v1566 = vmul.f32 %v1441, 1.442695
        %v1567 = vpow.pop %v1566
        %v1568 = vmul.f32 %v1442, 1.442695
        %v1569 = vpow.pop %v1568
        %v1570 = vmul.f32 %v1443, 1.442695
        %v1571 = vpow.pop %v1570
        %v1572 = vadd.f32 %v1445, %v1447
        %1573 = vadd.xlane.f32.xlu0 %v1572
        %v1574 = vpop.xlane.xlu0 %1573
        %v1575 = vadd.f32 %v1449, %v1451
        %1576 = vadd.xlane.f32.xlu0 %v1575
        %v1577 = vpop.xlane.xlu0 %1576
        %v1578 = vadd.f32 %v1453, %v1455
        %1579 = vadd.xlane.f32.xlu0 %v1578
        %v1580 = vpop.xlane.xlu0 %1579
        %v1581 = vadd.f32 %v1457, %v1459
        %1582 = vadd.xlane.f32.xlu0 %v1581
        %v1583 = vpop.xlane.xlu0 %1582
        %v1584 = vadd.f32 %v1461, %v1463
        %1585 = vadd.xlane.f32.xlu0 %v1584
        %v1586 = vpop.xlane.xlu0 %1585
        %v1587 = vadd.f32 %v1465, %v1467
        %1588 = vadd.xlane.f32.xlu0 %v1587
        %v1589 = vpop.xlane.xlu0 %1588
        %v1590 = vadd.f32 %v1469, %v1471
        %1591 = vadd.xlane.f32.xlu0 %v1590
        %v1592 = vpop.xlane.xlu0 %1591
        %v1593 = vadd.f32 %v1473, %v1475
        %1594 = vadd.xlane.f32.xlu0 %v1593
        %v1595 = vpop.xlane.xlu0 %1594
        %v1596 = vadd.f32 %v1477, %v1479
        %1597 = vadd.xlane.f32.xlu0 %v1596
        %v1598 = vpop.xlane.xlu0 %1597
        %v1599 = vadd.f32 %v1481, %v1483
        %1600 = vadd.xlane.f32.xlu0 %v1599
        %v1601 = vpop.xlane.xlu0 %1600
        %v1602 = vadd.f32 %v1485, %v1487
        %1603 = vadd.xlane.f32.xlu0 %v1602
        %v1604 = vpop.xlane.xlu0 %1603
        %v1605 = vadd.f32 %v1489, %v1491
        %1606 = vadd.xlane.f32.xlu0 %v1605
        %v1607 = vpop.xlane.xlu0 %1606
        %v1608 = vadd.f32 %v1493, %v1495
        %1609 = vadd.xlane.f32.xlu0 %v1608
        %v1610 = vpop.xlane.xlu0 %1609
        %v1611 = vadd.f32 %v1497, %v1499
        %1612 = vadd.xlane.f32.xlu0 %v1611
        %v1613 = vpop.xlane.xlu0 %1612
        %v1614 = vadd.f32 %v1501, %v1503
        %1615 = vadd.xlane.f32.xlu0 %v1614
        %v1616 = vpop.xlane.xlu0 %1615
        %v1617 = vadd.f32 %v1505, %v1507
        %1618 = vadd.xlane.f32.xlu0 %v1617
        %v1619 = vpop.xlane.xlu0 %1618
        %v1620 = vadd.f32 %v1509, %v1511
        %1621 = vadd.xlane.f32.xlu0 %v1620
        %v1622 = vpop.xlane.xlu0 %1621
        %v1623 = vadd.f32 %v1513, %v1515
        %1624 = vadd.xlane.f32.xlu0 %v1623
        %v1625 = vpop.xlane.xlu0 %1624
        %v1626 = vadd.f32 %v1517, %v1519
        %1627 = vadd.xlane.f32.xlu0 %v1626
        %v1628 = vpop.xlane.xlu0 %1627
        %v1629 = vadd.f32 %v1521, %v1523
        %1630 = vadd.xlane.f32.xlu0 %v1629
        %v1631 = vpop.xlane.xlu0 %1630
        %v1632 = vadd.f32 %v1525, %v1527
        %1633 = vadd.xlane.f32.xlu0 %v1632
        %v1634 = vpop.xlane.xlu0 %1633
        %v1635 = vadd.f32 %v1529, %v1531
        %1636 = vadd.xlane.f32.xlu0 %v1635
        %v1637 = vpop.xlane.xlu0 %1636
        %v1638 = vadd.f32 %v1533, %v1535
        %1639 = vadd.xlane.f32.xlu0 %v1638
        %v1640 = vpop.xlane.xlu0 %1639
        %v1641 = vadd.f32 %v1537, %v1539
        %1642 = vadd.xlane.f32.xlu0 %v1641
        %v1643 = vpop.xlane.xlu0 %1642
        %v1644 = vadd.f32 %v1541, %v1543
        %1645 = vadd.xlane.f32.xlu0 %v1644
        %v1646 = vpop.xlane.xlu0 %1645
        %v1647 = vadd.f32 %v1545, %v1547
        %1648 = vadd.xlane.f32.xlu0 %v1647
        %v1649 = vpop.xlane.xlu0 %1648
        %v1650 = vadd.f32 %v1549, %v1551
        %1651 = vadd.xlane.f32.xlu0 %v1650
        %v1652 = vpop.xlane.xlu0 %1651
        %v1653 = vadd.f32 %v1553, %v1555
        %1654 = vadd.xlane.f32.xlu0 %v1653
        %v1655 = vpop.xlane.xlu0 %1654
        %v1656 = vadd.f32 %v1557, %v1559
        %1657 = vadd.xlane.f32.xlu0 %v1656
        %v1658 = vpop.xlane.xlu0 %1657
        %v1659 = vadd.f32 %v1561, %v1563
        %1660 = vadd.xlane.f32.xlu0 %v1659
        %v1661 = vpop.xlane.xlu0 %1660
        %v1662 = vadd.f32 %v1565, %v1567
        %1663 = vadd.xlane.f32.xlu0 %v1662
        %v1664 = vpop.xlane.xlu0 %1663
        %v1665 = vadd.f32 %v1569, %v1571
        %1666 = vadd.xlane.f32.xlu0 %v1665
        %v1667 = vpop.xlane.xlu0 %1666
        %v1668 = vrcp.pop %v1574
        %v1669 = vrcp.pop %v1577
        %v1670 = vrcp.pop %v1580
        %v1671 = vrcp.pop %v1583
        %v1672 = vrcp.pop %v1586
        %v1673 = vrcp.pop %v1589
        %v1674 = vrcp.pop %v1592
        %v1675 = vrcp.pop %v1595
        %v1676 = vrcp.pop %v1598
        %v1677 = vrcp.pop %v1601
        %v1678 = vrcp.pop %v1604
        %v1679 = vrcp.pop %v1607
        %v1680 = vrcp.pop %v1610
        %v1681 = vrcp.pop %v1613
        %v1682 = vrcp.pop %v1616
        %v1683 = vrcp.pop %v1619
        %v1684 = vrcp.pop %v1622
        %v1685 = vrcp.pop %v1625
        %v1686 = vrcp.pop %v1628
        %v1687 = vrcp.pop %v1631
        %v1688 = vrcp.pop %v1634
        %v1689 = vrcp.pop %v1637
        %v1690 = vrcp.pop %v1640
        %v1691 = vrcp.pop %v1643
        %v1692 = vrcp.pop %v1646
        %v1693 = vrcp.pop %v1649
        %v1694 = vrcp.pop %v1652
        %v1695 = vrcp.pop %v1655
        %v1696 = vrcp.pop %v1658
        %v1697 = vrcp.pop %v1661
        %v1698 = vrcp.pop %v1664
        %v1699 = vrcp.pop %v1667
        %v1700 = vmul.f32 %v1445, %v1668
        %v1701 = vmul.f32 %v1447, %v1668
        %v1702 = vmul.f32 %v1449, %v1669
        %v1703 = vmul.f32 %v1451, %v1669
        %v1704 = vmul.f32 %v1453, %v1670
        %v1705 = vmul.f32 %v1455, %v1670
        %v1706 = vmul.f32 %v1457, %v1671
        %v1707 = vmul.f32 %v1459, %v1671
        %v1708 = vmul.f32 %v1461, %v1672
        %v1709 = vmul.f32 %v1463, %v1672
        %v1710 = vmul.f32 %v1465, %v1673
        %v1711 = vmul.f32 %v1467, %v1673
        %v1712 = vmul.f32 %v1469, %v1674
        %v1713 = vmul.f32 %v1471, %v1674
        %v1714 = vmul.f32 %v1473, %v1675
        %v1715 = vmul.f32 %v1475, %v1675
        %v1716 = vmul.f32 %v1477, %v1676
        %v1717 = vmul.f32 %v1479, %v1676
        %v1718 = vmul.f32 %v1481, %v1677
        %v1719 = vmul.f32 %v1483, %v1677
        %v1720 = vmul.f32 %v1485, %v1678
        %v1721 = vmul.f32 %v1487, %v1678
        %v1722 = vmul.f32 %v1489, %v1679
        %v1723 = vmul.f32 %v1491, %v1679
        %v1724 = vmul.f32 %v1493, %v1680
        %v1725 = vmul.f32 %v1495, %v1680
        %v1726 = vmul.f32 %v1497, %v1681
        %v1727 = vmul.f32 %v1499, %v1681
        %v1728 = vmul.f32 %v1501, %v1682
        %v1729 = vmul.f32 %v1503, %v1682
        %v1730 = vmul.f32 %v1505, %v1683
        %v1731 = vmul.f32 %v1507, %v1683
        %v1732 = vmul.f32 %v1509, %v1684
        %v1733 = vmul.f32 %v1511, %v1684
        %v1734 = vmul.f32 %v1513, %v1685
        %v1735 = vmul.f32 %v1515, %v1685
        %v1736 = vmul.f32 %v1517, %v1686
        %v1737 = vmul.f32 %v1519, %v1686
        %v1738 = vmul.f32 %v1521, %v1687
        %v1739 = vmul.f32 %v1523, %v1687
        %v1740 = vmul.f32 %v1525, %v1688
        %v1741 = vmul.f32 %v1527, %v1688
        %v1742 = vmul.f32 %v1529, %v1689
        %v1743 = vmul.f32 %v1531, %v1689
        %v1744 = vmul.f32 %v1533, %v1690
        %v1745 = vmul.f32 %v1535, %v1690
        %v1746 = vmul.f32 %v1537, %v1691
        %v1747 = vmul.f32 %v1539, %v1691
        %v1748 = vmul.f32 %v1541, %v1692
        %v1749 = vmul.f32 %v1543, %v1692
        %v1750 = vmul.f32 %v1545, %v1693
        %v1751 = vmul.f32 %v1547, %v1693
        %v1752 = vmul.f32 %v1549, %v1694
        %v1753 = vmul.f32 %v1551, %v1694
        %v1754 = vmul.f32 %v1553, %v1695
        %v1755 = vmul.f32 %v1555, %v1695
        %v1756 = vmul.f32 %v1557, %v1696
        %v1757 = vmul.f32 %v1559, %v1696
        %v1758 = vmul.f32 %v1561, %v1697
        %v1759 = vmul.f32 %v1563, %v1697
        %v1760 = vmul.f32 %v1565, %v1698
        %v1761 = vmul.f32 %v1567, %v1698
        %v1762 = vmul.f32 %v1569, %v1699
        %v1763 = vmul.f32 %v1571, %v1699
        %v1764 = vpack.c.bf16 %v1001, %v999
        %v1765 = vpack.c.bf16 %v1002, %v1000
        %v1766 = vpack.c.bf16 %v1702, %v1700
        %v1767 = vpack.c.bf16 %v1703, %v1701
        %v1768 = vpack.c.bf16 %v1706, %v1704
        %v1769 = vpack.c.bf16 %v1707, %v1705
        %v1770 = vpack.c.bf16 %v1710, %v1708
        %v1771 = vpack.c.bf16 %v1711, %v1709
        %v1772 = vpack.c.bf16 %v1714, %v1712
        %v1773 = vpack.c.bf16 %v1715, %v1713
        %v1774 = vpack.c.bf16 %v1718, %v1716
        %v1775 = vpack.c.bf16 %v1719, %v1717
        %v1776 = vpack.c.bf16 %v1722, %v1720
        %v1777 = vpack.c.bf16 %v1723, %v1721
        %v1778 = vpack.c.bf16 %v1726, %v1724
        %v1779 = vpack.c.bf16 %v1727, %v1725
        %v1780 = vpack.c.bf16 %v1730, %v1728
        %v1781 = vpack.c.bf16 %v1731, %v1729
        %v1782 = vpack.c.bf16 %v1734, %v1732
        %v1783 = vpack.c.bf16 %v1735, %v1733
        %v1784 = vpack.c.bf16 %v1738, %v1736
        %v1785 = vpack.c.bf16 %v1739, %v1737
        %v1786 = vpack.c.bf16 %v1742, %v1740
        %v1787 = vpack.c.bf16 %v1743, %v1741
        %v1788 = vpack.c.bf16 %v1746, %v1744
        %v1789 = vpack.c.bf16 %v1747, %v1745
        %v1790 = vpack.c.bf16 %v1750, %v1748
        %v1791 = vpack.c.bf16 %v1751, %v1749
        %v1792 = vpack.c.bf16 %v1754, %v1752
        %v1793 = vpack.c.bf16 %v1755, %v1753
        %v1794 = vpack.c.bf16 %v1758, %v1756
        %v1795 = vpack.c.bf16 %v1759, %v1757
        %v1796 = vpack.c.bf16 %v1762, %v1760
        %v1797 = vpack.c.bf16 %v1763, %v1761
        %1798 = vmatprep.subr.bf16.mxu0 %v1781
        %1799 = vmatpush1.bf16.xpose.msra.mxu0 %v1780
        %1800 = vmatprep.subr.bf16.mxu0 %v1779
        %1801 = vmatpush1.bf16.xpose.msra.mxu0 %v1778
        %1802 = vmatprep.subr.bf16.mxu0 %v1777
        %1803 = vmatpush1.bf16.xpose.msra.mxu0 %v1776
        %1804 = vmatprep.subr.bf16.mxu0 %v1775
        %1805 = vmatpush1.bf16.xpose.msra.mxu0 %v1774
        %1806 = vmatprep.subr.bf16.mxu0 %v1773
        %1807 = vmatpush1.bf16.xpose.msra.mxu0 %v1772
        %1808 = vmatprep.subr.bf16.mxu0 %v1771
        %1809 = vmatpush1.bf16.xpose.msra.mxu0 %v1770
        %1810 = vmatprep.subr.bf16.mxu0 %v1769
        %1811 = vmatpush1.bf16.xpose.msra.mxu0 %v1768
        %1812 = vmatprep.subr.bf16.mxu0 %v1767
        %1813 = vmatpush1.bf16.xpose.msra.mxu0 %v1766
        %1814 = vmatprep.subr.bf16.mxu0 %v1797
        %1815 = vmatpush2.bf16.xpose.msra.mxu0 %v1796
        %1816 = vmatprep.subr.bf16.mxu0 %v1795
        %1817 = vmatpush2.bf16.xpose.msra.mxu0 %v1794
        %1818 = vmatprep.subr.bf16.mxu0 %v1793
        %1819 = vmatpush2.bf16.xpose.msra.mxu0 %v1792
        %1820 = vmatprep.subr.bf16.mxu0 %v1791
        %1821 = vmatpush2.bf16.xpose.msra.mxu0 %v1790
        %1822 = vmatprep.subr.bf16.mxu0 %v1789
        %1823 = vmatpush2.bf16.xpose.msra.mxu0 %v1788
        %1824 = vmatprep.subr.bf16.mxu0 %v1787
        %1825 = vmatpush2.bf16.xpose.msra.mxu0 %v1786
        %1826 = vmatprep.subr.bf16.mxu0 %v1785
        %1827 = vmatpush2.bf16.xpose.msra.mxu0 %v1784
        %1828 = vmatprep.subr.bf16.mxu0 %v1783
        %1829 = vmatpush2.bf16.xpose.msra.mxu0 %v1782
        %1830 = vmatprep.mubr.bf16.mxu0 %v1765
        %1831 = vmatmul.mubr.bf16.gmra.mxu0 %v1764
        %v1832 = vpop.f32.mrf.mxu0
        %v1833 = vadd.f32 0.0, %v1832
        %v1834 = vpop.f32.mrf.mxu0
        %v1835 = vadd.f32 0.0, %v1834
        %v1836 = vpop.f32.mrf.mxu0
        %v1837 = vadd.f32 0.0, %v1836
        %v1838 = vpop.f32.mrf.mxu0
        %v1839 = vadd.f32 0.0, %v1838
        %1840 = vdwg.mxu0
        %1841 = vst [vmem:[%s134 + $0x20] sm:$0xff] %v1833
        %1842 = vst [vmem:[%s134 + $0x28] sm:$0xff] %v1835
        %1843 = vst [vmem:[%s134 + $0x30] sm:$0xff] %v1837
        %1844 = vst [vmem:[%s134 + $0x38] sm:$0xff] %v1839
        %v1845 = vld [vmem:[%s116 + $0xc0] sm:$0xff]
        %v1846 = vld [vmem:[%s116 + $0xc8] sm:$0xff]
        %v1847 = vld [vmem:[%s116 + $0xd0] sm:$0xff]
        %v1848 = vld [vmem:[%s116 + $0xd8] sm:$0xff]
        %v1849 = vld [vmem:[%s116 + $0xe0] sm:$0xff]
        %v1850 = vld [vmem:[%s116 + $0xe8] sm:$0xff]
        %v1851 = vld [vmem:[%s116 + $0xf0] sm:$0xff]
        %v1852 = vld [vmem:[%s116 + $0xf8] sm:$0xff]
        %v1853 = vld [vmem:[%s116 + $0x100] sm:$0xff]
        %v1854 = vld [vmem:[%s116 + $0x108] sm:$0xff]
        %v1855 = vld [vmem:[%s116 + $0x110] sm:$0xff]
        %v1856 = vld [vmem:[%s116 + $0x118] sm:$0xff]
        %v1857 = vmul.f32 %v1845, 0.25
        %v1858 = vmul.f32 %v1846, 0.25
        %v1859 = vmul.f32 %v1847, 0.25
        %v1860 = vmul.f32 %v1848, 0.25
        %v1861 = vpack.c.bf16 %v1859, %v1857
        %v1862 = vpack.c.bf16 %v1860, %v1858
        %v1863 = vpack.c.bf16 %v1851, %v1849
        %v1864 = vpack.c.bf16 %v1852, %v1850
        %1865 = vxpose.xlu0.c.b16.start [1/8] %v1861, 128
        %1866 = vxpose.xlu0.c.b16.cont [2/8] 0, 128
        %1867 = vxpose.xlu0.c.b16.cont [3/8] 0, 128
        %1868 = vxpose.xlu0.c.b16.cont [4/8] 0, 128
        %1869 = vxpose.xlu0.c.b16.cont [5/8] 0, 128
        %1870 = vxpose.xlu0.c.b16.cont [6/8] 0, 128
        %1871 = vxpose.xlu0.c.b16.cont [7/8] 0, 128
        %1872 = vxpose.xlu0.c.b16.end [8/8] 0, 128
        %v1873 = vpop.trf.xlu0
        %v1874 = vpop.trf.xlu0
        %v1875 = vpop.trf.xlu0
        %v1876 = vpop.trf.xlu0
        %v1877 = vpop.trf.xlu0
        %v1878 = vpop.trf.xlu0
        %v1879 = vpop.trf.xlu0
        %v1880 = vpop.trf.xlu0
        %1881 = vxpose.xlu0.c.b16.start [1/8] %v1862, 128
        %1882 = vxpose.xlu0.c.b16.cont [2/8] 0, 128
        %1883 = vxpose.xlu0.c.b16.cont [3/8] 0, 128
        %1884 = vxpose.xlu0.c.b16.cont [4/8] 0, 128
        %1885 = vxpose.xlu0.c.b16.cont [5/8] 0, 128
        %1886 = vxpose.xlu0.c.b16.cont [6/8] 0, 128
        %1887 = vxpose.xlu0.c.b16.cont [7/8] 0, 128
        %1888 = vxpose.xlu0.c.b16.end [8/8] 0, 128
        %v1889 = vpop.trf.xlu0
        %v1890 = vpop.trf.xlu0
        %v1891 = vpop.trf.xlu0
        %v1892 = vpop.trf.xlu0
        %v1893 = vpop.trf.xlu0
        %v1894 = vpop.trf.xlu0
        %v1895 = vpop.trf.xlu0
        %v1896 = vpop.trf.xlu0
        %v1898 = vsel %vm188, %v1873, 0
        %v1901 = vsel %vm188, %v1874, 0
        %v1904 = vsel %vm188, %v1875, 0
        %v1907 = vsel %vm188, %v1876, 0
        %v1910 = vsel %vm188, %v1877, 0
        %v1913 = vsel %vm188, %v1878, 0
        %v1916 = vsel %vm188, %v1879, 0
        %v1919 = vsel %vm188, %v1880, 0
        %v1922 = vsel %vm188, %v1889, 0
        %v1925 = vsel %vm188, %v1890, 0
        %v1928 = vsel %vm188, %v1891, 0
        %v1931 = vsel %vm188, %v1892, 0
        %v1934 = vsel %vm188, %v1893, 0
        %v1937 = vsel %vm188, %v1894, 0
        %v1940 = vsel %vm188, %v1895, 0
        %v1943 = vsel %vm188, %v1896, 0
        %1945 = vmatprep.subr.bf16.mxu0 0
        %1946 = vmatpush1.bf16.msra.mxu0 0
        %1947 = vmatprep.subr.bf16.mxu0 0
        %1948 = vmatpush1.bf16.msra.mxu0 0
        %1949 = vmatprep.subr.bf16.mxu0 0
        %1950 = vmatpush1.bf16.msra.mxu0 0
        %1951 = vmatprep.subr.bf16.mxu0 0
        %1952 = vmatpush1.bf16.msra.mxu0 0
        %1953 = vmatprep.subr.bf16.mxu0 0
        %1954 = vmatpush1.bf16.msra.mxu0 0
        %1955 = vmatprep.subr.bf16.mxu0 0
        %1956 = vmatpush1.bf16.msra.mxu0 0
        %1957 = vmatprep.subr.bf16.mxu0 0
        %1958 = vmatpush1.bf16.msra.mxu0 0
        %1959 = vmatprep.subr.bf16.mxu0 %v1864
        %1960 = vmatpush1.bf16.msra.mxu0 %v1863
        %1961 = vmatprep.subr.bf16.mxu0 0
        %1962 = vmatpush2.bf16.msra.mxu0 0
        %1963 = vmatprep.subr.bf16.mxu0 0
        %1964 = vmatpush2.bf16.msra.mxu0 0
        %1965 = vmatprep.subr.bf16.mxu0 0
        %1966 = vmatpush2.bf16.msra.mxu0 0
        %1967 = vmatprep.subr.bf16.mxu0 0
        %1968 = vmatpush2.bf16.msra.mxu0 0
        %1969 = vmatprep.subr.bf16.mxu0 0
        %1970 = vmatpush2.bf16.msra.mxu0 0
        %1971 = vmatprep.subr.bf16.mxu0 0
        %1972 = vmatpush2.bf16.msra.mxu0 0
        %1973 = vmatprep.subr.bf16.mxu0 0
        %1974 = vmatpush2.bf16.msra.mxu0 0
        %1975 = vmatprep.subr.bf16.mxu0 0
        %1976 = vmatpush2.bf16.msra.mxu0 0
        %1977 = vmatprep.mubr.bf16.mxu0 0
        %1978 = vmatmul.mubr.bf16.gmra.mxu0 %v1898
        %v1979 = vpop.f32.mrf.mxu0
        %v1980 = vadd.f32 0.0, %v1979
        %v1981 = vpop.f32.mrf.mxu0
        %v1982 = vadd.f32 0.0, %v1981
        %v1983 = vpop.f32.mrf.mxu0
        %v1984 = vadd.f32 0.0, %v1983
        %v1985 = vpop.f32.mrf.mxu0
        %v1986 = vadd.f32 0.0, %v1985
        %1987 = vmatprep.mubr.bf16.mxu0 0
        %1988 = vmatmul.mubr.bf16.gmra.mxu0 %v1901
        %v1989 = vpop.f32.mrf.mxu0
        %v1990 = vadd.f32 0.0, %v1989
        %v1991 = vpop.f32.mrf.mxu0
        %v1992 = vadd.f32 0.0, %v1991
        %v1993 = vpop.f32.mrf.mxu0
        %v1994 = vadd.f32 0.0, %v1993
        %v1995 = vpop.f32.mrf.mxu0
        %v1996 = vadd.f32 0.0, %v1995
        %1997 = vmatprep.mubr.bf16.mxu0 0
        %1998 = vmatmul.mubr.bf16.gmra.mxu0 %v1904
        %v1999 = vpop.f32.mrf.mxu0
        %v2000 = vadd.f32 0.0, %v1999
        %v2001 = vpop.f32.mrf.mxu0
        %v2002 = vadd.f32 0.0, %v2001
        %v2003 = vpop.f32.mrf.mxu0
        %v2004 = vadd.f32 0.0, %v2003
        %v2005 = vpop.f32.mrf.mxu0
        %v2006 = vadd.f32 0.0, %v2005
        %2007 = vmatprep.mubr.bf16.mxu0 0
        %2008 = vmatmul.mubr.bf16.gmra.mxu0 %v1907
        %v2009 = vpop.f32.mrf.mxu0
        %v2010 = vadd.f32 0.0, %v2009
        %v2011 = vpop.f32.mrf.mxu0
        %v2012 = vadd.f32 0.0, %v2011
        %v2013 = vpop.f32.mrf.mxu0
        %v2014 = vadd.f32 0.0, %v2013
        %v2015 = vpop.f32.mrf.mxu0
        %v2016 = vadd.f32 0.0, %v2015
        %2017 = vmatprep.mubr.bf16.mxu0 0
        %2018 = vmatmul.mubr.bf16.gmra.mxu0 %v1910
        %v2019 = vpop.f32.mrf.mxu0
        %v2020 = vadd.f32 0.0, %v2019
        %v2021 = vpop.f32.mrf.mxu0
        %v2022 = vadd.f32 0.0, %v2021
        %v2023 = vpop.f32.mrf.mxu0
        %v2024 = vadd.f32 0.0, %v2023
        %v2025 = vpop.f32.mrf.mxu0
        %v2026 = vadd.f32 0.0, %v2025
        %2027 = vmatprep.mubr.bf16.mxu0 0
        %2028 = vmatmul.mubr.bf16.gmra.mxu0 %v1913
        %v2029 = vpop.f32.mrf.mxu0
        %v2030 = vadd.f32 0.0, %v2029
        %v2031 = vpop.f32.mrf.mxu0
        %v2032 = vadd.f32 0.0, %v2031
        %v2033 = vpop.f32.mrf.mxu0
        %v2034 = vadd.f32 0.0, %v2033
        %v2035 = vpop.f32.mrf.mxu0
        %v2036 = vadd.f32 0.0, %v2035
        %2037 = vmatprep.mubr.bf16.mxu0 0
        %2038 = vmatmul.mubr.bf16.gmra.mxu0 %v1916
        %v2039 = vpop.f32.mrf.mxu0
        %v2040 = vadd.f32 0.0, %v2039
        %v2041 = vpop.f32.mrf.mxu0
        %v2042 = vadd.f32 0.0, %v2041
        %v2043 = vpop.f32.mrf.mxu0
        %v2044 = vadd.f32 0.0, %v2043
        %v2045 = vpop.f32.mrf.mxu0
        %v2046 = vadd.f32 0.0, %v2045
        %2047 = vmatprep.mubr.bf16.mxu0 0
        %2048 = vmatmul.mubr.bf16.gmra.mxu0 %v1919
        %v2049 = vpop.f32.mrf.mxu0
        %v2050 = vadd.f32 0.0, %v2049
        %v2051 = vpop.f32.mrf.mxu0
        %v2052 = vadd.f32 0.0, %v2051
        %v2053 = vpop.f32.mrf.mxu0
        %v2054 = vadd.f32 0.0, %v2053
        %v2055 = vpop.f32.mrf.mxu0
        %v2056 = vadd.f32 0.0, %v2055
        %2057 = vmatprep.mubr.bf16.mxu0 0
        %2058 = vmatmul.mubr.bf16.gmra.mxu0 %v1922
        %v2059 = vpop.f32.mrf.mxu0
        %v2060 = vadd.f32 0.0, %v2059
        %v2061 = vpop.f32.mrf.mxu0
        %v2062 = vadd.f32 0.0, %v2061
        %v2063 = vpop.f32.mrf.mxu0
        %v2064 = vadd.f32 0.0, %v2063
        %v2065 = vpop.f32.mrf.mxu0
        %v2066 = vadd.f32 0.0, %v2065
        %2067 = vmatprep.mubr.bf16.mxu0 0
        %2068 = vmatmul.mubr.bf16.gmra.mxu0 %v1925
        %v2069 = vpop.f32.mrf.mxu0
        %v2070 = vadd.f32 0.0, %v2069
        %v2071 = vpop.f32.mrf.mxu0
        %v2072 = vadd.f32 0.0, %v2071
        %v2073 = vpop.f32.mrf.mxu0
        %v2074 = vadd.f32 0.0, %v2073
        %v2075 = vpop.f32.mrf.mxu0
        %v2076 = vadd.f32 0.0, %v2075
        %2077 = vmatprep.mubr.bf16.mxu0 0
        %2078 = vmatmul.mubr.bf16.gmra.mxu0 %v1928
        %v2079 = vpop.f32.mrf.mxu0
        %v2080 = vadd.f32 0.0, %v2079
        %v2081 = vpop.f32.mrf.mxu0
        %v2082 = vadd.f32 0.0, %v2081
        %v2083 = vpop.f32.mrf.mxu0
        %v2084 = vadd.f32 0.0, %v2083
        %v2085 = vpop.f32.mrf.mxu0
        %v2086 = vadd.f32 0.0, %v2085
        %2087 = vmatprep.mubr.bf16.mxu0 0
        %2088 = vmatmul.mubr.bf16.gmra.mxu0 %v1931
        %v2089 = vpop.f32.mrf.mxu0
        %v2090 = vadd.f32 0.0, %v2089
        %v2091 = vpop.f32.mrf.mxu0
        %v2092 = vadd.f32 0.0, %v2091
        %v2093 = vpop.f32.mrf.mxu0
        %v2094 = vadd.f32 0.0, %v2093
        %v2095 = vpop.f32.mrf.mxu0
        %v2096 = vadd.f32 0.0, %v2095
        %2097 = vmatprep.mubr.bf16.mxu0 0
        %2098 = vmatmul.mubr.bf16.gmra.mxu0 %v1934
        %v2099 = vpop.f32.mrf.mxu0
        %v2100 = vadd.f32 0.0, %v2099
        %v2101 = vpop.f32.mrf.mxu0
        %v2102 = vadd.f32 0.0, %v2101
        %v2103 = vpop.f32.mrf.mxu0
        %v2104 = vadd.f32 0.0, %v2103
        %v2105 = vpop.f32.mrf.mxu0
        %v2106 = vadd.f32 0.0, %v2105
        %2107 = vmatprep.mubr.bf16.mxu0 0
        %2108 = vmatmul.mubr.bf16.gmra.mxu0 %v1937
        %v2109 = vpop.f32.mrf.mxu0
        %v2110 = vadd.f32 0.0, %v2109
        %v2111 = vpop.f32.mrf.mxu0
        %v2112 = vadd.f32 0.0, %v2111
        %v2113 = vpop.f32.mrf.mxu0
        %v2114 = vadd.f32 0.0, %v2113
        %v2115 = vpop.f32.mrf.mxu0
        %v2116 = vadd.f32 0.0, %v2115
        %2117 = vmatprep.mubr.bf16.mxu0 0
        %2118 = vmatmul.mubr.bf16.gmra.mxu0 %v1940
        %v2119 = vpop.f32.mrf.mxu0
        %v2120 = vadd.f32 0.0, %v2119
        %v2121 = vpop.f32.mrf.mxu0
        %v2122 = vadd.f32 0.0, %v2121
        %v2123 = vpop.f32.mrf.mxu0
        %v2124 = vadd.f32 0.0, %v2123
        %v2125 = vpop.f32.mrf.mxu0
        %v2126 = vadd.f32 0.0, %v2125
        %2127 = vmatprep.mubr.bf16.mxu0 0
        %2128 = vmatmul.mubr.bf16.gmra.mxu0 %v1943
        %v2129 = vpop.f32.mrf.mxu0
        %v2130 = vadd.f32 0.0, %v2129
        %v2131 = vpop.f32.mrf.mxu0
        %v2132 = vadd.f32 0.0, %v2131
        %v2133 = vpop.f32.mrf.mxu0
        %v2134 = vadd.f32 0.0, %v2133
        %v2135 = vpop.f32.mrf.mxu0
        %v2136 = vadd.f32 0.0, %v2135
        %2137 = vdwg.mxu0
        %v2138 = vmax.f32 %v1980, %v1982
        %2139 = vmax.xlane.f32.xlu0 %v2138
        %v2140 = vpop.xlane.xlu0 %2139
        %v2141 = vmax.f32 %v1984, %v1986
        %2142 = vmax.xlane.f32.xlu0 %v2141
        %v2143 = vpop.xlane.xlu0 %2142
        %v2144 = vmax.f32 %v1990, %v1992
        %2145 = vmax.xlane.f32.xlu0 %v2144
        %v2146 = vpop.xlane.xlu0 %2145
        %v2147 = vmax.f32 %v1994, %v1996
        %2148 = vmax.xlane.f32.xlu0 %v2147
        %v2149 = vpop.xlane.xlu0 %2148
        %v2150 = vmax.f32 %v2000, %v2002
        %2151 = vmax.xlane.f32.xlu0 %v2150
        %v2152 = vpop.xlane.xlu0 %2151
        %v2153 = vmax.f32 %v2004, %v2006
        %2154 = vmax.xlane.f32.xlu0 %v2153
        %v2155 = vpop.xlane.xlu0 %2154
        %v2156 = vmax.f32 %v2010, %v2012
        %2157 = vmax.xlane.f32.xlu0 %v2156
        %v2158 = vpop.xlane.xlu0 %2157
        %v2159 = vmax.f32 %v2014, %v2016
        %2160 = vmax.xlane.f32.xlu0 %v2159
        %v2161 = vpop.xlane.xlu0 %2160
        %v2162 = vmax.f32 %v2020, %v2022
        %2163 = vmax.xlane.f32.xlu0 %v2162
        %v2164 = vpop.xlane.xlu0 %2163
        %v2165 = vmax.f32 %v2024, %v2026
        %2166 = vmax.xlane.f32.xlu0 %v2165
        %v2167 = vpop.xlane.xlu0 %2166
        %v2168 = vmax.f32 %v2030, %v2032
        %2169 = vmax.xlane.f32.xlu0 %v2168
        %v2170 = vpop.xlane.xlu0 %2169
        %v2171 = vmax.f32 %v2034, %v2036
        %2172 = vmax.xlane.f32.xlu0 %v2171
        %v2173 = vpop.xlane.xlu0 %2172
        %v2174 = vmax.f32 %v2040, %v2042
        %2175 = vmax.xlane.f32.xlu0 %v2174
        %v2176 = vpop.xlane.xlu0 %2175
        %v2177 = vmax.f32 %v2044, %v2046
        %2178 = vmax.xlane.f32.xlu0 %v2177
        %v2179 = vpop.xlane.xlu0 %2178
        %v2180 = vmax.f32 %v2050, %v2052
        %2181 = vmax.xlane.f32.xlu0 %v2180
        %v2182 = vpop.xlane.xlu0 %2181
        %v2183 = vmax.f32 %v2054, %v2056
        %2184 = vmax.xlane.f32.xlu0 %v2183
        %v2185 = vpop.xlane.xlu0 %2184
        %v2186 = vmax.f32 %v2060, %v2062
        %2187 = vmax.xlane.f32.xlu0 %v2186
        %v2188 = vpop.xlane.xlu0 %2187
        %v2189 = vmax.f32 %v2064, %v2066
        %2190 = vmax.xlane.f32.xlu0 %v2189
        %v2191 = vpop.xlane.xlu0 %2190
        %v2192 = vmax.f32 %v2070, %v2072
        %2193 = vmax.xlane.f32.xlu0 %v2192
        %v2194 = vpop.xlane.xlu0 %2193
        %v2195 = vmax.f32 %v2074, %v2076
        %2196 = vmax.xlane.f32.xlu0 %v2195
        %v2197 = vpop.xlane.xlu0 %2196
        %v2198 = vmax.f32 %v2080, %v2082
        %2199 = vmax.xlane.f32.xlu0 %v2198
        %v2200 = vpop.xlane.xlu0 %2199
        %v2201 = vmax.f32 %v2084, %v2086
        %2202 = vmax.xlane.f32.xlu0 %v2201
        %v2203 = vpop.xlane.xlu0 %2202
        %v2204 = vmax.f32 %v2090, %v2092
        %2205 = vmax.xlane.f32.xlu0 %v2204
        %v2206 = vpop.xlane.xlu0 %2205
        %v2207 = vmax.f32 %v2094, %v2096
        %2208 = vmax.xlane.f32.xlu0 %v2207
        %v2209 = vpop.xlane.xlu0 %2208
        %v2210 = vmax.f32 %v2100, %v2102
        %2211 = vmax.xlane.f32.xlu0 %v2210
        %v2212 = vpop.xlane.xlu0 %2211
        %v2213 = vmax.f32 %v2104, %v2106
        %2214 = vmax.xlane.f32.xlu0 %v2213
        %v2215 = vpop.xlane.xlu0 %2214
        %v2216 = vmax.f32 %v2110, %v2112
        %2217 = vmax.xlane.f32.xlu0 %v2216
        %v2218 = vpop.xlane.xlu0 %2217
        %v2219 = vmax.f32 %v2114, %v2116
        %2220 = vmax.xlane.f32.xlu0 %v2219
        %v2221 = vpop.xlane.xlu0 %2220
        %v2222 = vmax.f32 %v2120, %v2122
        %2223 = vmax.xlane.f32.xlu0 %v2222
        %v2224 = vpop.xlane.xlu0 %2223
        %v2225 = vmax.f32 %v2124, %v2126
        %2226 = vmax.xlane.f32.xlu0 %v2225
        %v2227 = vpop.xlane.xlu0 %2226
        %v2228 = vmax.f32 %v2130, %v2132
        %2229 = vmax.xlane.f32.xlu0 %v2228
        %v2230 = vpop.xlane.xlu0 %2229
        %v2231 = vmax.f32 %v2134, %v2136
        %2232 = vmax.xlane.f32.xlu0 %v2231
        %v2233 = vpop.xlane.xlu0 %2232
        %v2234 = vsub.f32 %v1980, %v2140
        %v2235 = vsub.f32 %v1982, %v2140
        %v2236 = vsub.f32 %v1984, %v2143
        %v2237 = vsub.f32 %v1986, %v2143
        %v2238 = vsub.f32 %v1990, %v2146
        %v2239 = vsub.f32 %v1992, %v2146
        %v2240 = vsub.f32 %v1994, %v2149
        %v2241 = vsub.f32 %v1996, %v2149
        %v2242 = vsub.f32 %v2000, %v2152
        %v2243 = vsub.f32 %v2002, %v2152
        %v2244 = vsub.f32 %v2004, %v2155
        %v2245 = vsub.f32 %v2006, %v2155
        %v2246 = vsub.f32 %v2010, %v2158
        %v2247 = vsub.f32 %v2012, %v2158
        %v2248 = vsub.f32 %v2014, %v2161
        %v2249 = vsub.f32 %v2016, %v2161
        %v2250 = vsub.f32 %v2020, %v2164
        %v2251 = vsub.f32 %v2022, %v2164
        %v2252 = vsub.f32 %v2024, %v2167
        %v2253 = vsub.f32 %v2026, %v2167
        %v2254 = vsub.f32 %v2030, %v2170
        %v2255 = vsub.f32 %v2032, %v2170
        %v2256 = vsub.f32 %v2034, %v2173
        %v2257 = vsub.f32 %v2036, %v2173
        %v2258 = vsub.f32 %v2040, %v2176
        %v2259 = vsub.f32 %v2042, %v2176
        %v2260 = vsub.f32 %v2044, %v2179
        %v2261 = vsub.f32 %v2046, %v2179
        %v2262 = vsub.f32 %v2050, %v2182
        %v2263 = vsub.f32 %v2052, %v2182
        %v2264 = vsub.f32 %v2054, %v2185
        %v2265 = vsub.f32 %v2056, %v2185
        %v2266 = vsub.f32 %v2060, %v2188
        %v2267 = vsub.f32 %v2062, %v2188
        %v2268 = vsub.f32 %v2064, %v2191
        %v2269 = vsub.f32 %v2066, %v2191
        %v2270 = vsub.f32 %v2070, %v2194
        %v2271 = vsub.f32 %v2072, %v2194
        %v2272 = vsub.f32 %v2074, %v2197
        %v2273 = vsub.f32 %v2076, %v2197
        %v2274 = vsub.f32 %v2080, %v2200
        %v2275 = vsub.f32 %v2082, %v2200
        %v2276 = vsub.f32 %v2084, %v2203
        %v2277 = vsub.f32 %v2086, %v2203
        %v2278 = vsub.f32 %v2090, %v2206
        %v2279 = vsub.f32 %v2092, %v2206
        %v2280 = vsub.f32 %v2094, %v2209
        %v2281 = vsub.f32 %v2096, %v2209
        %v2282 = vsub.f32 %v2100, %v2212
        %v2283 = vsub.f32 %v2102, %v2212
        %v2284 = vsub.f32 %v2104, %v2215
        %v2285 = vsub.f32 %v2106, %v2215
        %v2286 = vsub.f32 %v2110, %v2218
        %v2287 = vsub.f32 %v2112, %v2218
        %v2288 = vsub.f32 %v2114, %v2221
        %v2289 = vsub.f32 %v2116, %v2221
        %v2290 = vsub.f32 %v2120, %v2224
        %v2291 = vsub.f32 %v2122, %v2224
        %v2292 = vsub.f32 %v2124, %v2227
        %v2293 = vsub.f32 %v2126, %v2227
        %v2294 = vsub.f32 %v2130, %v2230
        %v2295 = vsub.f32 %v2132, %v2230
        %v2296 = vsub.f32 %v2134, %v2233
        %v2297 = vsub.f32 %v2136, %v2233
        %v2298 = vmul.f32 %v2234, 1.442695
        %v2299 = vpow.pop %v2298
        %v2300 = vmul.f32 %v2235, 1.442695
        %v2301 = vpow.pop %v2300
        %v2302 = vmul.f32 %v2236, 1.442695
        %v2303 = vpow.pop %v2302
        %v2304 = vmul.f32 %v2237, 1.442695
        %v2305 = vpow.pop %v2304
        %v2306 = vmul.f32 %v2238, 1.442695
        %v2307 = vpow.pop %v2306
        %v2308 = vmul.f32 %v2239, 1.442695
        %v2309 = vpow.pop %v2308
        %v2310 = vmul.f32 %v2240, 1.442695
        %v2311 = vpow.pop %v2310
        %v2312 = vmul.f32 %v2241, 1.442695
        %v2313 = vpow.pop %v2312
        %v2314 = vmul.f32 %v2242, 1.442695
        %v2315 = vpow.pop %v2314
        %v2316 = vmul.f32 %v2243, 1.442695
        %v2317 = vpow.pop %v2316
        %v2318 = vmul.f32 %v2244, 1.442695
        %v2319 = vpow.pop %v2318
        %v2320 = vmul.f32 %v2245, 1.442695
        %v2321 = vpow.pop %v2320
        %v2322 = vmul.f32 %v2246, 1.442695
        %v2323 = vpow.pop %v2322
        %v2324 = vmul.f32 %v2247, 1.442695
        %v2325 = vpow.pop %v2324
        %v2326 = vmul.f32 %v2248, 1.442695
        %v2327 = vpow.pop %v2326
        %v2328 = vmul.f32 %v2249, 1.442695
        %v2329 = vpow.pop %v2328
        %v2330 = vmul.f32 %v2250, 1.442695
        %v2331 = vpow.pop %v2330
        %v2332 = vmul.f32 %v2251, 1.442695
        %v2333 = vpow.pop %v2332
        %v2334 = vmul.f32 %v2252, 1.442695
        %v2335 = vpow.pop %v2334
        %v2336 = vmul.f32 %v2253, 1.442695
        %v2337 = vpow.pop %v2336
        %v2338 = vmul.f32 %v2254, 1.442695
        %v2339 = vpow.pop %v2338
        %v2340 = vmul.f32 %v2255, 1.442695
        %v2341 = vpow.pop %v2340
        %v2342 = vmul.f32 %v2256, 1.442695
        %v2343 = vpow.pop %v2342
        %v2344 = vmul.f32 %v2257, 1.442695
        %v2345 = vpow.pop %v2344
        %v2346 = vmul.f32 %v2258, 1.442695
        %v2347 = vpow.pop %v2346
        %v2348 = vmul.f32 %v2259, 1.442695
        %v2349 = vpow.pop %v2348
        %v2350 = vmul.f32 %v2260, 1.442695
        %v2351 = vpow.pop %v2350
        %v2352 = vmul.f32 %v2261, 1.442695
        %v2353 = vpow.pop %v2352
        %v2354 = vmul.f32 %v2262, 1.442695
        %v2355 = vpow.pop %v2354
        %v2356 = vmul.f32 %v2263, 1.442695
        %v2357 = vpow.pop %v2356
        %v2358 = vmul.f32 %v2264, 1.442695
        %v2359 = vpow.pop %v2358
        %v2360 = vmul.f32 %v2265, 1.442695
        %v2361 = vpow.pop %v2360
        %v2362 = vmul.f32 %v2266, 1.442695
        %v2363 = vpow.pop %v2362
        %v2364 = vmul.f32 %v2267, 1.442695
        %v2365 = vpow.pop %v2364
        %v2366 = vmul.f32 %v2268, 1.442695
        %v2367 = vpow.pop %v2366
        %v2368 = vmul.f32 %v2269, 1.442695
        %v2369 = vpow.pop %v2368
        %v2370 = vmul.f32 %v2270, 1.442695
        %v2371 = vpow.pop %v2370
        %v2372 = vmul.f32 %v2271, 1.442695
        %v2373 = vpow.pop %v2372
        %v2374 = vmul.f32 %v2272, 1.442695
        %v2375 = vpow.pop %v2374
        %v2376 = vmul.f32 %v2273, 1.442695
        %v2377 = vpow.pop %v2376
        %v2378 = vmul.f32 %v2274, 1.442695
        %v2379 = vpow.pop %v2378
        %v2380 = vmul.f32 %v2275, 1.442695
        %v2381 = vpow.pop %v2380
        %v2382 = vmul.f32 %v2276, 1.442695
        %v2383 = vpow.pop %v2382
        %v2384 = vmul.f32 %v2277, 1.442695
        %v2385 = vpow.pop %v2384
        %v2386 = vmul.f32 %v2278, 1.442695
        %v2387 = vpow.pop %v2386
        %v2388 = vmul.f32 %v2279, 1.442695
        %v2389 = vpow.pop %v2388
        %v2390 = vmul.f32 %v2280, 1.442695
        %v2391 = vpow.pop %v2390
        %v2392 = vmul.f32 %v2281, 1.442695
        %v2393 = vpow.pop %v2392
        %v2394 = vmul.f32 %v2282, 1.442695
        %v2395 = vpow.pop %v2394
        %v2396 = vmul.f32 %v2283, 1.442695
        %v2397 = vpow.pop %v2396
        %v2398 = vmul.f32 %v2284, 1.442695
        %v2399 = vpow.pop %v2398
        %v2400 = vmul.f32 %v2285, 1.442695
        %v2401 = vpow.pop %v2400
        %v2402 = vmul.f32 %v2286, 1.442695
        %v2403 = vpow.pop %v2402
        %v2404 = vmul.f32 %v2287, 1.442695
        %v2405 = vpow.pop %v2404
        %v2406 = vmul.f32 %v2288, 1.442695
        %v2407 = vpow.pop %v2406
        %v2408 = vmul.f32 %v2289, 1.442695
        %v2409 = vpow.pop %v2408
        %v2410 = vmul.f32 %v2290, 1.442695
        %v2411 = vpow.pop %v2410
        %v2412 = vmul.f32 %v2291, 1.442695
        %v2413 = vpow.pop %v2412
        %v2414 = vmul.f32 %v2292, 1.442695
        %v2415 = vpow.pop %v2414
        %v2416 = vmul.f32 %v2293, 1.442695
        %v2417 = vpow.pop %v2416
        %v2418 = vmul.f32 %v2294, 1.442695
        %v2419 = vpow.pop %v2418
        %v2420 = vmul.f32 %v2295, 1.442695
        %v2421 = vpow.pop %v2420
        %v2422 = vmul.f32 %v2296, 1.442695
        %v2423 = vpow.pop %v2422
        %v2424 = vmul.f32 %v2297, 1.442695
        %v2425 = vpow.pop %v2424
        %v2426 = vadd.f32 %v2299, %v2301
        %2427 = vadd.xlane.f32.xlu0 %v2426
        %v2428 = vpop.xlane.xlu0 %2427
        %v2429 = vadd.f32 %v2303, %v2305
        %2430 = vadd.xlane.f32.xlu0 %v2429
        %v2431 = vpop.xlane.xlu0 %2430
        %v2432 = vadd.f32 %v2307, %v2309
        %2433 = vadd.xlane.f32.xlu0 %v2432
        %v2434 = vpop.xlane.xlu0 %2433
        %v2435 = vadd.f32 %v2311, %v2313
        %2436 = vadd.xlane.f32.xlu0 %v2435
        %v2437 = vpop.xlane.xlu0 %2436
        %v2438 = vadd.f32 %v2315, %v2317
        %2439 = vadd.xlane.f32.xlu0 %v2438
        %v2440 = vpop.xlane.xlu0 %2439
        %v2441 = vadd.f32 %v2319, %v2321
        %2442 = vadd.xlane.f32.xlu0 %v2441
        %v2443 = vpop.xlane.xlu0 %2442
        %v2444 = vadd.f32 %v2323, %v2325
        %2445 = vadd.xlane.f32.xlu0 %v2444
        %v2446 = vpop.xlane.xlu0 %2445
        %v2447 = vadd.f32 %v2327, %v2329
        %2448 = vadd.xlane.f32.xlu0 %v2447
        %v2449 = vpop.xlane.xlu0 %2448
        %v2450 = vadd.f32 %v2331, %v2333
        %2451 = vadd.xlane.f32.xlu0 %v2450
        %v2452 = vpop.xlane.xlu0 %2451
        %v2453 = vadd.f32 %v2335, %v2337
        %2454 = vadd.xlane.f32.xlu0 %v2453
        %v2455 = vpop.xlane.xlu0 %2454
        %v2456 = vadd.f32 %v2339, %v2341
        %2457 = vadd.xlane.f32.xlu0 %v2456
        %v2458 = vpop.xlane.xlu0 %2457
        %v2459 = vadd.f32 %v2343, %v2345
        %2460 = vadd.xlane.f32.xlu0 %v2459
        %v2461 = vpop.xlane.xlu0 %2460
        %v2462 = vadd.f32 %v2347, %v2349
        %2463 = vadd.xlane.f32.xlu0 %v2462
        %v2464 = vpop.xlane.xlu0 %2463
        %v2465 = vadd.f32 %v2351, %v2353
        %2466 = vadd.xlane.f32.xlu0 %v2465
        %v2467 = vpop.xlane.xlu0 %2466
        %v2468 = vadd.f32 %v2355, %v2357
        %2469 = vadd.xlane.f32.xlu0 %v2468
        %v2470 = vpop.xlane.xlu0 %2469
        %v2471 = vadd.f32 %v2359, %v2361
        %2472 = vadd.xlane.f32.xlu0 %v2471
        %v2473 = vpop.xlane.xlu0 %2472
        %v2474 = vadd.f32 %v2363, %v2365
        %2475 = vadd.xlane.f32.xlu0 %v2474
        %v2476 = vpop.xlane.xlu0 %2475
        %v2477 = vadd.f32 %v2367, %v2369
        %2478 = vadd.xlane.f32.xlu0 %v2477
        %v2479 = vpop.xlane.xlu0 %2478
        %v2480 = vadd.f32 %v2371, %v2373
        %2481 = vadd.xlane.f32.xlu0 %v2480
        %v2482 = vpop.xlane.xlu0 %2481
        %v2483 = vadd.f32 %v2375, %v2377
        %2484 = vadd.xlane.f32.xlu0 %v2483
        %v2485 = vpop.xlane.xlu0 %2484
        %v2486 = vadd.f32 %v2379, %v2381
        %2487 = vadd.xlane.f32.xlu0 %v2486
        %v2488 = vpop.xlane.xlu0 %2487
        %v2489 = vadd.f32 %v2383, %v2385
        %2490 = vadd.xlane.f32.xlu0 %v2489
        %v2491 = vpop.xlane.xlu0 %2490
        %v2492 = vadd.f32 %v2387, %v2389
        %2493 = vadd.xlane.f32.xlu0 %v2492
        %v2494 = vpop.xlane.xlu0 %2493
        %v2495 = vadd.f32 %v2391, %v2393
        %2496 = vadd.xlane.f32.xlu0 %v2495
        %v2497 = vpop.xlane.xlu0 %2496
        %v2498 = vadd.f32 %v2395, %v2397
        %2499 = vadd.xlane.f32.xlu0 %v2498
        %v2500 = vpop.xlane.xlu0 %2499
        %v2501 = vadd.f32 %v2399, %v2401
        %2502 = vadd.xlane.f32.xlu0 %v2501
        %v2503 = vpop.xlane.xlu0 %2502
        %v2504 = vadd.f32 %v2403, %v2405
        %2505 = vadd.xlane.f32.xlu0 %v2504
        %v2506 = vpop.xlane.xlu0 %2505
        %v2507 = vadd.f32 %v2407, %v2409
        %2508 = vadd.xlane.f32.xlu0 %v2507
        %v2509 = vpop.xlane.xlu0 %2508
        %v2510 = vadd.f32 %v2411, %v2413
        %2511 = vadd.xlane.f32.xlu0 %v2510
        %v2512 = vpop.xlane.xlu0 %2511
        %v2513 = vadd.f32 %v2415, %v2417
        %2514 = vadd.xlane.f32.xlu0 %v2513
        %v2515 = vpop.xlane.xlu0 %2514
        %v2516 = vadd.f32 %v2419, %v2421
        %2517 = vadd.xlane.f32.xlu0 %v2516
        %v2518 = vpop.xlane.xlu0 %2517
        %v2519 = vadd.f32 %v2423, %v2425
        %2520 = vadd.xlane.f32.xlu0 %v2519
        %v2521 = vpop.xlane.xlu0 %2520
        %v2522 = vrcp.pop %v2428
        %v2523 = vrcp.pop %v2431
        %v2524 = vrcp.pop %v2434
        %v2525 = vrcp.pop %v2437
        %v2526 = vrcp.pop %v2440
        %v2527 = vrcp.pop %v2443
        %v2528 = vrcp.pop %v2446
        %v2529 = vrcp.pop %v2449
        %v2530 = vrcp.pop %v2452
        %v2531 = vrcp.pop %v2455
        %v2532 = vrcp.pop %v2458
        %v2533 = vrcp.pop %v2461
        %v2534 = vrcp.pop %v2464
        %v2535 = vrcp.pop %v2467
        %v2536 = vrcp.pop %v2470
        %v2537 = vrcp.pop %v2473
        %v2538 = vrcp.pop %v2476
        %v2539 = vrcp.pop %v2479
        %v2540 = vrcp.pop %v2482
        %v2541 = vrcp.pop %v2485
        %v2542 = vrcp.pop %v2488
        %v2543 = vrcp.pop %v2491
        %v2544 = vrcp.pop %v2494
        %v2545 = vrcp.pop %v2497
        %v2546 = vrcp.pop %v2500
        %v2547 = vrcp.pop %v2503
        %v2548 = vrcp.pop %v2506
        %v2549 = vrcp.pop %v2509
        %v2550 = vrcp.pop %v2512
        %v2551 = vrcp.pop %v2515
        %v2552 = vrcp.pop %v2518
        %v2553 = vrcp.pop %v2521
        %v2554 = vmul.f32 %v2299, %v2522
        %v2555 = vmul.f32 %v2301, %v2522
        %v2556 = vmul.f32 %v2303, %v2523
        %v2557 = vmul.f32 %v2305, %v2523
        %v2558 = vmul.f32 %v2307, %v2524
        %v2559 = vmul.f32 %v2309, %v2524
        %v2560 = vmul.f32 %v2311, %v2525
        %v2561 = vmul.f32 %v2313, %v2525
        %v2562 = vmul.f32 %v2315, %v2526
        %v2563 = vmul.f32 %v2317, %v2526
        %v2564 = vmul.f32 %v2319, %v2527
        %v2565 = vmul.f32 %v2321, %v2527
        %v2566 = vmul.f32 %v2323, %v2528
        %v2567 = vmul.f32 %v2325, %v2528
        %v2568 = vmul.f32 %v2327, %v2529
        %v2569 = vmul.f32 %v2329, %v2529
        %v2570 = vmul.f32 %v2331, %v2530
        %v2571 = vmul.f32 %v2333, %v2530
        %v2572 = vmul.f32 %v2335, %v2531
        %v2573 = vmul.f32 %v2337, %v2531
        %v2574 = vmul.f32 %v2339, %v2532
        %v2575 = vmul.f32 %v2341, %v2532
        %v2576 = vmul.f32 %v2343, %v2533
        %v2577 = vmul.f32 %v2345, %v2533
        %v2578 = vmul.f32 %v2347, %v2534
        %v2579 = vmul.f32 %v2349, %v2534
        %v2580 = vmul.f32 %v2351, %v2535
        %v2581 = vmul.f32 %v2353, %v2535
        %v2582 = vmul.f32 %v2355, %v2536
        %v2583 = vmul.f32 %v2357, %v2536
        %v2584 = vmul.f32 %v2359, %v2537
        %v2585 = vmul.f32 %v2361, %v2537
        %v2586 = vmul.f32 %v2363, %v2538
        %v2587 = vmul.f32 %v2365, %v2538
        %v2588 = vmul.f32 %v2367, %v2539
        %v2589 = vmul.f32 %v2369, %v2539
        %v2590 = vmul.f32 %v2371, %v2540
        %v2591 = vmul.f32 %v2373, %v2540
        %v2592 = vmul.f32 %v2375, %v2541
        %v2593 = vmul.f32 %v2377, %v2541
        %v2594 = vmul.f32 %v2379, %v2542
        %v2595 = vmul.f32 %v2381, %v2542
        %v2596 = vmul.f32 %v2383, %v2543
        %v2597 = vmul.f32 %v2385, %v2543
        %v2598 = vmul.f32 %v2387, %v2544
        %v2599 = vmul.f32 %v2389, %v2544
        %v2600 = vmul.f32 %v2391, %v2545
        %v2601 = vmul.f32 %v2393, %v2545
        %v2602 = vmul.f32 %v2395, %v2546
        %v2603 = vmul.f32 %v2397, %v2546
        %v2604 = vmul.f32 %v2399, %v2547
        %v2605 = vmul.f32 %v2401, %v2547
        %v2606 = vmul.f32 %v2403, %v2548
        %v2607 = vmul.f32 %v2405, %v2548
        %v2608 = vmul.f32 %v2407, %v2549
        %v2609 = vmul.f32 %v2409, %v2549
        %v2610 = vmul.f32 %v2411, %v2550
        %v2611 = vmul.f32 %v2413, %v2550
        %v2612 = vmul.f32 %v2415, %v2551
        %v2613 = vmul.f32 %v2417, %v2551
        %v2614 = vmul.f32 %v2419, %v2552
        %v2615 = vmul.f32 %v2421, %v2552
        %v2616 = vmul.f32 %v2423, %v2553
        %v2617 = vmul.f32 %v2425, %v2553
        %v2618 = vpack.c.bf16 %v1855, %v1853
        %v2619 = vpack.c.bf16 %v1856, %v1854
        %v2620 = vpack.c.bf16 %v2556, %v2554
        %v2621 = vpack.c.bf16 %v2557, %v2555
        %v2622 = vpack.c.bf16 %v2560, %v2558
        %v2623 = vpack.c.bf16 %v2561, %v2559
        %v2624 = vpack.c.bf16 %v2564, %v2562
        %v2625 = vpack.c.bf16 %v2565, %v2563
        %v2626 = vpack.c.bf16 %v2568, %v2566
        %v2627 = vpack.c.bf16 %v2569, %v2567
        %v2628 = vpack.c.bf16 %v2572, %v2570
        %v2629 = vpack.c.bf16 %v2573, %v2571
        %v2630 = vpack.c.bf16 %v2576, %v2574
        %v2631 = vpack.c.bf16 %v2577, %v2575
        %v2632 = vpack.c.bf16 %v2580, %v2578
        %v2633 = vpack.c.bf16 %v2581, %v2579
        %v2634 = vpack.c.bf16 %v2584, %v2582
        %v2635 = vpack.c.bf16 %v2585, %v2583
        %v2636 = vpack.c.bf16 %v2588, %v2586
        %v2637 = vpack.c.bf16 %v2589, %v2587
        %v2638 = vpack.c.bf16 %v2592, %v2590
        %v2639 = vpack.c.bf16 %v2593, %v2591
        %v2640 = vpack.c.bf16 %v2596, %v2594
        %v2641 = vpack.c.bf16 %v2597, %v2595
        %v2642 = vpack.c.bf16 %v2600, %v2598
        %v2643 = vpack.c.bf16 %v2601, %v2599
        %v2644 = vpack.c.bf16 %v2604, %v2602
        %v2645 = vpack.c.bf16 %v2605, %v2603
        %v2646 = vpack.c.bf16 %v2608, %v2606
        %v2647 = vpack.c.bf16 %v2609, %v2607
        %v2648 = vpack.c.bf16 %v2612, %v2610
        %v2649 = vpack.c.bf16 %v2613, %v2611
        %v2650 = vpack.c.bf16 %v2616, %v2614
        %v2651 = vpack.c.bf16 %v2617, %v2615
        %2652 = vmatprep.subr.bf16.mxu0 %v2635
        %2653 = vmatpush1.bf16.xpose.msra.mxu0 %v2634
        %2654 = vmatprep.subr.bf16.mxu0 %v2633
        %2655 = vmatpush1.bf16.xpose.msra.mxu0 %v2632
        %2656 = vmatprep.subr.bf16.mxu0 %v2631
        %2657 = vmatpush1.bf16.xpose.msra.mxu0 %v2630
        %2658 = vmatprep.subr.bf16.mxu0 %v2629
        %2659 = vmatpush1.bf16.xpose.msra.mxu0 %v2628
        %2660 = vmatprep.subr.bf16.mxu0 %v2627
        %2661 = vmatpush1.bf16.xpose.msra.mxu0 %v2626
        %2662 = vmatprep.subr.bf16.mxu0 %v2625
        %2663 = vmatpush1.bf16.xpose.msra.mxu0 %v2624
        %2664 = vmatprep.subr.bf16.mxu0 %v2623
        %2665 = vmatpush1.bf16.xpose.msra.mxu0 %v2622
        %2666 = vmatprep.subr.bf16.mxu0 %v2621
        %2667 = vmatpush1.bf16.xpose.msra.mxu0 %v2620
        %2668 = vmatprep.subr.bf16.mxu0 %v2651
        %2669 = vmatpush2.bf16.xpose.msra.mxu0 %v2650
        %2670 = vmatprep.subr.bf16.mxu0 %v2649
        %2671 = vmatpush2.bf16.xpose.msra.mxu0 %v2648
        %2672 = vmatprep.subr.bf16.mxu0 %v2647
        %2673 = vmatpush2.bf16.xpose.msra.mxu0 %v2646
        %2674 = vmatprep.subr.bf16.mxu0 %v2645
        %2675 = vmatpush2.bf16.xpose.msra.mxu0 %v2644
        %2676 = vmatprep.subr.bf16.mxu0 %v2643
        %2677 = vmatpush2.bf16.xpose.msra.mxu0 %v2642
        %2678 = vmatprep.subr.bf16.mxu0 %v2641
        %2679 = vmatpush2.bf16.xpose.msra.mxu0 %v2640
        %2680 = vmatprep.subr.bf16.mxu0 %v2639
        %2681 = vmatpush2.bf16.xpose.msra.mxu0 %v2638
        %2682 = vmatprep.subr.bf16.mxu0 %v2637
        %2683 = vmatpush2.bf16.xpose.msra.mxu0 %v2636
        %2684 = vmatprep.mubr.bf16.mxu0 %v2619
        %2685 = vmatmul.mubr.bf16.gmra.mxu0 %v2618
        %v2686 = vpop.f32.mrf.mxu0
        %v2687 = vadd.f32 0.0, %v2686
        %v2688 = vpop.f32.mrf.mxu0
        %v2689 = vadd.f32 0.0, %v2688
        %v2690 = vpop.f32.mrf.mxu0
        %v2691 = vadd.f32 0.0, %v2690
        %v2692 = vpop.f32.mrf.mxu0
        %v2693 = vadd.f32 0.0, %v2692
        %2694 = vdwg.mxu0
        %2695 = vst [vmem:[%s134 + $0x40] sm:$0xff] %v2687
        %2696 = vst [vmem:[%s134 + $0x48] sm:$0xff] %v2689
        %2697 = vst [vmem:[%s134 + $0x50] sm:$0xff] %v2691
        %2698 = vst [vmem:[%s134 + $0x58] sm:$0xff] %v2693
        %v2699 = vld [vmem:[%s116 + $0x120] sm:$0xff]
        %v2700 = vld [vmem:[%s116 + $0x128] sm:$0xff]
        %v2701 = vld [vmem:[%s116 + $0x130] sm:$0xff]
        %v2702 = vld [vmem:[%s116 + $0x138] sm:$0xff]
        %v2703 = vld [vmem:[%s116 + $0x140] sm:$0xff]
        %v2704 = vld [vmem:[%s116 + $0x148] sm:$0xff]
        %v2705 = vld [vmem:[%s116 + $0x150] sm:$0xff]
        %v2706 = vld [vmem:[%s116 + $0x158] sm:$0xff]
        %v2707 = vld [vmem:[%s116 + $0x160] sm:$0xff]
        %v2708 = vld [vmem:[%s116 + $0x168] sm:$0xff]
        %v2709 = vld [vmem:[%s116 + $0x170] sm:$0xff]
        %v2710 = vld [vmem:[%s116 + $0x178] sm:$0xff]
        %v2711 = vmul.f32 %v2699, 0.25
        %v2712 = vmul.f32 %v2700, 0.25
        %v2713 = vmul.f32 %v2701, 0.25
        %v2714 = vmul.f32 %v2702, 0.25
        %v2715 = vpack.c.bf16 %v2713, %v2711
        %v2716 = vpack.c.bf16 %v2714, %v2712
        %v2717 = vpack.c.bf16 %v2705, %v2703
        %v2718 = vpack.c.bf16 %v2706, %v2704
        %2719 = vxpose.xlu0.c.b16.start [1/8] %v2715, 128
        %2720 = vxpose.xlu0.c.b16.cont [2/8] 0, 128
        %2721 = vxpose.xlu0.c.b16.cont [3/8] 0, 128
        %2722 = vxpose.xlu0.c.b16.cont [4/8] 0, 128
        %2723 = vxpose.xlu0.c.b16.cont [5/8] 0, 128
        %2724 = vxpose.xlu0.c.b16.cont [6/8] 0, 128
        %2725 = vxpose.xlu0.c.b16.cont [7/8] 0, 128
        %2726 = vxpose.xlu0.c.b16.end [8/8] 0, 128
        %v2727 = vpop.trf.xlu0
        %v2728 = vpop.trf.xlu0
        %v2729 = vpop.trf.xlu0
        %v2730 = vpop.trf.xlu0
        %v2731 = vpop.trf.xlu0
        %v2732 = vpop.trf.xlu0
        %v2733 = vpop.trf.xlu0
        %v2734 = vpop.trf.xlu0
        %2735 = vxpose.xlu0.c.b16.start [1/8] %v2716, 128
        %2736 = vxpose.xlu0.c.b16.cont [2/8] 0, 128
        %2737 = vxpose.xlu0.c.b16.cont [3/8] 0, 128
        %2738 = vxpose.xlu0.c.b16.cont [4/8] 0, 128
        %2739 = vxpose.xlu0.c.b16.cont [5/8] 0, 128
        %2740 = vxpose.xlu0.c.b16.cont [6/8] 0, 128
        %2741 = vxpose.xlu0.c.b16.cont [7/8] 0, 128
        %2742 = vxpose.xlu0.c.b16.end [8/8] 0, 128
        %v2743 = vpop.trf.xlu0
        %v2744 = vpop.trf.xlu0
        %v2745 = vpop.trf.xlu0
        %v2746 = vpop.trf.xlu0
        %v2747 = vpop.trf.xlu0
        %v2748 = vpop.trf.xlu0
        %v2749 = vpop.trf.xlu0
        %v2750 = vpop.trf.xlu0
        %v2752 = vsel %vm188, %v2727, 0
        %v2755 = vsel %vm188, %v2728, 0
        %v2758 = vsel %vm188, %v2729, 0
        %v2761 = vsel %vm188, %v2730, 0
        %v2764 = vsel %vm188, %v2731, 0
        %v2767 = vsel %vm188, %v2732, 0
        %v2770 = vsel %vm188, %v2733, 0
        %v2773 = vsel %vm188, %v2734, 0
        %v2776 = vsel %vm188, %v2743, 0
        %v2779 = vsel %vm188, %v2744, 0
        %v2782 = vsel %vm188, %v2745, 0
        %v2785 = vsel %vm188, %v2746, 0
        %v2788 = vsel %vm188, %v2747, 0
        %v2791 = vsel %vm188, %v2748, 0
        %v2794 = vsel %vm188, %v2749, 0
        %v2797 = vsel %vm188, %v2750, 0
        %2799 = vmatprep.subr.bf16.mxu0 0
        %2800 = vmatpush1.bf16.msra.mxu0 0
        %2801 = vmatprep.subr.bf16.mxu0 0
        %2802 = vmatpush1.bf16.msra.mxu0 0
        %2803 = vmatprep.subr.bf16.mxu0 0
        %2804 = vmatpush1.bf16.msra.mxu0 0
        %2805 = vmatprep.subr.bf16.mxu0 0
        %2806 = vmatpush1.bf16.msra.mxu0 0
        %2807 = vmatprep.subr.bf16.mxu0 0
        %2808 = vmatpush1.bf16.msra.mxu0 0
        %2809 = vmatprep.subr.bf16.mxu0 0
        %2810 = vmatpush1.bf16.msra.mxu0 0
        %2811 = vmatprep.subr.bf16.mxu0 0
        %2812 = vmatpush1.bf16.msra.mxu0 0
        %2813 = vmatprep.subr.bf16.mxu0 %v2718
        %2814 = vmatpush1.bf16.msra.mxu0 %v2717
        %2815 = vmatprep.subr.bf16.mxu0 0
        %2816 = vmatpush2.bf16.msra.mxu0 0
        %2817 = vmatprep.subr.bf16.mxu0 0
        %2818 = vmatpush2.bf16.msra.mxu0 0
        %2819 = vmatprep.subr.bf16.mxu0 0
        %2820 = vmatpush2.bf16.msra.mxu0 0
        %2821 = vmatprep.subr.bf16.mxu0 0
        %2822 = vmatpush2.bf16.msra.mxu0 0
        %2823 = vmatprep.subr.bf16.mxu0 0
        %2824 = vmatpush2.bf16.msra.mxu0 0
        %2825 = vmatprep.subr.bf16.mxu0 0
        %2826 = vmatpush2.bf16.msra.mxu0 0
        %2827 = vmatprep.subr.bf16.mxu0 0
        %2828 = vmatpush2.bf16.msra.mxu0 0
        %2829 = vmatprep.subr.bf16.mxu0 0
        %2830 = vmatpush2.bf16.msra.mxu0 0
        %2831 = vmatprep.mubr.bf16.mxu0 0
        %2832 = vmatmul.mubr.bf16.gmra.mxu0 %v2752
        %v2833 = vpop.f32.mrf.mxu0
        %v2834 = vadd.f32 0.0, %v2833
        %v2835 = vpop.f32.mrf.mxu0
        %v2836 = vadd.f32 0.0, %v2835
        %v2837 = vpop.f32.mrf.mxu0
        %v2838 = vadd.f32 0.0, %v2837
        %v2839 = vpop.f32.mrf.mxu0
        %v2840 = vadd.f32 0.0, %v2839
        %2841 = vmatprep.mubr.bf16.mxu0 0
        %2842 = vmatmul.mubr.bf16.gmra.mxu0 %v2755
        %v2843 = vpop.f32.mrf.mxu0
        %v2844 = vadd.f32 0.0, %v2843
        %v2845 = vpop.f32.mrf.mxu0
        %v2846 = vadd.f32 0.0, %v2845
        %v2847 = vpop.f32.mrf.mxu0
        %v2848 = vadd.f32 0.0, %v2847
        %v2849 = vpop.f32.mrf.mxu0
        %v2850 = vadd.f32 0.0, %v2849
        %2851 = vmatprep.mubr.bf16.mxu0 0
        %2852 = vmatmul.mubr.bf16.gmra.mxu0 %v2758
        %v2853 = vpop.f32.mrf.mxu0
        %v2854 = vadd.f32 0.0, %v2853
        %v2855 = vpop.f32.mrf.mxu0
        %v2856 = vadd.f32 0.0, %v2855
        %v2857 = vpop.f32.mrf.mxu0
        %v2858 = vadd.f32 0.0, %v2857
        %v2859 = vpop.f32.mrf.mxu0
        %v2860 = vadd.f32 0.0, %v2859
        %2861 = vmatprep.mubr.bf16.mxu0 0
        %2862 = vmatmul.mubr.bf16.gmra.mxu0 %v2761
        %v2863 = vpop.f32.mrf.mxu0
        %v2864 = vadd.f32 0.0, %v2863
        %v2865 = vpop.f32.mrf.mxu0
        %v2866 = vadd.f32 0.0, %v2865
        %v2867 = vpop.f32.mrf.mxu0
        %v2868 = vadd.f32 0.0, %v2867
        %v2869 = vpop.f32.mrf.mxu0
        %v2870 = vadd.f32 0.0, %v2869
        %2871 = vmatprep.mubr.bf16.mxu0 0
        %2872 = vmatmul.mubr.bf16.gmra.mxu0 %v2764
        %v2873 = vpop.f32.mrf.mxu0
        %v2874 = vadd.f32 0.0, %v2873
        %v2875 = vpop.f32.mrf.mxu0
        %v2876 = vadd.f32 0.0, %v2875
        %v2877 = vpop.f32.mrf.mxu0
        %v2878 = vadd.f32 0.0, %v2877
        %v2879 = vpop.f32.mrf.mxu0
        %v2880 = vadd.f32 0.0, %v2879
        %2881 = vmatprep.mubr.bf16.mxu0 0
        %2882 = vmatmul.mubr.bf16.gmra.mxu0 %v2767
        %v2883 = vpop.f32.mrf.mxu0
        %v2884 = vadd.f32 0.0, %v2883
        %v2885 = vpop.f32.mrf.mxu0
        %v2886 = vadd.f32 0.0, %v2885
        %v2887 = vpop.f32.mrf.mxu0
        %v2888 = vadd.f32 0.0, %v2887
        %v2889 = vpop.f32.mrf.mxu0
        %v2890 = vadd.f32 0.0, %v2889
        %2891 = vmatprep.mubr.bf16.mxu0 0
        %2892 = vmatmul.mubr.bf16.gmra.mxu0 %v2770
        %v2893 = vpop.f32.mrf.mxu0
        %v2894 = vadd.f32 0.0, %v2893
        %v2895 = vpop.f32.mrf.mxu0
        %v2896 = vadd.f32 0.0, %v2895
        %v2897 = vpop.f32.mrf.mxu0
        %v2898 = vadd.f32 0.0, %v2897
        %v2899 = vpop.f32.mrf.mxu0
        %v2900 = vadd.f32 0.0, %v2899
        %2901 = vmatprep.mubr.bf16.mxu0 0
        %2902 = vmatmul.mubr.bf16.gmra.mxu0 %v2773
        %v2903 = vpop.f32.mrf.mxu0
        %v2904 = vadd.f32 0.0, %v2903
        %v2905 = vpop.f32.mrf.mxu0
        %v2906 = vadd.f32 0.0, %v2905
        %v2907 = vpop.f32.mrf.mxu0
        %v2908 = vadd.f32 0.0, %v2907
        %v2909 = vpop.f32.mrf.mxu0
        %v2910 = vadd.f32 0.0, %v2909
        %2911 = vmatprep.mubr.bf16.mxu0 0
        %2912 = vmatmul.mubr.bf16.gmra.mxu0 %v2776
        %v2913 = vpop.f32.mrf.mxu0
        %v2914 = vadd.f32 0.0, %v2913
        %v2915 = vpop.f32.mrf.mxu0
        %v2916 = vadd.f32 0.0, %v2915
        %v2917 = vpop.f32.mrf.mxu0
        %v2918 = vadd.f32 0.0, %v2917
        %v2919 = vpop.f32.mrf.mxu0
        %v2920 = vadd.f32 0.0, %v2919
        %2921 = vmatprep.mubr.bf16.mxu0 0
        %2922 = vmatmul.mubr.bf16.gmra.mxu0 %v2779
        %v2923 = vpop.f32.mrf.mxu0
        %v2924 = vadd.f32 0.0, %v2923
        %v2925 = vpop.f32.mrf.mxu0
        %v2926 = vadd.f32 0.0, %v2925
        %v2927 = vpop.f32.mrf.mxu0
        %v2928 = vadd.f32 0.0, %v2927
        %v2929 = vpop.f32.mrf.mxu0
        %v2930 = vadd.f32 0.0, %v2929
        %2931 = vmatprep.mubr.bf16.mxu0 0
        %2932 = vmatmul.mubr.bf16.gmra.mxu0 %v2782
        %v2933 = vpop.f32.mrf.mxu0
        %v2934 = vadd.f32 0.0, %v2933
        %v2935 = vpop.f32.mrf.mxu0
        %v2936 = vadd.f32 0.0, %v2935
        %v2937 = vpop.f32.mrf.mxu0
        %v2938 = vadd.f32 0.0, %v2937
        %v2939 = vpop.f32.mrf.mxu0
        %v2940 = vadd.f32 0.0, %v2939
        %2941 = vmatprep.mubr.bf16.mxu0 0
        %2942 = vmatmul.mubr.bf16.gmra.mxu0 %v2785
        %v2943 = vpop.f32.mrf.mxu0
        %v2944 = vadd.f32 0.0, %v2943
        %v2945 = vpop.f32.mrf.mxu0
        %v2946 = vadd.f32 0.0, %v2945
        %v2947 = vpop.f32.mrf.mxu0
        %v2948 = vadd.f32 0.0, %v2947
        %v2949 = vpop.f32.mrf.mxu0
        %v2950 = vadd.f32 0.0, %v2949
        %2951 = vmatprep.mubr.bf16.mxu0 0
        %2952 = vmatmul.mubr.bf16.gmra.mxu0 %v2788
        %v2953 = vpop.f32.mrf.mxu0
        %v2954 = vadd.f32 0.0, %v2953
        %v2955 = vpop.f32.mrf.mxu0
        %v2956 = vadd.f32 0.0, %v2955
        %v2957 = vpop.f32.mrf.mxu0
        %v2958 = vadd.f32 0.0, %v2957
        %v2959 = vpop.f32.mrf.mxu0
        %v2960 = vadd.f32 0.0, %v2959
        %2961 = vmatprep.mubr.bf16.mxu0 0
        %2962 = vmatmul.mubr.bf16.gmra.mxu0 %v2791
        %v2963 = vpop.f32.mrf.mxu0
        %v2964 = vadd.f32 0.0, %v2963
        %v2965 = vpop.f32.mrf.mxu0
        %v2966 = vadd.f32 0.0, %v2965
        %v2967 = vpop.f32.mrf.mxu0
        %v2968 = vadd.f32 0.0, %v2967
        %v2969 = vpop.f32.mrf.mxu0
        %v2970 = vadd.f32 0.0, %v2969
        %2971 = vmatprep.mubr.bf16.mxu0 0
        %2972 = vmatmul.mubr.bf16.gmra.mxu0 %v2794
        %v2973 = vpop.f32.mrf.mxu0
        %v2974 = vadd.f32 0.0, %v2973
        %v2975 = vpop.f32.mrf.mxu0
        %v2976 = vadd.f32 0.0, %v2975
        %v2977 = vpop.f32.mrf.mxu0
        %v2978 = vadd.f32 0.0, %v2977
        %v2979 = vpop.f32.mrf.mxu0
        %v2980 = vadd.f32 0.0, %v2979
        %2981 = vmatprep.mubr.bf16.mxu0 0
        %2982 = vmatmul.mubr.bf16.gmra.mxu0 %v2797
        %v2983 = vpop.f32.mrf.mxu0
        %v2984 = vadd.f32 0.0, %v2983
        %v2985 = vpop.f32.mrf.mxu0
        %v2986 = vadd.f32 0.0, %v2985
        %v2987 = vpop.f32.mrf.mxu0
        %v2988 = vadd.f32 0.0, %v2987
        %v2989 = vpop.f32.mrf.mxu0
        %v2990 = vadd.f32 0.0, %v2989
        %2991 = vdwg.mxu0
        %v2992 = vmax.f32 %v2834, %v2836
        %2993 = vmax.xlane.f32.xlu0 %v2992
        %v2994 = vpop.xlane.xlu0 %2993
        %v2995 = vmax.f32 %v2838, %v2840
        %2996 = vmax.xlane.f32.xlu0 %v2995
        %v2997 = vpop.xlane.xlu0 %2996
        %v2998 = vmax.f32 %v2844, %v2846
        %2999 = vmax.xlane.f32.xlu0 %v2998
        %v3000 = vpop.xlane.xlu0 %2999
        %v3001 = vmax.f32 %v2848, %v2850
        %3002 = vmax.xlane.f32.xlu0 %v3001
        %v3003 = vpop.xlane.xlu0 %3002
        %v3004 = vmax.f32 %v2854, %v2856
        %3005 = vmax.xlane.f32.xlu0 %v3004
        %v3006 = vpop.xlane.xlu0 %3005
        %v3007 = vmax.f32 %v2858, %v2860
        %3008 = vmax.xlane.f32.xlu0 %v3007
        %v3009 = vpop.xlane.xlu0 %3008
        %v3010 = vmax.f32 %v2864, %v2866
        %3011 = vmax.xlane.f32.xlu0 %v3010
        %v3012 = vpop.xlane.xlu0 %3011
        %v3013 = vmax.f32 %v2868, %v2870
        %3014 = vmax.xlane.f32.xlu0 %v3013
        %v3015 = vpop.xlane.xlu0 %3014
        %v3016 = vmax.f32 %v2874, %v2876
        %3017 = vmax.xlane.f32.xlu0 %v3016
        %v3018 = vpop.xlane.xlu0 %3017
        %v3019 = vmax.f32 %v2878, %v2880
        %3020 = vmax.xlane.f32.xlu0 %v3019
        %v3021 = vpop.xlane.xlu0 %3020
        %v3022 = vmax.f32 %v2884, %v2886
        %3023 = vmax.xlane.f32.xlu0 %v3022
        %v3024 = vpop.xlane.xlu0 %3023
        %v3025 = vmax.f32 %v2888, %v2890
        %3026 = vmax.xlane.f32.xlu0 %v3025
        %v3027 = vpop.xlane.xlu0 %3026
        %v3028 = vmax.f32 %v2894, %v2896
        %3029 = vmax.xlane.f32.xlu0 %v3028
        %v3030 = vpop.xlane.xlu0 %3029
        %v3031 = vmax.f32 %v2898, %v2900
        %3032 = vmax.xlane.f32.xlu0 %v3031
        %v3033 = vpop.xlane.xlu0 %3032
        %v3034 = vmax.f32 %v2904, %v2906
        %3035 = vmax.xlane.f32.xlu0 %v3034
        %v3036 = vpop.xlane.xlu0 %3035
        %v3037 = vmax.f32 %v2908, %v2910
        %3038 = vmax.xlane.f32.xlu0 %v3037
        %v3039 = vpop.xlane.xlu0 %3038
        %v3040 = vmax.f32 %v2914, %v2916
        %3041 = vmax.xlane.f32.xlu0 %v3040
        %v3042 = vpop.xlane.xlu0 %3041
        %v3043 = vmax.f32 %v2918, %v2920
        %3044 = vmax.xlane.f32.xlu0 %v3043
        %v3045 = vpop.xlane.xlu0 %3044
        %v3046 = vmax.f32 %v2924, %v2926
        %3047 = vmax.xlane.f32.xlu0 %v3046
        %v3048 = vpop.xlane.xlu0 %3047
        %v3049 = vmax.f32 %v2928, %v2930
        %3050 = vmax.xlane.f32.xlu0 %v3049
        %v3051 = vpop.xlane.xlu0 %3050
        %v3052 = vmax.f32 %v2934, %v2936
        %3053 = vmax.xlane.f32.xlu0 %v3052
        %v3054 = vpop.xlane.xlu0 %3053
        %v3055 = vmax.f32 %v2938, %v2940
        %3056 = vmax.xlane.f32.xlu0 %v3055
        %v3057 = vpop.xlane.xlu0 %3056
        %v3058 = vmax.f32 %v2944, %v2946
        %3059 = vmax.xlane.f32.xlu0 %v3058
        %v3060 = vpop.xlane.xlu0 %3059
        %v3061 = vmax.f32 %v2948, %v2950
        %3062 = vmax.xlane.f32.xlu0 %v3061
        %v3063 = vpop.xlane.xlu0 %3062
        %v3064 = vmax.f32 %v2954, %v2956
        %3065 = vmax.xlane.f32.xlu0 %v3064
        %v3066 = vpop.xlane.xlu0 %3065
        %v3067 = vmax.f32 %v2958, %v2960
        %3068 = vmax.xlane.f32.xlu0 %v3067
        %v3069 = vpop.xlane.xlu0 %3068
        %v3070 = vmax.f32 %v2964, %v2966
        %3071 = vmax.xlane.f32.xlu0 %v3070
        %v3072 = vpop.xlane.xlu0 %3071
        %v3073 = vmax.f32 %v2968, %v2970
        %3074 = vmax.xlane.f32.xlu0 %v3073
        %v3075 = vpop.xlane.xlu0 %3074
        %v3076 = vmax.f32 %v2974, %v2976
        %3077 = vmax.xlane.f32.xlu0 %v3076
        %v3078 = vpop.xlane.xlu0 %3077
        %v3079 = vmax.f32 %v2978, %v2980
        %3080 = vmax.xlane.f32.xlu0 %v3079
        %v3081 = vpop.xlane.xlu0 %3080
        %v3082 = vmax.f32 %v2984, %v2986
        %3083 = vmax.xlane.f32.xlu0 %v3082
        %v3084 = vpop.xlane.xlu0 %3083
        %v3085 = vmax.f32 %v2988, %v2990
        %3086 = vmax.xlane.f32.xlu0 %v3085
        %v3087 = vpop.xlane.xlu0 %3086
        %v3088 = vsub.f32 %v2834, %v2994
        %v3089 = vsub.f32 %v2836, %v2994
        %v3090 = vsub.f32 %v2838, %v2997
        %v3091 = vsub.f32 %v2840, %v2997
        %v3092 = vsub.f32 %v2844, %v3000
        %v3093 = vsub.f32 %v2846, %v3000
        %v3094 = vsub.f32 %v2848, %v3003
        %v3095 = vsub.f32 %v2850, %v3003
        %v3096 = vsub.f32 %v2854, %v3006
        %v3097 = vsub.f32 %v2856, %v3006
        %v3098 = vsub.f32 %v2858, %v3009
        %v3099 = vsub.f32 %v2860, %v3009
        %v3100 = vsub.f32 %v2864, %v3012
        %v3101 = vsub.f32 %v2866, %v3012
        %v3102 = vsub.f32 %v2868, %v3015
        %v3103 = vsub.f32 %v2870, %v3015
        %v3104 = vsub.f32 %v2874, %v3018
        %v3105 = vsub.f32 %v2876, %v3018
        %v3106 = vsub.f32 %v2878, %v3021
        %v3107 = vsub.f32 %v2880, %v3021
        %v3108 = vsub.f32 %v2884, %v3024
        %v3109 = vsub.f32 %v2886, %v3024
        %v3110 = vsub.f32 %v2888, %v3027
        %v3111 = vsub.f32 %v2890, %v3027
        %v3112 = vsub.f32 %v2894, %v3030
        %v3113 = vsub.f32 %v2896, %v3030
        %v3114 = vsub.f32 %v2898, %v3033
        %v3115 = vsub.f32 %v2900, %v3033
        %v3116 = vsub.f32 %v2904, %v3036
        %v3117 = vsub.f32 %v2906, %v3036
        %v3118 = vsub.f32 %v2908, %v3039
        %v3119 = vsub.f32 %v2910, %v3039
        %v3120 = vsub.f32 %v2914, %v3042
        %v3121 = vsub.f32 %v2916, %v3042
        %v3122 = vsub.f32 %v2918, %v3045
        %v3123 = vsub.f32 %v2920, %v3045
        %v3124 = vsub.f32 %v2924, %v3048
        %v3125 = vsub.f32 %v2926, %v3048
        %v3126 = vsub.f32 %v2928, %v3051
        %v3127 = vsub.f32 %v2930, %v3051
        %v3128 = vsub.f32 %v2934, %v3054
        %v3129 = vsub.f32 %v2936, %v3054
        %v3130 = vsub.f32 %v2938, %v3057
        %v3131 = vsub.f32 %v2940, %v3057
        %v3132 = vsub.f32 %v2944, %v3060
        %v3133 = vsub.f32 %v2946, %v3060
        %v3134 = vsub.f32 %v2948, %v3063
        %v3135 = vsub.f32 %v2950, %v3063
        %v3136 = vsub.f32 %v2954, %v3066
        %v3137 = vsub.f32 %v2956, %v3066
        %v3138 = vsub.f32 %v2958, %v3069
        %v3139 = vsub.f32 %v2960, %v3069
        %v3140 = vsub.f32 %v2964, %v3072
        %v3141 = vsub.f32 %v2966, %v3072
        %v3142 = vsub.f32 %v2968, %v3075
        %v3143 = vsub.f32 %v2970, %v3075
        %v3144 = vsub.f32 %v2974, %v3078
        %v3145 = vsub.f32 %v2976, %v3078
        %v3146 = vsub.f32 %v2978, %v3081
        %v3147 = vsub.f32 %v2980, %v3081
        %v3148 = vsub.f32 %v2984, %v3084
        %v3149 = vsub.f32 %v2986, %v3084
        %v3150 = vsub.f32 %v2988, %v3087
        %v3151 = vsub.f32 %v2990, %v3087
        %v3152 = vmul.f32 %v3088, 1.442695
        %v3153 = vpow.pop %v3152
        %v3154 = vmul.f32 %v3089, 1.442695
        %v3155 = vpow.pop %v3154
        %v3156 = vmul.f32 %v3090, 1.442695
        %v3157 = vpow.pop %v3156
        %v3158 = vmul.f32 %v3091, 1.442695
        %v3159 = vpow.pop %v3158
        %v3160 = vmul.f32 %v3092, 1.442695
        %v3161 = vpow.pop %v3160
        %v3162 = vmul.f32 %v3093, 1.442695
        %v3163 = vpow.pop %v3162
        %v3164 = vmul.f32 %v3094, 1.442695
        %v3165 = vpow.pop %v3164
        %v3166 = vmul.f32 %v3095, 1.442695
        %v3167 = vpow.pop %v3166
        %v3168 = vmul.f32 %v3096, 1.442695
        %v3169 = vpow.pop %v3168
        %v3170 = vmul.f32 %v3097, 1.442695
        %v3171 = vpow.pop %v3170
        %v3172 = vmul.f32 %v3098, 1.442695
        %v3173 = vpow.pop %v3172
        %v3174 = vmul.f32 %v3099, 1.442695
        %v3175 = vpow.pop %v3174
        %v3176 = vmul.f32 %v3100, 1.442695
        %v3177 = vpow.pop %v3176
        %v3178 = vmul.f32 %v3101, 1.442695
        %v3179 = vpow.pop %v3178
        %v3180 = vmul.f32 %v3102, 1.442695
        %v3181 = vpow.pop %v3180
        %v3182 = vmul.f32 %v3103, 1.442695
        %v3183 = vpow.pop %v3182
        %v3184 = vmul.f32 %v3104, 1.442695
        %v3185 = vpow.pop %v3184
        %v3186 = vmul.f32 %v3105, 1.442695
        %v3187 = vpow.pop %v3186
        %v3188 = vmul.f32 %v3106, 1.442695
        %v3189 = vpow.pop %v3188
        %v3190 = vmul.f32 %v3107, 1.442695
        %v3191 = vpow.pop %v3190
        %v3192 = vmul.f32 %v3108, 1.442695
        %v3193 = vpow.pop %v3192
        %v3194 = vmul.f32 %v3109, 1.442695
        %v3195 = vpow.pop %v3194
        %v3196 = vmul.f32 %v3110, 1.442695
        %v3197 = vpow.pop %v3196
        %v3198 = vmul.f32 %v3111, 1.442695
        %v3199 = vpow.pop %v3198
        %v3200 = vmul.f32 %v3112, 1.442695
        %v3201 = vpow.pop %v3200
        %v3202 = vmul.f32 %v3113, 1.442695
        %v3203 = vpow.pop %v3202
        %v3204 = vmul.f32 %v3114, 1.442695
        %v3205 = vpow.pop %v3204
        %v3206 = vmul.f32 %v3115, 1.442695
        %v3207 = vpow.pop %v3206
        %v3208 = vmul.f32 %v3116, 1.442695
        %v3209 = vpow.pop %v3208
        %v3210 = vmul.f32 %v3117, 1.442695
        %v3211 = vpow.pop %v3210
        %v3212 = vmul.f32 %v3118, 1.442695
        %v3213 = vpow.pop %v3212
        %v3214 = vmul.f32 %v3119, 1.442695
        %v3215 = vpow.pop %v3214
        %v3216 = vmul.f32 %v3120, 1.442695
        %v3217 = vpow.pop %v3216
        %v3218 = vmul.f32 %v3121, 1.442695
        %v3219 = vpow.pop %v3218
        %v3220 = vmul.f32 %v3122, 1.442695
        %v3221 = vpow.pop %v3220
        %v3222 = vmul.f32 %v3123, 1.442695
        %v3223 = vpow.pop %v3222
        %v3224 = vmul.f32 %v3124, 1.442695
        %v3225 = vpow.pop %v3224
        %v3226 = vmul.f32 %v3125, 1.442695
        %v3227 = vpow.pop %v3226
        %v3228 = vmul.f32 %v3126, 1.442695
        %v3229 = vpow.pop %v3228
        %v3230 = vmul.f32 %v3127, 1.442695
        %v3231 = vpow.pop %v3230
        %v3232 = vmul.f32 %v3128, 1.442695
        %v3233 = vpow.pop %v3232
        %v3234 = vmul.f32 %v3129, 1.442695
        %v3235 = vpow.pop %v3234
        %v3236 = vmul.f32 %v3130, 1.442695
        %v3237 = vpow.pop %v3236
        %v3238 = vmul.f32 %v3131, 1.442695
        %v3239 = vpow.pop %v3238
        %v3240 = vmul.f32 %v3132, 1.442695
        %v3241 = vpow.pop %v3240
        %v3242 = vmul.f32 %v3133, 1.442695
        %v3243 = vpow.pop %v3242
        %v3244 = vmul.f32 %v3134, 1.442695
        %v3245 = vpow.pop %v3244
        %v3246 = vmul.f32 %v3135, 1.442695
        %v3247 = vpow.pop %v3246
        %v3248 = vmul.f32 %v3136, 1.442695
        %v3249 = vpow.pop %v3248
        %v3250 = vmul.f32 %v3137, 1.442695
        %v3251 = vpow.pop %v3250
        %v3252 = vmul.f32 %v3138, 1.442695
        %v3253 = vpow.pop %v3252
        %v3254 = vmul.f32 %v3139, 1.442695
        %v3255 = vpow.pop %v3254
        %v3256 = vmul.f32 %v3140, 1.442695
        %v3257 = vpow.pop %v3256
        %v3258 = vmul.f32 %v3141, 1.442695
        %v3259 = vpow.pop %v3258
        %v3260 = vmul.f32 %v3142, 1.442695
        %v3261 = vpow.pop %v3260
        %v3262 = vmul.f32 %v3143, 1.442695
        %v3263 = vpow.pop %v3262
        %v3264 = vmul.f32 %v3144, 1.442695
        %v3265 = vpow.pop %v3264
        %v3266 = vmul.f32 %v3145, 1.442695
        %v3267 = vpow.pop %v3266
        %v3268 = vmul.f32 %v3146, 1.442695
        %v3269 = vpow.pop %v3268
        %v3270 = vmul.f32 %v3147, 1.442695
        %v3271 = vpow.pop %v3270
        %v3272 = vmul.f32 %v3148, 1.442695
        %v3273 = vpow.pop %v3272
        %v3274 = vmul.f32 %v3149, 1.442695
        %v3275 = vpow.pop %v3274
        %v3276 = vmul.f32 %v3150, 1.442695
        %v3277 = vpow.pop %v3276
        %v3278 = vmul.f32 %v3151, 1.442695
        %v3279 = vpow.pop %v3278
        %v3280 = vadd.f32 %v3153, %v3155
        %3281 = vadd.xlane.f32.xlu0 %v3280
        %v3282 = vpop.xlane.xlu0 %3281
        %v3283 = vadd.f32 %v3157, %v3159
        %3284 = vadd.xlane.f32.xlu0 %v3283
        %v3285 = vpop.xlane.xlu0 %3284
        %v3286 = vadd.f32 %v3161, %v3163
        %3287 = vadd.xlane.f32.xlu0 %v3286
        %v3288 = vpop.xlane.xlu0 %3287
        %v3289 = vadd.f32 %v3165, %v3167
        %3290 = vadd.xlane.f32.xlu0 %v3289
        %v3291 = vpop.xlane.xlu0 %3290
        %v3292 = vadd.f32 %v3169, %v3171
        %3293 = vadd.xlane.f32.xlu0 %v3292
        %v3294 = vpop.xlane.xlu0 %3293
        %v3295 = vadd.f32 %v3173, %v3175
        %3296 = vadd.xlane.f32.xlu0 %v3295
        %v3297 = vpop.xlane.xlu0 %3296
        %v3298 = vadd.f32 %v3177, %v3179
        %3299 = vadd.xlane.f32.xlu0 %v3298
        %v3300 = vpop.xlane.xlu0 %3299
        %v3301 = vadd.f32 %v3181, %v3183
        %3302 = vadd.xlane.f32.xlu0 %v3301
        %v3303 = vpop.xlane.xlu0 %3302
        %v3304 = vadd.f32 %v3185, %v3187
        %3305 = vadd.xlane.f32.xlu0 %v3304
        %v3306 = vpop.xlane.xlu0 %3305
        %v3307 = vadd.f32 %v3189, %v3191
        %3308 = vadd.xlane.f32.xlu0 %v3307
        %v3309 = vpop.xlane.xlu0 %3308
        %v3310 = vadd.f32 %v3193, %v3195
        %3311 = vadd.xlane.f32.xlu0 %v3310
        %v3312 = vpop.xlane.xlu0 %3311
        %v3313 = vadd.f32 %v3197, %v3199
        %3314 = vadd.xlane.f32.xlu0 %v3313
        %v3315 = vpop.xlane.xlu0 %3314
        %v3316 = vadd.f32 %v3201, %v3203
        %3317 = vadd.xlane.f32.xlu0 %v3316
        %v3318 = vpop.xlane.xlu0 %3317
        %v3319 = vadd.f32 %v3205, %v3207
        %3320 = vadd.xlane.f32.xlu0 %v3319
        %v3321 = vpop.xlane.xlu0 %3320
        %v3322 = vadd.f32 %v3209, %v3211
        %3323 = vadd.xlane.f32.xlu0 %v3322
        %v3324 = vpop.xlane.xlu0 %3323
        %v3325 = vadd.f32 %v3213, %v3215
        %3326 = vadd.xlane.f32.xlu0 %v3325
        %v3327 = vpop.xlane.xlu0 %3326
        %v3328 = vadd.f32 %v3217, %v3219
        %3329 = vadd.xlane.f32.xlu0 %v3328
        %v3330 = vpop.xlane.xlu0 %3329
        %v3331 = vadd.f32 %v3221, %v3223
        %3332 = vadd.xlane.f32.xlu0 %v3331
        %v3333 = vpop.xlane.xlu0 %3332
        %v3334 = vadd.f32 %v3225, %v3227
        %3335 = vadd.xlane.f32.xlu0 %v3334
        %v3336 = vpop.xlane.xlu0 %3335
        %v3337 = vadd.f32 %v3229, %v3231
        %3338 = vadd.xlane.f32.xlu0 %v3337
        %v3339 = vpop.xlane.xlu0 %3338
        %v3340 = vadd.f32 %v3233, %v3235
        %3341 = vadd.xlane.f32.xlu0 %v3340
        %v3342 = vpop.xlane.xlu0 %3341
        %v3343 = vadd.f32 %v3237, %v3239
        %3344 = vadd.xlane.f32.xlu0 %v3343
        %v3345 = vpop.xlane.xlu0 %3344
        %v3346 = vadd.f32 %v3241, %v3243
        %3347 = vadd.xlane.f32.xlu0 %v3346
        %v3348 = vpop.xlane.xlu0 %3347
        %v3349 = vadd.f32 %v3245, %v3247
        %3350 = vadd.xlane.f32.xlu0 %v3349
        %v3351 = vpop.xlane.xlu0 %3350
        %v3352 = vadd.f32 %v3249, %v3251
        %3353 = vadd.xlane.f32.xlu0 %v3352
        %v3354 = vpop.xlane.xlu0 %3353
        %v3355 = vadd.f32 %v3253, %v3255
        %3356 = vadd.xlane.f32.xlu0 %v3355
        %v3357 = vpop.xlane.xlu0 %3356
        %v3358 = vadd.f32 %v3257, %v3259
        %3359 = vadd.xlane.f32.xlu0 %v3358
        %v3360 = vpop.xlane.xlu0 %3359
        %v3361 = vadd.f32 %v3261, %v3263
        %3362 = vadd.xlane.f32.xlu0 %v3361
        %v3363 = vpop.xlane.xlu0 %3362
        %v3364 = vadd.f32 %v3265, %v3267
        %3365 = vadd.xlane.f32.xlu0 %v3364
        %v3366 = vpop.xlane.xlu0 %3365
        %v3367 = vadd.f32 %v3269, %v3271
        %3368 = vadd.xlane.f32.xlu0 %v3367
        %v3369 = vpop.xlane.xlu0 %3368
        %v3370 = vadd.f32 %v3273, %v3275
        %3371 = vadd.xlane.f32.xlu0 %v3370
        %v3372 = vpop.xlane.xlu0 %3371
        %v3373 = vadd.f32 %v3277, %v3279
        %3374 = vadd.xlane.f32.xlu0 %v3373
        %v3375 = vpop.xlane.xlu0 %3374
        %v3376 = vrcp.pop %v3282
        %v3377 = vrcp.pop %v3285
        %v3378 = vrcp.pop %v3288
        %v3379 = vrcp.pop %v3291
        %v3380 = vrcp.pop %v3294
        %v3381 = vrcp.pop %v3297
        %v3382 = vrcp.pop %v3300
        %v3383 = vrcp.pop %v3303
        %v3384 = vrcp.pop %v3306
        %v3385 = vrcp.pop %v3309
        %v3386 = vrcp.pop %v3312
        %v3387 = vrcp.pop %v3315
        %v3388 = vrcp.pop %v3318
        %v3389 = vrcp.pop %v3321
        %v3390 = vrcp.pop %v3324
        %v3391 = vrcp.pop %v3327
        %v3392 = vrcp.pop %v3330
        %v3393 = vrcp.pop %v3333
        %v3394 = vrcp.pop %v3336
        %v3395 = vrcp.pop %v3339
        %v3396 = vrcp.pop %v3342
        %v3397 = vrcp.pop %v3345
        %v3398 = vrcp.pop %v3348
        %v3399 = vrcp.pop %v3351
        %v3400 = vrcp.pop %v3354
        %v3401 = vrcp.pop %v3357
        %v3402 = vrcp.pop %v3360
        %v3403 = vrcp.pop %v3363
        %v3404 = vrcp.pop %v3366
        %v3405 = vrcp.pop %v3369
        %v3406 = vrcp.pop %v3372
        %v3407 = vrcp.pop %v3375
        %v3408 = vmul.f32 %v3153, %v3376
        %v3409 = vmul.f32 %v3155, %v3376
        %v3410 = vmul.f32 %v3157, %v3377
        %v3411 = vmul.f32 %v3159, %v3377
        %v3412 = vmul.f32 %v3161, %v3378
        %v3413 = vmul.f32 %v3163, %v3378
        %v3414 = vmul.f32 %v3165, %v3379
        %v3415 = vmul.f32 %v3167, %v3379
        %v3416 = vmul.f32 %v3169, %v3380
        %v3417 = vmul.f32 %v3171, %v3380
        %v3418 = vmul.f32 %v3173, %v3381
        %v3419 = vmul.f32 %v3175, %v3381
        %v3420 = vmul.f32 %v3177, %v3382
        %v3421 = vmul.f32 %v3179, %v3382
        %v3422 = vmul.f32 %v3181, %v3383
        %v3423 = vmul.f32 %v3183, %v3383
        %v3424 = vmul.f32 %v3185, %v3384
        %v3425 = vmul.f32 %v3187, %v3384
        %v3426 = vmul.f32 %v3189, %v3385
        %v3427 = vmul.f32 %v3191, %v3385
        %v3428 = vmul.f32 %v3193, %v3386
        %v3429 = vmul.f32 %v3195, %v3386
        %v3430 = vmul.f32 %v3197, %v3387
        %v3431 = vmul.f32 %v3199, %v3387
        %v3432 = vmul.f32 %v3201, %v3388
        %v3433 = vmul.f32 %v3203, %v3388
        %v3434 = vmul.f32 %v3205, %v3389
        %v3435 = vmul.f32 %v3207, %v3389
        %v3436 = vmul.f32 %v3209, %v3390
        %v3437 = vmul.f32 %v3211, %v3390
        %v3438 = vmul.f32 %v3213, %v3391
        %v3439 = vmul.f32 %v3215, %v3391
        %v3440 = vmul.f32 %v3217, %v3392
        %v3441 = vmul.f32 %v3219, %v3392
        %v3442 = vmul.f32 %v3221, %v3393
        %v3443 = vmul.f32 %v3223, %v3393
        %v3444 = vmul.f32 %v3225, %v3394
        %v3445 = vmul.f32 %v3227, %v3394
        %v3446 = vmul.f32 %v3229, %v3395
        %v3447 = vmul.f32 %v3231, %v3395
        %v3448 = vmul.f32 %v3233, %v3396
        %v3449 = vmul.f32 %v3235, %v3396
        %v3450 = vmul.f32 %v3237, %v3397
        %v3451 = vmul.f32 %v3239, %v3397
        %v3452 = vmul.f32 %v3241, %v3398
        %v3453 = vmul.f32 %v3243, %v3398
        %v3454 = vmul.f32 %v3245, %v3399
        %v3455 = vmul.f32 %v3247, %v3399
        %v3456 = vmul.f32 %v3249, %v3400
        %v3457 = vmul.f32 %v3251, %v3400
        %v3458 = vmul.f32 %v3253, %v3401
        %v3459 = vmul.f32 %v3255, %v3401
        %v3460 = vmul.f32 %v3257, %v3402
        %v3461 = vmul.f32 %v3259, %v3402
        %v3462 = vmul.f32 %v3261, %v3403
        %v3463 = vmul.f32 %v3263, %v3403
        %v3464 = vmul.f32 %v3265, %v3404
        %v3465 = vmul.f32 %v3267, %v3404
        %v3466 = vmul.f32 %v3269, %v3405
        %v3467 = vmul.f32 %v3271, %v3405
        %v3468 = vmul.f32 %v3273, %v3406
        %v3469 = vmul.f32 %v3275, %v3406
        %v3470 = vmul.f32 %v3277, %v3407
        %v3471 = vmul.f32 %v3279, %v3407
        %v3472 = vpack.c.bf16 %v2709, %v2707
        %v3473 = vpack.c.bf16 %v2710, %v2708
        %v3474 = vpack.c.bf16 %v3410, %v3408
        %v3475 = vpack.c.bf16 %v3411, %v3409
        %v3476 = vpack.c.bf16 %v3414, %v3412
        %v3477 = vpack.c.bf16 %v3415, %v3413
        %v3478 = vpack.c.bf16 %v3418, %v3416
        %v3479 = vpack.c.bf16 %v3419, %v3417
        %v3480 = vpack.c.bf16 %v3422, %v3420
        %v3481 = vpack.c.bf16 %v3423, %v3421
        %v3482 = vpack.c.bf16 %v3426, %v3424
        %v3483 = vpack.c.bf16 %v3427, %v3425
        %v3484 = vpack.c.bf16 %v3430, %v3428
        %v3485 = vpack.c.bf16 %v3431, %v3429
        %v3486 = vpack.c.bf16 %v3434, %v3432
        %v3487 = vpack.c.bf16 %v3435, %v3433
        %v3488 = vpack.c.bf16 %v3438, %v3436
        %v3489 = vpack.c.bf16 %v3439, %v3437
        %v3490 = vpack.c.bf16 %v3442, %v3440
        %v3491 = vpack.c.bf16 %v3443, %v3441
        %v3492 = vpack.c.bf16 %v3446, %v3444
        %v3493 = vpack.c.bf16 %v3447, %v3445
        %v3494 = vpack.c.bf16 %v3450, %v3448
        %v3495 = vpack.c.bf16 %v3451, %v3449
        %v3496 = vpack.c.bf16 %v3454, %v3452
        %v3497 = vpack.c.bf16 %v3455, %v3453
        %v3498 = vpack.c.bf16 %v3458, %v3456
        %v3499 = vpack.c.bf16 %v3459, %v3457
        %v3500 = vpack.c.bf16 %v3462, %v3460
        %v3501 = vpack.c.bf16 %v3463, %v3461
        %v3502 = vpack.c.bf16 %v3466, %v3464
        %v3503 = vpack.c.bf16 %v3467, %v3465
        %v3504 = vpack.c.bf16 %v3470, %v3468
        %v3505 = vpack.c.bf16 %v3471, %v3469
        %3506 = vmatprep.subr.bf16.mxu0 %v3489
        %3507 = vmatpush1.bf16.xpose.msra.mxu0 %v3488
        %3508 = vmatprep.subr.bf16.mxu0 %v3487
        %3509 = vmatpush1.bf16.xpose.msra.mxu0 %v3486
        %3510 = vmatprep.subr.bf16.mxu0 %v3485
        %3511 = vmatpush1.bf16.xpose.msra.mxu0 %v3484
        %3512 = vmatprep.subr.bf16.mxu0 %v3483
        %3513 = vmatpush1.bf16.xpose.msra.mxu0 %v3482
        %3514 = vmatprep.subr.bf16.mxu0 %v3481
        %3515 = vmatpush1.bf16.xpose.msra.mxu0 %v3480
        %3516 = vmatprep.subr.bf16.mxu0 %v3479
        %3517 = vmatpush1.bf16.xpose.msra.mxu0 %v3478
        %3518 = vmatprep.subr.bf16.mxu0 %v3477
        %3519 = vmatpush1.bf16.xpose.msra.mxu0 %v3476
        %3520 = vmatprep.subr.bf16.mxu0 %v3475
        %3521 = vmatpush1.bf16.xpose.msra.mxu0 %v3474
        %3522 = vmatprep.subr.bf16.mxu0 %v3505
        %3523 = vmatpush2.bf16.xpose.msra.mxu0 %v3504
        %3524 = vmatprep.subr.bf16.mxu0 %v3503
        %3525 = vmatpush2.bf16.xpose.msra.mxu0 %v3502
        %3526 = vmatprep.subr.bf16.mxu0 %v3501
        %3527 = vmatpush2.bf16.xpose.msra.mxu0 %v3500
        %3528 = vmatprep.subr.bf16.mxu0 %v3499
        %3529 = vmatpush2.bf16.xpose.msra.mxu0 %v3498
        %3530 = vmatprep.subr.bf16.mxu0 %v3497
        %3531 = vmatpush2.bf16.xpose.msra.mxu0 %v3496
        %3532 = vmatprep.subr.bf16.mxu0 %v3495
        %3533 = vmatpush2.bf16.xpose.msra.mxu0 %v3494
        %3534 = vmatprep.subr.bf16.mxu0 %v3493
        %3535 = vmatpush2.bf16.xpose.msra.mxu0 %v3492
        %3536 = vmatprep.subr.bf16.mxu0 %v3491
        %3537 = vmatpush2.bf16.xpose.msra.mxu0 %v3490
        %3538 = vmatprep.mubr.bf16.mxu0 %v3473
        %3539 = vmatmul.mubr.bf16.gmra.mxu0 %v3472
        %v3540 = vpop.f32.mrf.mxu0
        %v3541 = vadd.f32 0.0, %v3540
        %v3542 = vpop.f32.mrf.mxu0
        %v3543 = vadd.f32 0.0, %v3542
        %v3544 = vpop.f32.mrf.mxu0
        %v3545 = vadd.f32 0.0, %v3544
        %v3546 = vpop.f32.mrf.mxu0
        %v3547 = vadd.f32 0.0, %v3546
        %3548 = vdwg.mxu0
        %3549 = vst [vmem:[%s134 + $0x60] sm:$0xff] %v3541
        %3550 = vst [vmem:[%s134 + $0x68] sm:$0xff] %v3543
        %3551 = vst [vmem:[%s134 + $0x70] sm:$0xff] %v3545
        %3552 = vst [vmem:[%s134 + $0x78] sm:$0xff] %v3547
        %s3553 = sand.u32 %s52, 1
        %s3554 = scalar_lea.sflag [#allocation4], %s3553
        %s3555 = sand.u32 %s52, 1
        %s3556 = smul.addr %s3555, 128
        %s3557 = scalar_lea.vmem [#allocation5], %s3556
        // Predicated region
        $region29: #{qkv_attention.1} parent=23 // pred_check
          %p3558 = pneg %p62
        $region30: #{qkv_attention.1} parent=23 // pred_check_branch
          %3560 = sbr.rel (%p3558) target = $region32
        $region31: #{qkv_attention.1} parent=23 // pred_region
          %s3562 = ssub.s32 2048, 2048
          %3563 = vsyncadd %s3554, %s3562
          %s3564 = smul.addr %s18, 16
          %s3565 = smul.addr %s3564, 128
          %s3566 = scalar_lea.hbm %s1, %s3565
          %s3567 = sshll.u32 %s3557, 4
          %s3568 = int_to_ptr.vmem [resolvable:$true] %s3567
          %3573 = dma.vmem_to_hbm [thread:$0]  %s3568, 2048, %s3566, %s3554, 256, 256, 16
        $region32: #{qkv_attention.1} parent=23 // pred_fallthru
          _
      $region24: #{qkv_attention.1} parent=5 // pred_fallthru
        _
      %p3574 = scmp.le.s32.totalorder 2, %s13
      // Predicated region
      $region33: #{qkv_attention.1} parent=5 // pred_check
        %p3575 = pneg %p3574
      $region34: #{qkv_attention.1} parent=5 // pred_check_branch
        %3577 = sbr.rel (%p3575) target = $region36
      $region35: #{qkv_attention.1} parent=5 // pred_region
        %s3578 = ssub.s32 %s13, 2
        // Predicated region
        $region37: #{qkv_attention.1} parent=35 // pred_check
          %p3579 = pneg %p68
        $region38: #{qkv_attention.1} parent=35 // pred_check_branch
          %3581 = sbr.rel (%p3579) target = $region40
        $region39: #{qkv_attention.1} parent=35 // pred_region
          %s3582 = sand.u32 %s53, 1
          %s3583 = scalar_lea.sflag [#allocation4], %s3582
          %s3584 = sand.u32 %s53, 1
          %s3585 = smul.addr %s3584, 128
          %s3586 = scalar_lea.vmem [#allocation5], %s3585
          %3587 = dma.done %s3583, 2048
        $region40: #{qkv_attention.1} parent=35 // pred_fallthru
          _
      $region36: #{qkv_attention.1} parent=5 // pred_fallthru
        _
    $region6: #{qkv_attention.1} parent=1 // loop_footer
      %s17 = sadd.s32 1, %s13
    $region7: #{qkv_attention.1} parent=1 // loop_footer_branch
      %12 = sbr.rel target = $region3
    $region8: #{qkv_attention.1} parent=1 // loop_exit
      _
    %3588 = vsyncpa [#allocation3], 1
    %s3589 = scalar_lea.sflag [#allocation3], 1
    %3590 = vsyncpa %s3589, 1
    %3591 = vsyncpa [#allocation4], 1
    %s3592 = scalar_lea.sflag [#allocation4], 1
    %3593 = vsyncpa %s3592, 1

</llo_original>
